<compile_context>
chip_gen: v7x
topology: tpu7x:2x2x1
jax: 0.10.0
libtpu: 0.0.40
codegen_flags: <defaults>
</compile_context>

<pallas_src>
import jax
import jax.numpy as jnp
import numpy as np
from jax.experimental import pallas as pl
from jax.experimental.pallas import tpu as pltpu


# ---------------------------------------------------------------------------
# Fused sequence kernel: for each grid step t, run lstm1 + lstm2 + head.
# ---------------------------------------------------------------------------
def _matrix_lstm_seq_kernel(
        x_ref,      # (1, B, XPAD)        f32   x_t, lane-padded
        s0_ref,     # (B, 4*hh)           f32   initial [h1|c1|h2|c2]
        k1_ref,     # (XPAD+hh, 4*hh)     bf16  cell1 [kx_pad ; kh]
        kb_ref,     # (2, 4*hh)           f32   gate biases, row0=cell1, row1=cell2
        k2_ref,     # (2*hh, 4*hh)        bf16  cell2 [kx ; kh]
        head_ref,   # (hh+8, 128)         f32   [W1pad ; b1 ; w2 ; b2 ; 0-pad]
        sout_ref,   # (B, 4*hh)           f32   resident running/final state
        y_ref):     # (1, B, 128)         f32   per-step output (lane-broadcast)
    t = pl.program_id(0)
    B = s0_ref.shape[0]
    hh = s0_ref.shape[1] // 4

    # Prime the resident state slab from the initial state at t == 0.
    @pl.when(t == 0)
    def _():
        sout_ref[...] = s0_ref[...]

    h1p = sout_ref[:, 0 * hh:1 * hh]
    c1p = sout_ref[:, 1 * hh:2 * hh]
    h2p = sout_ref[:, 2 * hh:3 * hh]
    c2p = sout_ref[:, 3 * hh:4 * hh]

    xt = x_ref[0]                                   # (B, XPAD)

    def cell(u, c_prev, k_ref, b_row):
        # Single fused (B, K) @ (K, 4*hh) MXU matmul for all 4 gates.
        p = jnp.dot(u.astype(jnp.bfloat16), k_ref[...],
                    preferred_element_type=jnp.float32) + b_row
        i_g = jax.nn.sigmoid(p[:, 0 * hh:1 * hh])
        f_g = jax.nn.sigmoid(p[:, 1 * hh:2 * hh])
        o_g = jax.nn.sigmoid(p[:, 2 * hh:3 * hh])
        g_g = jnp.tanh(p[:, 3 * hh:4 * hh])
        c_new = f_g * c_prev + i_g * g_g
        h_new = o_g * jnp.tanh(c_new)
        return h_new, c_new

    u1 = jnp.concatenate([xt, h1p], axis=1)         # (B, XPAD+hh), lane-aligned
    h1n, c1n = cell(u1, c1p, k1_ref, kb_ref[0:1, :])
    u2 = jnp.concatenate([h1n, h2p], axis=1)        # (B, 2*hh)
    h2n, c2n = cell(u2, c2p, k2_ref, kb_ref[1:2, :])

    sout_ref[:, 0 * hh:1 * hh] = h1n
    sout_ref[:, 1 * hh:2 * hh] = c1n
    sout_ref[:, 2 * hh:3 * hh] = h2n
    sout_ref[:, 3 * hh:4 * hh] = c2n

    # Head: proj (hh -> 25, padded to 128 lanes), ReLU, proj2 as VPU/XLU reduce.
    w1    = head_ref[0:hh, :]                       # (hh, 128), cols 25: are 0
    b1row = head_ref[hh:hh + 1, :]                  # (1, 128)
    w2row = head_ref[hh + 1:hh + 2, :]              # (1, 128)
    b2row = head_ref[hh + 2:hh + 3, :]              # (1, 128), all lanes = b2

    z1 = jnp.dot(h2n, w1, preferred_element_type=jnp.float32) + b1row
    z1 = jnp.maximum(z1, 0.0)                       # ReLU
    ysum = jnp.sum(z1 * w2row, axis=1, keepdims=True)   # (B, 1) XLU reduce
    y_ref[0] = ysum + b2row                         # lane-dense (B, 128) store


# ---------------------------------------------------------------------------
# Wrappers
# ---------------------------------------------------------------------------
def matrix_lstm_lr_rollout(params, xs, state):
    """xs: (T, B, I, I); state: (h1, c1, h2, c2), each (B, Hd, Hd).

    Returns (outputs (T, B, 1, 1), final state tuple).
    """
    T, B, I, _ = xs.shape
    Hd = state[0].shape[1]
    hh = Hd * Hd
    xpad = params["K1"].shape[0] - hh               # padded x feature width

    x_flat = xs.reshape(T, B, I * I).astype(jnp.float32)
    x_p = jnp.zeros((T, B, xpad), jnp.float32).at[:, :, :I * I].set(x_flat)
    s0 = jnp.concatenate([s.reshape(B, hh) for s in state],
                         axis=1).astype(jnp.float32)

    k1, kb, k2, head = params["K1"], params["KB"], params["K2"], params["HEAD"]

    grid_spec = pltpu.PrefetchScalarGridSpec(
        num_scalar_prefetch=0,
        grid=(T,),
        in_specs=[
            pl.BlockSpec((1, B, xpad), lambda t: (t, 0, 0)),   # x_t (streamed)
            pl.BlockSpec((B, 4 * hh), lambda t: (0, 0)),       # initial state
            pl.BlockSpec(k1.shape, lambda t: (0, 0)),          # cell1 weights (resident)
            pl.BlockSpec(kb.shape, lambda t: (0, 0)),          # gate biases (resident)
            pl.BlockSpec(k2.shape, lambda t: (0, 0)),          # cell2 weights (resident)
            pl.BlockSpec(head.shape, lambda t: (0, 0)),        # head params (resident)
        ],
        out_specs=(
            pl.BlockSpec((B, 4 * hh), lambda t: (0, 0)),       # final state (resident)
            pl.BlockSpec((1, B, 128), lambda t: (t, 0, 0)),    # per-step output
        ),
    )

    k1k, k2k = k1.shape[0], k2.shape[0]
    cost = pl.CostEstimate(
        flops=int(T * (2 * B * k1k * 4 * hh + 2 * B * k2k * 4 * hh
                       + 2 * B * hh * 128 + 4 * B * 128)),
        transcendentals=int(T * 10 * B * hh),
        bytes_accessed=int(k1.size * 2 + k2.size * 2 + kb.size * 4
                           + head.size * 4 + T * B * (xpad + 128) * 4
                           + 2 * B * 4 * hh * 4),
    )

    s_fin, y_pad = pl.pallas_call(
        _matrix_lstm_seq_kernel,
        out_shape=(jax.ShapeDtypeStruct((B, 4 * hh), jnp.float32),
                   jax.ShapeDtypeStruct((T, B, 128), jnp.float32)),
        grid_spec=grid_spec,
        compiler_params=pltpu.CompilerParams(
            dimension_semantics=("arbitrary",)),
        cost_estimate=cost,
    )(x_p, s0, k1, kb, k2, head)

    outputs = y_pad[:, :, 0:1][:, :, :, None]       # (T, B, 1, 1)
    h1 = s_fin[:, 0 * hh:1 * hh].reshape(B, Hd, Hd)
    c1 = s_fin[:, 1 * hh:2 * hh].reshape(B, Hd, Hd)
    h2 = s_fin[:, 2 * hh:3 * hh].reshape(B, Hd, Hd)
    c2 = s_fin[:, 3 * hh:4 * hh].reshape(B, Hd, Hd)
    return outputs, (h1, c1, h2, c2)


def matrix_lstm_lr_forward(params, x, state):
    """Module-equivalent single-step forward: x (B, I, I) -> ((B,1,1), state)."""
    outs, new_state = matrix_lstm_lr_rollout(params, x[None], state)
    return outs[0], new_state


# ---------------------------------------------------------------------------
# Parameter init + Kronecker gate packing
# ---------------------------------------------------------------------------
def _init_cell_raw(key, input_size, hidden_size):
    k = jax.random.split(key, 5)
    scale = 0.1
    lx = scale * jax.random.normal(k[0], (4, hidden_size, input_size), jnp.float32)
    rx = scale * jax.random.normal(k[1], (4, input_size, hidden_size), jnp.float32)
    lh = scale * jax.random.normal(k[2], (4, hidden_size, hidden_size), jnp.float32)
    rh = scale * jax.random.normal(k[3], (4, hidden_size, hidden_size), jnp.float32)
    b = scale * jax.random.normal(k[4], (4, hidden_size, hidden_size), jnp.float32)
    return (lx, rx, lh, rh, b)


def _kron_pack(l, r):
    # vec_row(L @ X @ R) = vec_row(X) @ kron(L.T, R); 4 gates stacked on lanes.
    return jnp.concatenate([jnp.kron(l[g].T, r[g]) for g in range(4)], axis=1)


def init_params(key, input_size, hidden_size):
    hh = hidden_size * hidden_size
    ii = input_size * input_size
    xpad = ((ii + 127) // 128) * 128
    assert hh % 128 == 0, "hidden_size**2 must be a multiple of 128 for lane-aligned packing"

    k1, k2, k3, k4, k5, k6 = jax.random.split(key, 6)
    raw1 = _init_cell_raw(k1, input_size, hidden_size)
    raw2 = _init_cell_raw(k2, hidden_size, hidden_size)

    # Cell 1: one matmul [x_pad | h] @ [kx_pad ; kh]
    kx1 = _kron_pack(raw1[0], raw1[1])                               # (ii, 4hh)
    kh1 = _kron_pack(raw1[2], raw1[3])                               # (hh, 4hh)
    kx1p = jnp.zeros((xpad, 4 * hh), jnp.float32).at[:ii].set(kx1)
    K1 = jnp.concatenate([kx1p, kh1], axis=0).astype(jnp.bfloat16)   # (xpad+hh, 4hh)

    # Cell 2: one matmul [h1 | h2] @ [kx ; kh]
    kx2 = _kron_pack(raw2[0], raw2[1])                               # (hh, 4hh)
    kh2 = _kron_pack(raw2[2], raw2[3])                               # (hh, 4hh)
    K2 = jnp.concatenate([kx2, kh2], axis=0).astype(jnp.bfloat16)    # (2hh, 4hh)

    # Gate biases for both cells in one f32 buffer.
    bg1 = jnp.concatenate([raw1[4][g].reshape(1, hh) for g in range(4)], axis=1)
    bg2 = jnp.concatenate([raw2[4][g].reshape(1, hh) for g in range(4)], axis=1)
    KB = jnp.concatenate([bg1, bg2], axis=0)                         # (2, 4hh)

    # Head: proj(hh->25) + proj2(25->1), packed into one lane-padded buffer.
    W1 = 0.05 * jax.random.normal(k3, (hh, 25), jnp.float32)
    b1 = 0.05 * jax.random.normal(k4, (25,), jnp.float32)
    W2 = 0.05 * jax.random.normal(k5, (25,), jnp.float32)
    b2 = 0.05 * jax.random.normal(k6, (), jnp.float32)
    head = jnp.zeros((hh + 8, 128), jnp.float32)
    head = head.at[:hh, :25].set(W1)
    head = head.at[hh, :25].set(b1)
    head = head.at[hh + 1, :25].set(W2)
    head = head.at[hh + 2, :].set(b2)

    packed = {"K1": K1, "K2": K2, "KB": KB, "HEAD": head}
    raw = {"lstm1": raw1, "lstm2": raw2, "W1": W1, "b1": b1, "W2": W2, "b2": b2}
    return packed, raw


# ---------------------------------------------------------------------------
# Pure-JAX f32 reference (factored per-gate form) for correctness check
# ---------------------------------------------------------------------------
def _cell_reference(x, h, c, raw):
    lx, rx, lh, rh, b = raw
    p = (jnp.einsum('gik,bkl,glj->bgij', lx, x, rx)
         + jnp.einsum('gik,bkl,glj->bgij', lh, h, rh)
         + b[None])
    i_g = jax.nn.sigmoid(p[:, 0])
    f_g = jax.nn.sigmoid(p[:, 1])
    o_g = jax.nn.sigmoid(p[:, 2])
    g_g = jnp.tanh(p[:, 3])
    c_new = f_g * c + i_g * g_g
    h_new = o_g * jnp.tanh(c_new)
    return h_new, c_new


def reference_rollout(raw, xs, state):
    h1, c1, h2, c2 = state
    outs = []
    for t in range(xs.shape[0]):
        h1, c1 = _cell_reference(xs[t], h1, c1, raw["lstm1"])
        h2, c2 = _cell_reference(h1, h2, c2, raw["lstm2"])
        h3 = h2.reshape(h2.shape[0], -1)
        z = jnp.maximum(h3 @ raw["W1"] + raw["b1"], 0.0)
        y = z @ raw["W2"][:, None] + raw["b2"]
        outs.append(y[:, :, None])
    return jnp.stack(outs, axis=0), (h1, c1, h2, c2)


# ---------------------------------------------------------------------------
# Demo
# ---------------------------------------------------------------------------
if __name__ == "__main__":
    B, INPUT_SIZE, HIDDEN_SIZE, T = 2, 8, 16, 6

    root = jax.random.PRNGKey(0)
    kp, kx, ks = jax.random.split(root, 3)

    params, raw = init_params(kp, INPUT_SIZE, HIDDEN_SIZE)

    xs = jax.random.normal(kx, (T, B, INPUT_SIZE, INPUT_SIZE), jnp.float32)
    s_keys = jax.random.split(ks, 4)
    state = tuple(
        jax.random.normal(sk, (B, HIDDEN_SIZE, HIDDEN_SIZE), jnp.float32)
        for sk in s_keys
    )

    rollout = jax.jit(matrix_lstm_lr_rollout)
    outputs, (h1, c1, h2, c2) = rollout(params, xs, state)
    jax.block_until_ready((outputs, h1, c1, h2, c2))

    assert outputs.shape == (T, B, 1, 1)
    assert h1.shape == (B, HIDDEN_SIZE, HIDDEN_SIZE)
    assert c2.shape == (B, HIDDEN_SIZE, HIDDEN_SIZE)

    # Module-equivalent single-step forward (T = 1).
    step = jax.jit(matrix_lstm_lr_forward)
    y0, st0 = step(params, xs[0], state)
    jax.block_until_ready(y0)
    assert y0.shape == (B, 1, 1)

    # Cross-check against the pure-JAX f32 reference (loose tolerance: the
    # kernel's gate matmuls use bf16 weights with f32 accumulation, compounded
    # over T recurrent steps).
    ref_out, (rh1, rc1, rh2, rc2) = reference_rollout(raw, xs, state)
    np.testing.assert_allclose(np.asarray(outputs), np.asarray(ref_out),
                               atol=5e-2, rtol=5e-2)
    np.testing.assert_allclose(np.asarray(h1), np.asarray(rh1), atol=5e-2, rtol=5e-2)
    np.testing.assert_allclose(np.asarray(c1), np.asarray(rc1), atol=5e-2, rtol=5e-2)
    np.testing.assert_allclose(np.asarray(h2), np.asarray(rh2), atol=5e-2, rtol=5e-2)
    np.testing.assert_allclose(np.asarray(c2), np.asarray(rc2), atol=5e-2, rtol=5e-2)
    np.testing.assert_allclose(np.asarray(y0), np.asarray(ref_out[0]),
                               atol=5e-2, rtol=5e-2)

    print("KERNEL_OK")
</pallas_src>

<mosaic_0001>
module attributes {stable_mosaic.version = 11 : i64} {
  func.func @_matrix_lstm_seq_kernel(%arg0: i32, %arg1: memref<1x2x128xf32, #tpu.memory_space<vmem>>, %arg2: memref<2x1024xf32, #tpu.memory_space<vmem>>, %arg3: memref<384x1024xbf16, #tpu.memory_space<vmem>>, %arg4: memref<2x1024xf32, #tpu.memory_space<vmem>>, %arg5: memref<512x1024xbf16, #tpu.memory_space<vmem>>, %arg6: memref<264x128xf32, #tpu.memory_space<vmem>>, %arg7: memref<2x1024xf32, #tpu.memory_space<vmem>>, %arg8: memref<1x2x128xf32, #tpu.memory_space<vmem>>) attributes {dimension_semantics = [#tpu.dimension_semantics<arbitrary>], iteration_bounds = array<i64: 6>, scalar_prefetch = 0 : i64, scratch_operands = 0 : i64, tpu.core_type = #tpu.core_type<tc>, window_params = [{transform_indices = @transform_0, window_bounds = array<i64: 1, 2, 128>}, {pipeline_mode = #tpu.pipeline_mode<synchronous>, transform_indices = @transform_1, window_bounds = array<i64: 2, 1024>}, {pipeline_mode = #tpu.pipeline_mode<synchronous>, transform_indices = @transform_2, window_bounds = array<i64: 384, 1024>}, {pipeline_mode = #tpu.pipeline_mode<synchronous>, transform_indices = @transform_3, window_bounds = array<i64: 2, 1024>}, {pipeline_mode = #tpu.pipeline_mode<synchronous>, transform_indices = @transform_4, window_bounds = array<i64: 512, 1024>}, {pipeline_mode = #tpu.pipeline_mode<synchronous>, transform_indices = @transform_5, window_bounds = array<i64: 264, 128>}, {pipeline_mode = #tpu.pipeline_mode<synchronous>, transform_indices = @transform_6, window_bounds = array<i64: 2, 1024>}, {transform_indices = @transform_7, window_bounds = array<i64: 1, 2, 128>}]} {
    %c0_i32 = arith.constant 0 : i32
    %0 = arith.cmpi eq, %arg0, %c0_i32 : i32
    %1 = arith.extui %0 : i1 to i32
    %c0_i32_0 = arith.constant 0 : i32
    %2 = arith.cmpi ne, %1, %c0_i32_0 : i32
    scf.if %2 {
      %c0_42 = arith.constant 0 : index
      %c0_43 = arith.constant 0 : index
      %96 = vector.load %arg2[%c0_42, %c0_43] : memref<2x1024xf32, #tpu.memory_space<vmem>>, vector<2x1024xf32>
      %c0_44 = arith.constant 0 : index
      %c0_45 = arith.constant 0 : index
      %97 = vector.load %arg7[%c0_44, %c0_45] : memref<2x1024xf32, #tpu.memory_space<vmem>>, vector<2x1024xf32>
      tpu.vector_store %arg7[%c0_44, %c0_45], %96 {strides = array<i32>} : memref<2x1024xf32, #tpu.memory_space<vmem>>, vector<2x1024xf32>,
    } else {
    }
    %c0 = arith.constant 0 : index
    %c0_1 = arith.constant 0 : index
    %3 = vector.load %arg7[%c0, %c0_1] : memref<2x1024xf32, #tpu.memory_space<vmem>>, vector<2x256xf32>
    %c0_2 = arith.constant 0 : index
    %c256 = arith.constant 256 : index
    %4 = vector.load %arg7[%c0_2, %c256] : memref<2x1024xf32, #tpu.memory_space<vmem>>, vector<2x256xf32>
    %c0_3 = arith.constant 0 : index
    %c512 = arith.constant 512 : index
    %5 = vector.load %arg7[%c0_3, %c512] : memref<2x1024xf32, #tpu.memory_space<vmem>>, vector<2x256xf32>
    %c0_4 = arith.constant 0 : index
    %c768 = arith.constant 768 : index
    %6 = vector.load %arg7[%c0_4, %c768] : memref<2x1024xf32, #tpu.memory_space<vmem>>, vector<2x256xf32>
    %c0_5 = arith.constant 0 : index
    %c0_6 = arith.constant 0 : index
    %c0_7 = arith.constant 0 : index
    %7 = vector.load %arg1[%c0_5, %c0_6, %c0_7] : memref<1x2x128xf32, #tpu.memory_space<vmem>>, vector<1x2x128xf32>
    %8 = vector.shape_cast %7 : vector<1x2x128xf32> to vector<2x128xf32>
    %9 = tpu.concatenate %8, %3 in 1 : vector<2x128xf32>, vector<2x256xf32> -> vector<2x384xf32>
    %c0_8 = arith.constant 0 : index
    %c0_9 = arith.constant 0 : index
    %10 = vector.load %arg4[%c0_8, %c0_9] : memref<2x1024xf32, #tpu.memory_space<vmem>>, vector<1x1024xf32>
    %11 = arith.truncf %9 : vector<2x384xf32> to vector<2x384xbf16>
    %c0_10 = arith.constant 0 : index
    %c0_11 = arith.constant 0 : index
    %12 = vector.load %arg3[%c0_10, %c0_11] : memref<384x1024xbf16, #tpu.memory_space<vmem>>, vector<384x1024xbf16>
    %cst = arith.constant dense<0.000000e+00> : vector<2x1024xf32>
    %13 = tpu.matmul %11, %12, %cst {dimension_numbers = #tpu.dot_dimension_numbers<[1], [0], [0], [1], [0, 0, 1, 1], [], []>} : vector<2x384xbf16>, vector<384x1024xbf16>, vector<2x1024xf32> -> vector<2x1024xf32>
    %14 = vector.broadcast %10 : vector<1x1024xf32> to vector<2x1024xf32>
    %15 = arith.addf %13, %14 : vector<2x1024xf32>
    %16 = vector.extract_strided_slice %15 {offsets = [0, 0], sizes = [2, 256], strides = [1, 1]} : vector<2x1024xf32> to vector<2x256xf32>
    %17 = arith.negf %16 : vector<2x256xf32>
    %18 = math.exp %17 : vector<2x256xf32>
    %cst_12 = arith.constant 1.000000e+00 : f32
    %19 = vector.broadcast %cst_12 : f32 to vector<2x256xf32>
    %20 = arith.addf %19, %18 : vector<2x256xf32>
    %21 = arith.divf %19, %20 : vector<2x256xf32>
    %22 = vector.extract_strided_slice %15 {offsets = [0, 256], sizes = [2, 256], strides = [1, 1]} : vector<2x1024xf32> to vector<2x256xf32>
    %23 = arith.negf %22 : vector<2x256xf32>
    %24 = math.exp %23 : vector<2x256xf32>
    %cst_13 = arith.constant 1.000000e+00 : f32
    %25 = vector.broadcast %cst_13 : f32 to vector<2x256xf32>
    %26 = arith.addf %25, %24 : vector<2x256xf32>
    %27 = arith.divf %25, %26 : vector<2x256xf32>
    %28 = vector.extract_strided_slice %15 {offsets = [0, 512], sizes = [2, 256], strides = [1, 1]} : vector<2x1024xf32> to vector<2x256xf32>
    %29 = arith.negf %28 : vector<2x256xf32>
    %30 = math.exp %29 : vector<2x256xf32>
    %cst_14 = arith.constant 1.000000e+00 : f32
    %31 = vector.broadcast %cst_14 : f32 to vector<2x256xf32>
    %32 = arith.addf %31, %30 : vector<2x256xf32>
    %33 = arith.divf %31, %32 : vector<2x256xf32>
    %34 = vector.extract_strided_slice %15 {offsets = [0, 768], sizes = [2, 256], strides = [1, 1]} : vector<2x1024xf32> to vector<2x256xf32>
    %35 = math.tanh %34 : vector<2x256xf32>
    %36 = arith.mulf %27, %4 : vector<2x256xf32>
    %37 = arith.mulf %21, %35 : vector<2x256xf32>
    %38 = arith.addf %36, %37 : vector<2x256xf32>
    %39 = math.tanh %38 : vector<2x256xf32>
    %40 = arith.mulf %33, %39 : vector<2x256xf32>
    %41 = tpu.concatenate %40, %5 in 1 : vector<2x256xf32>, vector<2x256xf32> -> vector<2x512xf32>
    %c1 = arith.constant 1 : index
    %c0_15 = arith.constant 0 : index
    %42 = vector.load %arg4[%c1, %c0_15] : memref<2x1024xf32, #tpu.memory_space<vmem>>, vector<1x1024xf32>
    %43 = arith.truncf %41 : vector<2x512xf32> to vector<2x512xbf16>
    %c0_16 = arith.constant 0 : index
    %c0_17 = arith.constant 0 : index
    %44 = vector.load %arg5[%c0_16, %c0_17] : memref<512x1024xbf16, #tpu.memory_space<vmem>>, vector<512x1024xbf16>
    %cst_18 = arith.constant dense<0.000000e+00> : vector<2x1024xf32>
    %45 = tpu.matmul %43, %44, %cst_18 {dimension_numbers = #tpu.dot_dimension_numbers<[1], [0], [0], [1], [0, 0, 1, 1], [], []>} : vector<2x512xbf16>, vector<512x1024xbf16>, vector<2x1024xf32> -> vector<2x1024xf32>
    %46 = vector.broadcast %42 : vector<1x1024xf32> to vector<2x1024xf32>
    %47 = arith.addf %45, %46 : vector<2x1024xf32>
    %48 = vector.extract_strided_slice %47 {offsets = [0, 0], sizes = [2, 256], strides = [1, 1]} : vector<2x1024xf32> to vector<2x256xf32>
    %49 = arith.negf %48 : vector<2x256xf32>
    %50 = math.exp %49 : vector<2x256xf32>
    %cst_19 = arith.constant 1.000000e+00 : f32
    %51 = vector.broadcast %cst_19 : f32 to vector<2x256xf32>
    %52 = arith.addf %51, %50 : vector<2x256xf32>
    %53 = arith.divf %51, %52 : vector<2x256xf32>
    %54 = vector.extract_strided_slice %47 {offsets = [0, 256], sizes = [2, 256], strides = [1, 1]} : vector<2x1024xf32> to vector<2x256xf32>
    %55 = arith.negf %54 : vector<2x256xf32>
    %56 = math.exp %55 : vector<2x256xf32>
    %cst_20 = arith.constant 1.000000e+00 : f32
    %57 = vector.broadcast %cst_20 : f32 to vector<2x256xf32>
    %58 = arith.addf %57, %56 : vector<2x256xf32>
    %59 = arith.divf %57, %58 : vector<2x256xf32>
    %60 = vector.extract_strided_slice %47 {offsets = [0, 512], sizes = [2, 256], strides = [1, 1]} : vector<2x1024xf32> to vector<2x256xf32>
    %61 = arith.negf %60 : vector<2x256xf32>
    %62 = math.exp %61 : vector<2x256xf32>
    %cst_21 = arith.constant 1.000000e+00 : f32
    %63 = vector.broadcast %cst_21 : f32 to vector<2x256xf32>
    %64 = arith.addf %63, %62 : vector<2x256xf32>
    %65 = arith.divf %63, %64 : vector<2x256xf32>
    %66 = vector.extract_strided_slice %47 {offsets = [0, 768], sizes = [2, 256], strides = [1, 1]} : vector<2x1024xf32> to vector<2x256xf32>
    %67 = math.tanh %66 : vector<2x256xf32>
    %68 = arith.mulf %59, %6 : vector<2x256xf32>
    %69 = arith.mulf %53, %67 : vector<2x256xf32>
    %70 = arith.addf %68, %69 : vector<2x256xf32>
    %71 = math.tanh %70 : vector<2x256xf32>
    %72 = arith.mulf %65, %71 : vector<2x256xf32>
    %c0_22 = arith.constant 0 : index
    %c0_23 = arith.constant 0 : index
    %73 = vector.load %arg7[%c0_22, %c0_23] : memref<2x1024xf32, #tpu.memory_space<vmem>>, vector<2x256xf32>
    tpu.vector_store %arg7[%c0_22, %c0_23], %40 {strides = array<i32>} : memref<2x1024xf32, #tpu.memory_space<vmem>>, vector<2x256xf32>,
    %c0_24 = arith.constant 0 : index
    %c256_25 = arith.constant 256 : index
    %74 = vector.load %arg7[%c0_24, %c256_25] : memref<2x1024xf32, #tpu.memory_space<vmem>>, vector<2x256xf32>
    tpu.vector_store %arg7[%c0_24, %c256_25], %38 {strides = array<i32>} : memref<2x1024xf32, #tpu.memory_space<vmem>>, vector<2x256xf32>,
    %c0_26 = arith.constant 0 : index
    %c512_27 = arith.constant 512 : index
    %75 = vector.load %arg7[%c0_26, %c512_27] : memref<2x1024xf32, #tpu.memory_space<vmem>>, vector<2x256xf32>
    tpu.vector_store %arg7[%c0_26, %c512_27], %72 {strides = array<i32>} : memref<2x1024xf32, #tpu.memory_space<vmem>>, vector<2x256xf32>,
    %c0_28 = arith.constant 0 : index
    %c768_29 = arith.constant 768 : index
    %76 = vector.load %arg7[%c0_28, %c768_29] : memref<2x1024xf32, #tpu.memory_space<vmem>>, vector<2x256xf32>
    tpu.vector_store %arg7[%c0_28, %c768_29], %70 {strides = array<i32>} : memref<2x1024xf32, #tpu.memory_space<vmem>>, vector<2x256xf32>,
    %c0_30 = arith.constant 0 : index
    %c0_31 = arith.constant 0 : index
    %77 = vector.load %arg6[%c0_30, %c0_31] : memref<264x128xf32, #tpu.memory_space<vmem>>, vector<256x128xf32>
    %c256_32 = arith.constant 256 : index
    %c0_33 = arith.constant 0 : index
    %78 = vector.load %arg6[%c256_32, %c0_33] : memref<264x128xf32, #tpu.memory_space<vmem>>, vector<1x128xf32>
    %c257 = arith.constant 257 : index
    %c0_34 = arith.constant 0 : index
    %79 = vector.load %arg6[%c257, %c0_34] : memref<264x128xf32, #tpu.memory_space<vmem>>, vector<1x128xf32>
    %c258 = arith.constant 258 : index
    %c0_35 = arith.constant 0 : index
    %80 = vector.load %arg6[%c258, %c0_35] : memref<264x128xf32, #tpu.memory_space<vmem>>, vector<1x128xf32>
    %cst_36 = arith.constant dense<0.000000e+00> : vector<2x128xf32>
    %81 = tpu.matmul %72, %77, %cst_36 {dimension_numbers = #tpu.dot_dimension_numbers<[1], [0], [0], [1], [0, 0, 1, 1], [], []>} : vector<2x256xf32>, vector<256x128xf32>, vector<2x128xf32> -> vector<2x128xf32>
    %82 = vector.broadcast %78 : vector<1x128xf32> to vector<2x128xf32>
    %83 = arith.addf %81, %82 : vector<2x128xf32>
    %cst_37 = arith.constant 0.000000e+00 : f32
    %84 = vector.broadcast %cst_37 : f32 to vector<2x128xf32>
    %85 = arith.maximumf %83, %84 : vector<2x128xf32>
    %86 = vector.broadcast %79 : vector<1x128xf32> to vector<2x128xf32>
    %87 = arith.mulf %85, %86 : vector<2x128xf32>
    %cst_38 = arith.constant dense<0.000000e+00> : vector<2xf32>
    %88 = vector.multi_reduction <add>, %87, %cst_38 [1] : vector<2x128xf32> to vector<2xf32>
    %89 = vector.shape_cast %88 : vector<2xf32> to vector<2x1xf32>
    %90 = vector.broadcast %89 : vector<2x1xf32> to vector<2x128xf32>
    %91 = vector.broadcast %80 : vector<1x128xf32> to vector<2x128xf32>
    %92 = arith.addf %90, %91 : vector<2x128xf32>
    %c0_39 = arith.constant 0 : index
    %c0_40 = arith.constant 0 : index
    %c0_41 = arith.constant 0 : index
    %93 = vector.load %arg8[%c0_39, %c0_40, %c0_41] : memref<1x2x128xf32, #tpu.memory_space<vmem>>, vector<1x2x128xf32>
    %94 = vector.shape_cast %93 : vector<1x2x128xf32> to vector<2x128xf32>
    %95 = vector.shape_cast %92 : vector<2x128xf32> to vector<1x2x128xf32>
    tpu.vector_store %arg8[%c0_39, %c0_40, %c0_41], %95 {strides = array<i32>} : memref<1x2x128xf32, #tpu.memory_space<vmem>>, vector<1x2x128xf32>,
    return
  }
  func.func @transform_0(%arg0: i32) -> (i32, i32, i32) {
    %c0_i32 = arith.constant 0 : i32
    %c0_i32_0 = arith.constant 0 : i32
    %c0_i32_1 = arith.constant 0 : i32
    return %arg0, %c0_i32, %c0_i32_0 : i32, i32, i32
  }
  func.func @transform_1(%arg0: i32) -> (i32, i32) {
    %c0_i32 = arith.constant 0 : i32
    %c0_i32_0 = arith.constant 0 : i32
    %c0_i32_1 = arith.constant 0 : i32
    return %c0_i32, %c0_i32_0 : i32, i32
  }
  func.func @transform_2(%arg0: i32) -> (i32, i32) {
    %c0_i32 = arith.constant 0 : i32
    %c0_i32_0 = arith.constant 0 : i32
    %c0_i32_1 = arith.constant 0 : i32
    return %c0_i32, %c0_i32_0 : i32, i32
  }
  func.func @transform_3(%arg0: i32) -> (i32, i32) {
    %c0_i32 = arith.constant 0 : i32
    %c0_i32_0 = arith.constant 0 : i32
    %c0_i32_1 = arith.constant 0 : i32
    return %c0_i32, %c0_i32_0 : i32, i32
  }
  func.func @transform_4(%arg0: i32) -> (i32, i32) {
    %c0_i32 = arith.constant 0 : i32
    %c0_i32_0 = arith.constant 0 : i32
    %c0_i32_1 = arith.constant 0 : i32
    return %c0_i32, %c0_i32_0 : i32, i32
  }
  func.func @transform_5(%arg0: i32) -> (i32, i32) {
    %c0_i32 = arith.constant 0 : i32
    %c0_i32_0 = arith.constant 0 : i32
    %c0_i32_1 = arith.constant 0 : i32
    return %c0_i32, %c0_i32_0 : i32, i32
  }
  func.func @transform_6(%arg0: i32) -> (i32, i32) {
    %c0_i32 = arith.constant 0 : i32
    %c0_i32_0 = arith.constant 0 : i32
    %c0_i32_1 = arith.constant 0 : i32
    return %c0_i32, %c0_i32_0 : i32, i32
  }
  func.func @transform_7(%arg0: i32) -> (i32, i32, i32) {
    %c0_i32 = arith.constant 0 : i32
    %c0_i32_0 = arith.constant 0 : i32
    %c0_i32_1 = arith.constant 0 : i32
    return %arg0, %c0_i32, %c0_i32_0 : i32, i32, i32
  }
}

</mosaic_0001>

<llo_original>
// kernel: matrix_lstm_lr_rollout.1
$region0: #{matrix_lstm_lr_rollout.1}
  #allocation0 [shape = 'u32[]', space=smem, size = 0x4, offset = 0x4, fixed_abs, tag = 'smem constant byte address 0x4 - core index']
  #allocation1 [shape = 'u32[144,128]{1,0:T(1,128)}', space=vmem, size = 0x12000, scoped, tag = 'internal scratch']
  %s0 = inlined_call_operand.vmem [shape: f32[6,2,128], index: 0, kind: input, shape index: {}]
  %s1 = inlined_call_operand.vmem [shape: f32[2,1024], index: 1, kind: input, shape index: {}]
  %s2 = inlined_call_operand.hbm [shape: bf16[384,1024], index: 2, kind: input, shape index: {}]
  %s3 = inlined_call_operand.hbm [shape: f32[2,1024], index: 3, kind: input, shape index: {}]
  %s4 = inlined_call_operand.hbm [shape: bf16[512,1024], index: 4, kind: input, shape index: {}]
  %s5 = inlined_call_operand.vmem [shape: f32[264,128], index: 5, kind: input, shape index: {}]
  %s6 = inlined_call_operand.vmem [shape: f32[2,1024], index: 6, kind: output, shape index: {0}]
  %s7 = inlined_call_operand.vmem [shape: f32[6,2,128], index: 7, kind: output, shape index: {1}]
  %8 = xla_tuple %s6, %s7
  %s9 = sld [smem:[#allocation0]]
  $region81: #{matrix_lstm_lr_rollout.1} parent=0
    _
  %s11 = ssub.s32 1, %s9
  %s12 = scalar_select 0, %s11, %s9
  $region1: #{matrix_lstm_lr_rollout.1} parent=0
    #allocation2 [shape = 'u8[786432]{0}', space=vmem, size = 0xc0000, scoped, tag = 'input window, operand 2, single buffered']
    #allocation3 [shape = 's32[2]{0}', space=sflag, size = 0x8, scoped, tag = 'scoped memory for matrix_lstm_lr_rollout.1']
    #allocation4 [shape = 'u8[8192]{0}', space=vmem, size = 0x2000, scoped, tag = 'input window, operand 3, single buffered']
    #allocation5 [shape = 's32[1]{0}', space=sflag, size = 0x4, scoped, tag = 'scoped memory for matrix_lstm_lr_rollout.1']
    #allocation6 [shape = 'u8[1048576]{0}', space=vmem, size = 0x100000, scoped, tag = 'input window, operand 4, single buffered']
    %13 = vsyncpa [#allocation3], 0
    %14 = vsyncpa [#allocation5], 0
    loop: start=0, step=1, limit=8
    $region2: #{matrix_lstm_lr_rollout.1} parent=1 // loop_pre_header
      _
    $region3: #{matrix_lstm_lr_rollout.1} parent=1 // loop_header
      %s16 = sphi 0, %s20
      %p17 = scmp.ge.s32.totalorder %s16, 8
      %s26 = sphi 0, %s28
      %s29 = sphi 0, %s26
      %s30 = sphi 0, %s29
      %s46 = sphi 0, %s30
      %s50 = sphi 0, %s50
      %s52 = sphi 0, %s50
      %s53 = sphi 0, %s52
      %s67 = sphi 0, %s53
      %s71 = sphi 0, %s71
      %s73 = sphi 0, %s71
      %s74 = sphi 0, %s73
      %s88 = sphi 0, %s74
      %s92 = sphi 0, %s92
      %s94 = sphi 0, %s92
      %s95 = sphi 0, %s94
      %s109 = sphi 0, %s95
      %s113 = sphi 0, %s113
      %s115 = sphi 0, %s113
      %s116 = sphi 0, %s115
      %s130 = sphi 0, %s116
      %s134 = sphi 0, %s134
      %s136 = sphi 0, %s134
      %s137 = sphi 0, %s136
      %s151 = sphi 0, %s137
      %s155 = sphi 0, %s155
      %s157 = sphi 0, %s155
      %s158 = sphi 0, %s157
      %s172 = sphi 0, %s158
      %s178 = sphi 0, %s180
      %s181 = sphi 0, %s178
      %s182 = sphi 0, %s181
      %s198 = sphi 0, %s182
    $region4: #{matrix_lstm_lr_rollout.1} parent=1 // loop_header_branch
      %19 = sbr.rel (%p17) target = $region8
    $region5: #{matrix_lstm_lr_rollout.1} parent=1 // loop_body
      %s21 = ssub.s32 %s16, 1
      %s22 = ssub.s32 %s16, 2
      %s23 = sadd.s32 %s16, 1
      %s24 = ssub.s32 %s16, %s23
      %p25 = scmp.eq.s32.totalorder %s24, 0
      %s27 = sadd.s32 %s26, 1
      %s28 = scalar_select %p25, %s26, %s27
      %p31 = pneg %p25
      %p32 = scmp.eq.s32.totalorder %s16, 5
      %p33 = por %p31, %p32
      %p34 = scmp.ne.s32.totalorder %s26, %s29
      %p35 = scmp.eq.s32.totalorder %s16, 0
      %p36 = por %p34, %p35
      %p37 = scmp.ne.s32.totalorder %s26, %s29
      %p38 = scmp.eq.s32.totalorder %s21, 5
      %p39 = por %p37, %p38
      %p40 = scmp.ne.s32.totalorder %s29, %s30
      %p41 = scmp.eq.s32.totalorder %s21, 0
      %p42 = por %p40, %p41
      %p43 = scmp.ne.s32.totalorder %s29, %s30
      %p44 = scmp.eq.s32.totalorder %s22, 5
      %p45 = por %p43, %p44
      %p47 = scmp.ne.s32.totalorder %s30, %s46
      %p48 = scmp.eq.s32.totalorder %s22, 0
      %p49 = por %p47, %p48
      %s51 = sadd.s32 %s50, 1
      %p54 = scmp.eq.s32.totalorder %s16, 5
      %p55 = scmp.ne.s32.totalorder %s50, %s52
      %p56 = scmp.eq.s32.totalorder %s16, 0
      %p57 = por %p55, %p56
      %p58 = scmp.ne.s32.totalorder %s50, %s52
      %p59 = scmp.eq.s32.totalorder %s21, 5
      %p60 = por %p58, %p59
      %p61 = scmp.ne.s32.totalorder %s52, %s53
      %p62 = scmp.eq.s32.totalorder %s21, 0
      %p63 = por %p61, %p62
      %p64 = scmp.ne.s32.totalorder %s52, %s53
      %p65 = scmp.eq.s32.totalorder %s22, 5
      %p66 = por %p64, %p65
      %p68 = scmp.ne.s32.totalorder %s53, %s67
      %p69 = scmp.eq.s32.totalorder %s22, 0
      %p70 = por %p68, %p69
      %s72 = sadd.s32 %s71, 1
      %p75 = scmp.eq.s32.totalorder %s16, 5
      %p76 = scmp.ne.s32.totalorder %s71, %s73
      %p77 = scmp.eq.s32.totalorder %s16, 0
      %p78 = por %p76, %p77
      %p79 = scmp.ne.s32.totalorder %s71, %s73
      %p80 = scmp.eq.s32.totalorder %s21, 5
      %p81 = por %p79, %p80
      %p82 = scmp.ne.s32.totalorder %s73, %s74
      %p83 = scmp.eq.s32.totalorder %s21, 0
      %p84 = por %p82, %p83
      %p85 = scmp.ne.s32.totalorder %s73, %s74
      %p86 = scmp.eq.s32.totalorder %s22, 5
      %p87 = por %p85, %p86
      %p89 = scmp.ne.s32.totalorder %s74, %s88
      %p90 = scmp.eq.s32.totalorder %s22, 0
      %p91 = por %p89, %p90
      %s93 = sadd.s32 %s92, 1
      %p96 = scmp.eq.s32.totalorder %s16, 5
      %p97 = scmp.ne.s32.totalorder %s92, %s94
      %p98 = scmp.eq.s32.totalorder %s16, 0
      %p99 = por %p97, %p98
      %p100 = scmp.ne.s32.totalorder %s92, %s94
      %p101 = scmp.eq.s32.totalorder %s21, 5
      %p102 = por %p100, %p101
      %p103 = scmp.ne.s32.totalorder %s94, %s95
      %p104 = scmp.eq.s32.totalorder %s21, 0
      %p105 = por %p103, %p104
      %p106 = scmp.ne.s32.totalorder %s94, %s95
      %p107 = scmp.eq.s32.totalorder %s22, 5
      %p108 = por %p106, %p107
      %p110 = scmp.ne.s32.totalorder %s95, %s109
      %p111 = scmp.eq.s32.totalorder %s22, 0
      %p112 = por %p110, %p111
      %s114 = sadd.s32 %s113, 1
      %p117 = scmp.eq.s32.totalorder %s16, 5
      %p118 = scmp.ne.s32.totalorder %s113, %s115
      %p119 = scmp.eq.s32.totalorder %s16, 0
      %p120 = por %p118, %p119
      %p121 = scmp.ne.s32.totalorder %s113, %s115
      %p122 = scmp.eq.s32.totalorder %s21, 5
      %p123 = por %p121, %p122
      %p124 = scmp.ne.s32.totalorder %s115, %s116
      %p125 = scmp.eq.s32.totalorder %s21, 0
      %p126 = por %p124, %p125
      %p127 = scmp.ne.s32.totalorder %s115, %s116
      %p128 = scmp.eq.s32.totalorder %s22, 5
      %p129 = por %p127, %p128
      %p131 = scmp.ne.s32.totalorder %s116, %s130
      %p132 = scmp.eq.s32.totalorder %s22, 0
      %p133 = por %p131, %p132
      %s135 = sadd.s32 %s134, 1
      %p138 = scmp.eq.s32.totalorder %s16, 5
      %p139 = scmp.ne.s32.totalorder %s134, %s136
      %p140 = scmp.eq.s32.totalorder %s16, 0
      %p141 = por %p139, %p140
      %p142 = scmp.ne.s32.totalorder %s134, %s136
      %p143 = scmp.eq.s32.totalorder %s21, 5
      %p144 = por %p142, %p143
      %p145 = scmp.ne.s32.totalorder %s136, %s137
      %p146 = scmp.eq.s32.totalorder %s21, 0
      %p147 = por %p145, %p146
      %p148 = scmp.ne.s32.totalorder %s136, %s137
      %p149 = scmp.eq.s32.totalorder %s22, 5
      %p150 = por %p148, %p149
      %p152 = scmp.ne.s32.totalorder %s137, %s151
      %p153 = scmp.eq.s32.totalorder %s22, 0
      %p154 = por %p152, %p153
      %s156 = sadd.s32 %s155, 1
      %p159 = scmp.eq.s32.totalorder %s16, 5
      %p160 = scmp.ne.s32.totalorder %s155, %s157
      %p161 = scmp.eq.s32.totalorder %s16, 0
      %p162 = por %p160, %p161
      %p163 = scmp.ne.s32.totalorder %s155, %s157
      %p164 = scmp.eq.s32.totalorder %s21, 5
      %p165 = por %p163, %p164
      %p166 = scmp.ne.s32.totalorder %s157, %s158
      %p167 = scmp.eq.s32.totalorder %s21, 0
      %p168 = por %p166, %p167
      %p169 = scmp.ne.s32.totalorder %s157, %s158
      %p170 = scmp.eq.s32.totalorder %s22, 5
      %p171 = por %p169, %p170
      %p173 = scmp.ne.s32.totalorder %s158, %s172
      %p174 = scmp.eq.s32.totalorder %s22, 0
      %p175 = por %p173, %p174
      %s176 = ssub.s32 %s16, %s23
      %p177 = scmp.eq.s32.totalorder %s176, 0
      %s179 = sadd.s32 %s178, 1
      %s180 = scalar_select %p177, %s178, %s179
      %p183 = pneg %p177
      %p184 = scmp.eq.s32.totalorder %s16, 5
      %p185 = por %p183, %p184
      %p186 = scmp.ne.s32.totalorder %s178, %s181
      %p187 = scmp.eq.s32.totalorder %s16, 0
      %p188 = por %p186, %p187
      %p189 = scmp.ne.s32.totalorder %s178, %s181
      %p190 = scmp.eq.s32.totalorder %s21, 5
      %p191 = por %p189, %p190
      %p192 = scmp.ne.s32.totalorder %s181, %s182
      %p193 = scmp.eq.s32.totalorder %s21, 0
      %p194 = por %p192, %p193
      %p195 = scmp.ne.s32.totalorder %s181, %s182
      %p196 = scmp.eq.s32.totalorder %s22, 5
      %p197 = por %p195, %p196
      %p199 = scmp.ne.s32.totalorder %s182, %s198
      %p200 = scmp.eq.s32.totalorder %s22, 0
      %p201 = por %p199, %p200
      %p202 = scmp.le.s32.totalorder 1, %s16
      %p203 = scmp.lt.s32.totalorder %s16, 7
      %p204 = pnand %p202, %p203
      %p205 = pneg %p204
      // Predicated region
      $region9: #{matrix_lstm_lr_rollout.1} parent=5 // pred_check
        _
      $region10: #{matrix_lstm_lr_rollout.1} parent=5 // pred_check_branch
        %207 = sbr.rel (%p204) target = $region12
      $region11: #{matrix_lstm_lr_rollout.1} parent=5 // pred_region
        %s208 = ssub.s32 %s16, 1
        // Predicated region
        $region13: #{matrix_lstm_lr_rollout.1} parent=11 // pred_check
          %p209 = pneg %p63
        $region14: #{matrix_lstm_lr_rollout.1} parent=11 // pred_check_branch
          %211 = sbr.rel (%p209) target = $region16
        $region15: #{matrix_lstm_lr_rollout.1} parent=11 // pred_region
          _
        $region16: #{matrix_lstm_lr_rollout.1} parent=11 // pred_fallthru
          _
        // Predicated region
        $region17: #{matrix_lstm_lr_rollout.1} parent=11 // pred_check
          %p212 = pneg %p84
        $region18: #{matrix_lstm_lr_rollout.1} parent=11 // pred_check_branch
          %214 = sbr.rel (%p212) target = $region20
        $region19: #{matrix_lstm_lr_rollout.1} parent=11 // pred_region
          %s216 = ssub.s32 24576, 24576
          %217 = vsyncadd [#allocation3], %s216
          %s218 = sshll.u32 [#allocation2], 4
          %s219 = int_to_ptr.vmem [resolvable:$true] %s218
          %224 = dma.hbm_to_vmem [thread:$0]  %s2, 24576, %s219, [#allocation3], 512, 512, 32
        $region20: #{matrix_lstm_lr_rollout.1} parent=11 // pred_fallthru
          _
        // Predicated region
        $region21: #{matrix_lstm_lr_rollout.1} parent=11 // pred_check
          %p225 = pneg %p105
        $region22: #{matrix_lstm_lr_rollout.1} parent=11 // pred_check_branch
          %227 = sbr.rel (%p225) target = $region24
        $region23: #{matrix_lstm_lr_rollout.1} parent=11 // pred_region
          %s229 = ssub.s32 256, 256
          %230 = vsyncadd [#allocation5], %s229
          %s232 = sshll.u32 [#allocation4], 4
          %s233 = int_to_ptr.vmem [resolvable:$true] %s232
          %235 = dma.hbm_to_vmem [thread:$0]  %s3, 256, %s233, [#allocation5]
        $region24: #{matrix_lstm_lr_rollout.1} parent=11 // pred_fallthru
          _
        // Predicated region
        $region25: #{matrix_lstm_lr_rollout.1} parent=11 // pred_check
          %p236 = pneg %p126
        $region26: #{matrix_lstm_lr_rollout.1} parent=11 // pred_check_branch
          %238 = sbr.rel (%p236) target = $region28
        $region27: #{matrix_lstm_lr_rollout.1} parent=11 // pred_region
          %s240 = ssub.s32 32768, 32768
          %241 = vsyncadd [#allocation5], %s240
          %s242 = sshll.u32 [#allocation6], 4
          %s243 = int_to_ptr.vmem [resolvable:$true] %s242
          %248 = dma.hbm_to_vmem [thread:$0]  %s4, 32768, %s243, [#allocation5], 512, 512, 32
        $region28: #{matrix_lstm_lr_rollout.1} parent=11 // pred_fallthru
          _
        // Predicated region
        $region29: #{matrix_lstm_lr_rollout.1} parent=11 // pred_check
          %p249 = pneg %p147
        $region30: #{matrix_lstm_lr_rollout.1} parent=11 // pred_check_branch
          %251 = sbr.rel (%p249) target = $region32
        $region31: #{matrix_lstm_lr_rollout.1} parent=11 // pred_region
          _
        $region32: #{matrix_lstm_lr_rollout.1} parent=11 // pred_fallthru
          _
      $region12: #{matrix_lstm_lr_rollout.1} parent=5 // pred_fallthru
        _
      %p252 = scmp.lt.s32.totalorder %s16, 6
      // Predicated region
      $region33: #{matrix_lstm_lr_rollout.1} parent=5 // pred_check
        %p253 = pneg %p252
      $region34: #{matrix_lstm_lr_rollout.1} parent=5 // pred_check_branch
        %255 = sbr.rel (%p253) target = $region36
      $region35: #{matrix_lstm_lr_rollout.1} parent=5 // pred_region
        // Predicated region
        $region37: #{matrix_lstm_lr_rollout.1} parent=35 // pred_check
          %p256 = pneg %p36
        $region38: #{matrix_lstm_lr_rollout.1} parent=35 // pred_check_branch
          %258 = sbr.rel (%p256) target = $region40
        $region39: #{matrix_lstm_lr_rollout.1} parent=35 // pred_region
          %p259 = scmp.lt.s32.totalorder %s16, 5
          %s260 = scalar_select %p259, %s16, 5
          %s261 = smul.addr %s260, 2
          %s262 = scalar_lea.vmem %s0, %s261
        $region40: #{matrix_lstm_lr_rollout.1} parent=35 // pred_fallthru
          _
      $region36: #{matrix_lstm_lr_rollout.1} parent=5 // pred_fallthru
        _
      %p263 = scmp.le.s32.totalorder 1, %s16
      %p264 = scmp.lt.s32.totalorder %s16, 7
      %p265 = pnand %p263, %p264
      %p266 = pneg %p265
      // Predicated region
      $region41: #{matrix_lstm_lr_rollout.1} parent=5 // pred_check
        _
      $region42: #{matrix_lstm_lr_rollout.1} parent=5 // pred_check_branch
        %268 = sbr.rel (%p265) target = $region44
      $region43: #{matrix_lstm_lr_rollout.1} parent=5 // pred_region
        %s269 = ssub.s32 %s16, 1
        // Predicated region
        $region45: #{matrix_lstm_lr_rollout.1} parent=43 // pred_check
          %p270 = pneg %p84
        $region46: #{matrix_lstm_lr_rollout.1} parent=43 // pred_check_branch
          %272 = sbr.rel (%p270) target = $region48
        $region47: #{matrix_lstm_lr_rollout.1} parent=43 // pred_region
          %273 = dma.done [#allocation3], 24576
        $region48: #{matrix_lstm_lr_rollout.1} parent=43 // pred_fallthru
          _
        // Predicated region
        $region49: #{matrix_lstm_lr_rollout.1} parent=43 // pred_check
          %p274 = pneg %p105
        $region50: #{matrix_lstm_lr_rollout.1} parent=43 // pred_check_branch
          %276 = sbr.rel (%p274) target = $region52
        $region51: #{matrix_lstm_lr_rollout.1} parent=43 // pred_region
          %277 = dma.done [#allocation5], 256
        $region52: #{matrix_lstm_lr_rollout.1} parent=43 // pred_fallthru
          _
        // Predicated region
        $region53: #{matrix_lstm_lr_rollout.1} parent=43 // pred_check
          %p278 = pneg %p126
        $region54: #{matrix_lstm_lr_rollout.1} parent=43 // pred_check_branch
          %280 = sbr.rel (%p278) target = $region56
        $region55: #{matrix_lstm_lr_rollout.1} parent=43 // pred_region
          %281 = dma.done [#allocation5], 32768
        $region56: #{matrix_lstm_lr_rollout.1} parent=43 // pred_fallthru
          _
        %p282 = scmp.lt.s32.totalorder %s21, 5
        %s283 = scalar_select %p282, %s21, 5
        %s284 = smul.addr %s283, 2
        %s285 = scalar_lea.vmem %s0, %s284
        %p286 = pneg %p42
        %p287 = pneg %p39
        %p288 = pneg %p63
        %p289 = pneg %p60
        %p290 = pneg %p84
        %p291 = pneg %p81
        %p292 = pneg %p105
        %p293 = pneg %p102
        %p294 = pneg %p126
        %p295 = pneg %p123
        %p296 = pneg %p147
        %p297 = pneg %p144
        %p298 = pneg %p168
        %p299 = pneg %p165
        %p300 = pneg %p194
        %p301 = pneg %p191
        %p302 = scmp.lt.s32.totalorder %s21, 5
        %s303 = scalar_select %p302, %s21, 5
        %s304 = smul.addr %s303, 2
        %s305 = scalar_lea.vmem %s7, %s304
        %p306 = scmp.lt.s32.totalorder %s21, 5
        %s307 = scalar_select %p306, %s21, 5
        %s308 = smul.addr %s307, 2
        %s309 = scalar_lea.vmem %s0, %s308
        %p310 = scmp.lt.s32.totalorder %s21, 5
        %s311 = scalar_select %p310, %s21, 5
        %s312 = smul.addr %s311, 2
        %s313 = scalar_lea.vmem %s7, %s312
        %p315 = scmp.eq.s32.totalorder %s21, 0
        // Predicated region
        $region57: #{matrix_lstm_lr_rollout.1} parent=43 // pred_check
          %p316 = pneg %p315
        $region58: #{matrix_lstm_lr_rollout.1} parent=43 // pred_check_branch
          %318 = sbr.rel (%p316) target = $region60
        $region59: #{matrix_lstm_lr_rollout.1} parent=43 // pred_region
          %v319 = vld [vmem:[%s1] sm:$0xff]
          %v320 = vld [vmem:[%s1 + $0x8] sm:$0xff]
          %321 = vst [vmem:[%s6] sm:$0xff] %v319
          %322 = vst [vmem:[%s6 + $0x8] sm:$0xff] %v320
        $region60: #{matrix_lstm_lr_rollout.1} parent=43 // pred_fallthru
          _
        %v323 = vld [vmem:[%s6] sm:$0xf]
        %v324 = vld [vmem:[%s6 + $0x4] sm:$0xf]
        %v325 = vld [vmem:[%s6 + $0x8] sm:$0xf]
        %v326 = vld [vmem:[%s6 + $0xc] sm:$0xf]
        %v327 = vld [vmem:[%s309] sm:$0x3]
        %v330 = vunpack.c.l.s4 1983009808
        %v331 = vunpack.c.0.s8 %v330
        %v332 = vlaneseq
        %v333 = vshrl.u32 %v332, 7
        %v334 = vsub.s32 %v331, %v333
        %v335 = vrot.slane %v323, %v334
        %v336 = vcombine.high %v335, %v335
        %v339 = vld [vmem:[#allocation4] ss:$2 sm:$0xff]
        %v340 = vpack.c.bf16 %v327, %v327
        %v341 = vpack.c.bf16 %v335, %v335
        %v342 = vpack.c.bf16 %v336, %v336
        %v343 = vld [vmem:[#allocation2] sm:$0xff]
        %v344 = vld [vmem:[#allocation2 + $0x8] sm:$0xff]
        %v345 = vld [vmem:[#allocation2 + $0x10] sm:$0xff]
        %v346 = vld [vmem:[#allocation2 + $0x18] sm:$0xff]
        %v347 = vld [vmem:[#allocation2 + $0x20] sm:$0xff]
        %v348 = vld [vmem:[#allocation2 + $0x28] sm:$0xff]
        %v349 = vld [vmem:[#allocation2 + $0x30] sm:$0xff]
        %v350 = vld [vmem:[#allocation2 + $0x38] sm:$0xff]
        %v351 = vld [vmem:[#allocation2 + $0x40] sm:$0xff]
        %v352 = vld [vmem:[#allocation2 + $0x48] sm:$0xff]
        %v353 = vld [vmem:[#allocation2 + $0x50] sm:$0xff]
        %v354 = vld [vmem:[#allocation2 + $0x58] sm:$0xff]
        %v355 = vld [vmem:[#allocation2 + $0x60] sm:$0xff]
        %v356 = vld [vmem:[#allocation2 + $0x68] sm:$0xff]
        %v357 = vld [vmem:[#allocation2 + $0x70] sm:$0xff]
        %v358 = vld [vmem:[#allocation2 + $0x78] sm:$0xff]
        %v359 = vld [vmem:[#allocation2 + $0x80] sm:$0xff]
        %v360 = vld [vmem:[#allocation2 + $0x88] sm:$0xff]
        %v361 = vld [vmem:[#allocation2 + $0x90] sm:$0xff]
        %v362 = vld [vmem:[#allocation2 + $0x98] sm:$0xff]
        %v363 = vld [vmem:[#allocation2 + $0xa0] sm:$0xff]
        %v364 = vld [vmem:[#allocation2 + $0xa8] sm:$0xff]
        %v365 = vld [vmem:[#allocation2 + $0xb0] sm:$0xff]
        %v366 = vld [vmem:[#allocation2 + $0xb8] sm:$0xff]
        %v367 = vld [vmem:[#allocation2 + $0xc0] sm:$0xff]
        %v368 = vld [vmem:[#allocation2 + $0xc8] sm:$0xff]
        %v369 = vld [vmem:[#allocation2 + $0xd0] sm:$0xff]
        %v370 = vld [vmem:[#allocation2 + $0xd8] sm:$0xff]
        %v371 = vld [vmem:[#allocation2 + $0xe0] sm:$0xff]
        %v372 = vld [vmem:[#allocation2 + $0xe8] sm:$0xff]
        %v373 = vld [vmem:[#allocation2 + $0xf0] sm:$0xff]
        %v374 = vld [vmem:[#allocation2 + $0xf8] sm:$0xff]
        %v375 = vld [vmem:[#allocation2 + $0x100] sm:$0xff]
        %v376 = vld [vmem:[#allocation2 + $0x108] sm:$0xff]
        %v377 = vld [vmem:[#allocation2 + $0x110] sm:$0xff]
        %v378 = vld [vmem:[#allocation2 + $0x118] sm:$0xff]
        %v379 = vld [vmem:[#allocation2 + $0x120] sm:$0xff]
        %v380 = vld [vmem:[#allocation2 + $0x128] sm:$0xff]
        %v381 = vld [vmem:[#allocation2 + $0x130] sm:$0xff]
        %v382 = vld [vmem:[#allocation2 + $0x138] sm:$0xff]
        %v383 = vld [vmem:[#allocation2 + $0x140] sm:$0xff]
        %v384 = vld [vmem:[#allocation2 + $0x148] sm:$0xff]
        %v385 = vld [vmem:[#allocation2 + $0x150] sm:$0xff]
        %v386 = vld [vmem:[#allocation2 + $0x158] sm:$0xff]
        %v387 = vld [vmem:[#allocation2 + $0x160] sm:$0xff]
        %v388 = vld [vmem:[#allocation2 + $0x168] sm:$0xff]
        %v389 = vld [vmem:[#allocation2 + $0x170] sm:$0xff]
        %v390 = vld [vmem:[#allocation2 + $0x178] sm:$0xff]
        %v391 = vld [vmem:[#allocation2 + $0x180] sm:$0xff]
        %v392 = vld [vmem:[#allocation2 + $0x188] sm:$0xff]
        %v393 = vld [vmem:[#allocation2 + $0x190] sm:$0xff]
        %v394 = vld [vmem:[#allocation2 + $0x198] sm:$0xff]
        %v395 = vld [vmem:[#allocation2 + $0x1a0] sm:$0xff]
        %v396 = vld [vmem:[#allocation2 + $0x1a8] sm:$0xff]
        %v397 = vld [vmem:[#allocation2 + $0x1b0] sm:$0xff]
        %v398 = vld [vmem:[#allocation2 + $0x1b8] sm:$0xff]
        %v399 = vld [vmem:[#allocation2 + $0x1c0] sm:$0xff]
        %v400 = vld [vmem:[#allocation2 + $0x1c8] sm:$0xff]
        %v401 = vld [vmem:[#allocation2 + $0x1d0] sm:$0xff]
        %v402 = vld [vmem:[#allocation2 + $0x1d8] sm:$0xff]
        %v403 = vld [vmem:[#allocation2 + $0x1e0] sm:$0xff]
        %v404 = vld [vmem:[#allocation2 + $0x1e8] sm:$0xff]
        %v405 = vld [vmem:[#allocation2 + $0x1f0] sm:$0xff]
        %v406 = vld [vmem:[#allocation2 + $0x1f8] sm:$0xff]
        %v407 = vld [vmem:[#allocation2 + $0x200] sm:$0xff]
        %v408 = vld [vmem:[#allocation2 + $0x208] sm:$0xff]
        %v409 = vld [vmem:[#allocation2 + $0x210] sm:$0xff]
        %v410 = vld [vmem:[#allocation2 + $0x218] sm:$0xff]
        %v411 = vld [vmem:[#allocation2 + $0x220] sm:$0xff]
        %v412 = vld [vmem:[#allocation2 + $0x228] sm:$0xff]
        %v413 = vld [vmem:[#allocation2 + $0x230] sm:$0xff]
        %v414 = vld [vmem:[#allocation2 + $0x238] sm:$0xff]
        %v415 = vld [vmem:[#allocation2 + $0x240] sm:$0xff]
        %v416 = vld [vmem:[#allocation2 + $0x248] sm:$0xff]
        %v417 = vld [vmem:[#allocation2 + $0x250] sm:$0xff]
        %v418 = vld [vmem:[#allocation2 + $0x258] sm:$0xff]
        %v419 = vld [vmem:[#allocation2 + $0x260] sm:$0xff]
        %v420 = vld [vmem:[#allocation2 + $0x268] sm:$0xff]
        %v421 = vld [vmem:[#allocation2 + $0x270] sm:$0xff]
        %v422 = vld [vmem:[#allocation2 + $0x278] sm:$0xff]
        %v423 = vld [vmem:[#allocation2 + $0x280] sm:$0xff]
        %v424 = vld [vmem:[#allocation2 + $0x288] sm:$0xff]
        %v425 = vld [vmem:[#allocation2 + $0x290] sm:$0xff]
        %v426 = vld [vmem:[#allocation2 + $0x298] sm:$0xff]
        %v427 = vld [vmem:[#allocation2 + $0x2a0] sm:$0xff]
        %v428 = vld [vmem:[#allocation2 + $0x2a8] sm:$0xff]
        %v429 = vld [vmem:[#allocation2 + $0x2b0] sm:$0xff]
        %v430 = vld [vmem:[#allocation2 + $0x2b8] sm:$0xff]
        %v431 = vld [vmem:[#allocation2 + $0x2c0] sm:$0xff]
        %v432 = vld [vmem:[#allocation2 + $0x2c8] sm:$0xff]
        %v433 = vld [vmem:[#allocation2 + $0x2d0] sm:$0xff]
        %v434 = vld [vmem:[#allocation2 + $0x2d8] sm:$0xff]
        %v435 = vld [vmem:[#allocation2 + $0x2e0] sm:$0xff]
        %v436 = vld [vmem:[#allocation2 + $0x2e8] sm:$0xff]
        %v437 = vld [vmem:[#allocation2 + $0x2f0] sm:$0xff]
        %v438 = vld [vmem:[#allocation2 + $0x2f8] sm:$0xff]
        %v439 = vld [vmem:[#allocation2 + $0x300] sm:$0xff]
        %v440 = vld [vmem:[#allocation2 + $0x308] sm:$0xff]
        %v441 = vld [vmem:[#allocation2 + $0x310] sm:$0xff]
        %v442 = vld [vmem:[#allocation2 + $0x318] sm:$0xff]
        %v443 = vld [vmem:[#allocation2 + $0x320] sm:$0xff]
        %v444 = vld [vmem:[#allocation2 + $0x328] sm:$0xff]
        %v445 = vld [vmem:[#allocation2 + $0x330] sm:$0xff]
        %v446 = vld [vmem:[#allocation2 + $0x338] sm:$0xff]
        %v447 = vld [vmem:[#allocation2 + $0x340] sm:$0xff]
        %v448 = vld [vmem:[#allocation2 + $0x348] sm:$0xff]
        %v449 = vld [vmem:[#allocation2 + $0x350] sm:$0xff]
        %v450 = vld [vmem:[#allocation2 + $0x358] sm:$0xff]
        %v451 = vld [vmem:[#allocation2 + $0x360] sm:$0xff]
        %v452 = vld [vmem:[#allocation2 + $0x368] sm:$0xff]
        %v453 = vld [vmem:[#allocation2 + $0x370] sm:$0xff]
        %v454 = vld [vmem:[#allocation2 + $0x378] sm:$0xff]
        %v455 = vld [vmem:[#allocation2 + $0x380] sm:$0xff]
        %v456 = vld [vmem:[#allocation2 + $0x388] sm:$0xff]
        %v457 = vld [vmem:[#allocation2 + $0x390] sm:$0xff]
        %v458 = vld [vmem:[#allocation2 + $0x398] sm:$0xff]
        %v459 = vld [vmem:[#allocation2 + $0x3a0] sm:$0xff]
        %v460 = vld [vmem:[#allocation2 + $0x3a8] sm:$0xff]
        %v461 = vld [vmem:[#allocation2 + $0x3b0] sm:$0xff]
        %v462 = vld [vmem:[#allocation2 + $0x3b8] sm:$0xff]
        %v463 = vld [vmem:[#allocation2 + $0x3c0] sm:$0xff]
        %v464 = vld [vmem:[#allocation2 + $0x3c8] sm:$0xff]
        %v465 = vld [vmem:[#allocation2 + $0x3d0] sm:$0xff]
        %v466 = vld [vmem:[#allocation2 + $0x3d8] sm:$0xff]
        %v467 = vld [vmem:[#allocation2 + $0x3e0] sm:$0xff]
        %v468 = vld [vmem:[#allocation2 + $0x3e8] sm:$0xff]
        %v469 = vld [vmem:[#allocation2 + $0x3f0] sm:$0xff]
        %v470 = vld [vmem:[#allocation2 + $0x3f8] sm:$0xff]
        %v471 = vld [vmem:[#allocation2 + $0x400] sm:$0xff]
        %v472 = vld [vmem:[#allocation2 + $0x408] sm:$0xff]
        %v473 = vld [vmem:[#allocation2 + $0x410] sm:$0xff]
        %v474 = vld [vmem:[#allocation2 + $0x418] sm:$0xff]
        %v475 = vld [vmem:[#allocation2 + $0x420] sm:$0xff]
        %v476 = vld [vmem:[#allocation2 + $0x428] sm:$0xff]
        %v477 = vld [vmem:[#allocation2 + $0x430] sm:$0xff]
        %v478 = vld [vmem:[#allocation2 + $0x438] sm:$0xff]
        %v479 = vld [vmem:[#allocation2 + $0x440] sm:$0xff]
        %v480 = vld [vmem:[#allocation2 + $0x448] sm:$0xff]
        %v481 = vld [vmem:[#allocation2 + $0x450] sm:$0xff]
        %v482 = vld [vmem:[#allocation2 + $0x458] sm:$0xff]
        %v483 = vld [vmem:[#allocation2 + $0x460] sm:$0xff]
        %v484 = vld [vmem:[#allocation2 + $0x468] sm:$0xff]
        %v485 = vld [vmem:[#allocation2 + $0x470] sm:$0xff]
        %v486 = vld [vmem:[#allocation2 + $0x478] sm:$0xff]
        %v487 = vld [vmem:[#allocation2 + $0x480] sm:$0xff]
        %v488 = vld [vmem:[#allocation2 + $0x488] sm:$0xff]
        %v489 = vld [vmem:[#allocation2 + $0x490] sm:$0xff]
        %v490 = vld [vmem:[#allocation2 + $0x498] sm:$0xff]
        %v491 = vld [vmem:[#allocation2 + $0x4a0] sm:$0xff]
        %v492 = vld [vmem:[#allocation2 + $0x4a8] sm:$0xff]
        %v493 = vld [vmem:[#allocation2 + $0x4b0] sm:$0xff]
        %v494 = vld [vmem:[#allocation2 + $0x4b8] sm:$0xff]
        %v495 = vld [vmem:[#allocation2 + $0x4c0] sm:$0xff]
        %v496 = vld [vmem:[#allocation2 + $0x4c8] sm:$0xff]
        %v497 = vld [vmem:[#allocation2 + $0x4d0] sm:$0xff]
        %v498 = vld [vmem:[#allocation2 + $0x4d8] sm:$0xff]
        %v499 = vld [vmem:[#allocation2 + $0x4e0] sm:$0xff]
        %v500 = vld [vmem:[#allocation2 + $0x4e8] sm:$0xff]
        %v501 = vld [vmem:[#allocation2 + $0x4f0] sm:$0xff]
        %v502 = vld [vmem:[#allocation2 + $0x4f8] sm:$0xff]
        %v503 = vld [vmem:[#allocation2 + $0x500] sm:$0xff]
        %v504 = vld [vmem:[#allocation2 + $0x508] sm:$0xff]
        %v505 = vld [vmem:[#allocation2 + $0x510] sm:$0xff]
        %v506 = vld [vmem:[#allocation2 + $0x518] sm:$0xff]
        %v507 = vld [vmem:[#allocation2 + $0x520] sm:$0xff]
        %v508 = vld [vmem:[#allocation2 + $0x528] sm:$0xff]
        %v509 = vld [vmem:[#allocation2 + $0x530] sm:$0xff]
        %v510 = vld [vmem:[#allocation2 + $0x538] sm:$0xff]
        %v511 = vld [vmem:[#allocation2 + $0x540] sm:$0xff]
        %v512 = vld [vmem:[#allocation2 + $0x548] sm:$0xff]
        %v513 = vld [vmem:[#allocation2 + $0x550] sm:$0xff]
        %v514 = vld [vmem:[#allocation2 + $0x558] sm:$0xff]
        %v515 = vld [vmem:[#allocation2 + $0x560] sm:$0xff]
        %v516 = vld [vmem:[#allocation2 + $0x568] sm:$0xff]
        %v517 = vld [vmem:[#allocation2 + $0x570] sm:$0xff]
        %v518 = vld [vmem:[#allocation2 + $0x578] sm:$0xff]
        %v519 = vld [vmem:[#allocation2 + $0x580] sm:$0xff]
        %v520 = vld [vmem:[#allocation2 + $0x588] sm:$0xff]
        %v521 = vld [vmem:[#allocation2 + $0x590] sm:$0xff]
        %v522 = vld [vmem:[#allocation2 + $0x598] sm:$0xff]
        %v523 = vld [vmem:[#allocation2 + $0x5a0] sm:$0xff]
        %v524 = vld [vmem:[#allocation2 + $0x5a8] sm:$0xff]
        %v525 = vld [vmem:[#allocation2 + $0x5b0] sm:$0xff]
        %v526 = vld [vmem:[#allocation2 + $0x5b8] sm:$0xff]
        %v527 = vld [vmem:[#allocation2 + $0x5c0] sm:$0xff]
        %v528 = vld [vmem:[#allocation2 + $0x5c8] sm:$0xff]
        %v529 = vld [vmem:[#allocation2 + $0x5d0] sm:$0xff]
        %v530 = vld [vmem:[#allocation2 + $0x5d8] sm:$0xff]
        %v531 = vld [vmem:[#allocation2 + $0x5e0] sm:$0xff]
        %v532 = vld [vmem:[#allocation2 + $0x5e8] sm:$0xff]
        %v533 = vld [vmem:[#allocation2 + $0x5f0] sm:$0xff]
        %v534 = vld [vmem:[#allocation2 + $0x5f8] sm:$0xff]
        %v536 = vlaneseq
        %v537 = vshrl.u32 %v536, 7
        %v538 = vsub.s32 0, %v537
        %v539 = vrot.slane %v339, %v538
        %v540 = vlaneseq
        %v541 = vshrl.u32 %v540, 7
        %v542 = vsub.s32 1, %v541
        %v543 = vrot.slane %v339, %v542
        %v544 = vlaneseq
        %v545 = vshrl.u32 %v544, 7
        %v546 = vsub.s32 2, %v545
        %v547 = vrot.slane %v339, %v546
        %v548 = vlaneseq
        %v549 = vshrl.u32 %v548, 7
        %v550 = vsub.s32 3, %v549
        %v551 = vrot.slane %v339, %v550
        %v552 = vlaneseq
        %v553 = vshrl.u32 %v552, 7
        %v554 = vsub.s32 4, %v553
        %v555 = vrot.slane %v339, %v554
        %v556 = vlaneseq
        %v557 = vshrl.u32 %v556, 7
        %v558 = vsub.s32 5, %v557
        %v559 = vrot.slane %v339, %v558
        %v560 = vlaneseq
        %v561 = vshrl.u32 %v560, 7
        %v562 = vsub.s32 6, %v561
        %v563 = vrot.slane %v339, %v562
        %v564 = vlaneseq
        %v565 = vshrl.u32 %v564, 7
        %v566 = vsub.s32 7, %v565
        %v567 = vrot.slane %v339, %v566
        %v768 = vunpack.c.l.b16 %v343
        %v769 = vunpack.c.h.b16 %v343
        %v770 = vunpack.c.l.b16 %v344
        %v771 = vunpack.c.h.b16 %v344
        %v772 = vunpack.c.l.b16 %v345
        %v773 = vunpack.c.h.b16 %v345
        %v774 = vunpack.c.l.b16 %v346
        %v775 = vunpack.c.h.b16 %v346
        %v776 = vunpack.c.l.b16 %v347
        %v777 = vunpack.c.h.b16 %v347
        %v778 = vunpack.c.l.b16 %v348
        %v779 = vunpack.c.h.b16 %v348
        %v780 = vunpack.c.l.b16 %v349
        %v781 = vunpack.c.h.b16 %v349
        %v782 = vunpack.c.l.b16 %v350
        %v783 = vunpack.c.h.b16 %v350
        %v784 = vunpack.c.l.b16 %v351
        %v785 = vunpack.c.h.b16 %v351
        %v786 = vunpack.c.l.b16 %v352
        %v787 = vunpack.c.h.b16 %v352
        %v788 = vunpack.c.l.b16 %v353
        %v789 = vunpack.c.h.b16 %v353
        %v790 = vunpack.c.l.b16 %v354
        %v791 = vunpack.c.h.b16 %v354
        %v792 = vunpack.c.l.b16 %v355
        %v793 = vunpack.c.h.b16 %v355
        %v794 = vunpack.c.l.b16 %v356
        %v795 = vunpack.c.h.b16 %v356
        %v796 = vunpack.c.l.b16 %v357
        %v797 = vunpack.c.h.b16 %v357
        %v798 = vunpack.c.l.b16 %v358
        %v799 = vunpack.c.h.b16 %v358
        %v800 = vunpack.c.l.b16 %v359
        %v801 = vunpack.c.h.b16 %v359
        %v802 = vunpack.c.l.b16 %v360
        %v803 = vunpack.c.h.b16 %v360
        %v804 = vunpack.c.l.b16 %v361
        %v805 = vunpack.c.h.b16 %v361
        %v806 = vunpack.c.l.b16 %v362
        %v807 = vunpack.c.h.b16 %v362
        %v808 = vunpack.c.l.b16 %v363
        %v809 = vunpack.c.h.b16 %v363
        %v810 = vunpack.c.l.b16 %v364
        %v811 = vunpack.c.h.b16 %v364
        %v812 = vunpack.c.l.b16 %v365
        %v813 = vunpack.c.h.b16 %v365
        %v814 = vunpack.c.l.b16 %v366
        %v815 = vunpack.c.h.b16 %v366
        %v816 = vunpack.c.l.b16 %v367
        %v817 = vunpack.c.h.b16 %v367
        %v818 = vunpack.c.l.b16 %v368
        %v819 = vunpack.c.h.b16 %v368
        %v820 = vunpack.c.l.b16 %v369
        %v821 = vunpack.c.h.b16 %v369
        %v822 = vunpack.c.l.b16 %v370
        %v823 = vunpack.c.h.b16 %v370
        %v824 = vunpack.c.l.b16 %v371
        %v825 = vunpack.c.h.b16 %v371
        %v826 = vunpack.c.l.b16 %v372
        %v827 = vunpack.c.h.b16 %v372
        %v828 = vunpack.c.l.b16 %v373
        %v829 = vunpack.c.h.b16 %v373
        %v830 = vunpack.c.l.b16 %v374
        %v831 = vunpack.c.h.b16 %v374
        %v832 = vunpack.c.l.b16 %v375
        %v833 = vunpack.c.h.b16 %v375
        %v834 = vunpack.c.l.b16 %v376
        %v835 = vunpack.c.h.b16 %v376
        %v836 = vunpack.c.l.b16 %v377
        %v837 = vunpack.c.h.b16 %v377
        %v838 = vunpack.c.l.b16 %v378
        %v839 = vunpack.c.h.b16 %v378
        %v840 = vunpack.c.l.b16 %v379
        %v841 = vunpack.c.h.b16 %v379
        %v842 = vunpack.c.l.b16 %v380
        %v843 = vunpack.c.h.b16 %v380
        %v844 = vunpack.c.l.b16 %v381
        %v845 = vunpack.c.h.b16 %v381
        %v846 = vunpack.c.l.b16 %v382
        %v847 = vunpack.c.h.b16 %v382
        %v848 = vunpack.c.l.b16 %v383
        %v849 = vunpack.c.h.b16 %v383
        %v850 = vunpack.c.l.b16 %v384
        %v851 = vunpack.c.h.b16 %v384
        %v852 = vunpack.c.l.b16 %v385
        %v853 = vunpack.c.h.b16 %v385
        %v854 = vunpack.c.l.b16 %v386
        %v855 = vunpack.c.h.b16 %v386
        %v856 = vunpack.c.l.b16 %v387
        %v857 = vunpack.c.h.b16 %v387
        %v858 = vunpack.c.l.b16 %v388
        %v859 = vunpack.c.h.b16 %v388
        %v860 = vunpack.c.l.b16 %v389
        %v861 = vunpack.c.h.b16 %v389
        %v862 = vunpack.c.l.b16 %v390
        %v863 = vunpack.c.h.b16 %v390
        %v864 = vunpack.c.l.b16 %v391
        %v865 = vunpack.c.h.b16 %v391
        %v866 = vunpack.c.l.b16 %v392
        %v867 = vunpack.c.h.b16 %v392
        %v868 = vunpack.c.l.b16 %v393
        %v869 = vunpack.c.h.b16 %v393
        %v870 = vunpack.c.l.b16 %v394
        %v871 = vunpack.c.h.b16 %v394
        %v872 = vunpack.c.l.b16 %v395
        %v873 = vunpack.c.h.b16 %v395
        %v874 = vunpack.c.l.b16 %v396
        %v875 = vunpack.c.h.b16 %v396
        %v876 = vunpack.c.l.b16 %v397
        %v877 = vunpack.c.h.b16 %v397
        %v878 = vunpack.c.l.b16 %v398
        %v879 = vunpack.c.h.b16 %v398
        %v880 = vunpack.c.l.b16 %v399
        %v881 = vunpack.c.h.b16 %v399
        %v882 = vunpack.c.l.b16 %v400
        %v883 = vunpack.c.h.b16 %v400
        %v884 = vunpack.c.l.b16 %v401
        %v885 = vunpack.c.h.b16 %v401
        %v886 = vunpack.c.l.b16 %v402
        %v887 = vunpack.c.h.b16 %v402
        %v888 = vunpack.c.l.b16 %v403
        %v889 = vunpack.c.h.b16 %v403
        %v890 = vunpack.c.l.b16 %v404
        %v891 = vunpack.c.h.b16 %v404
        %v892 = vunpack.c.l.b16 %v405
        %v893 = vunpack.c.h.b16 %v405
        %v894 = vunpack.c.l.b16 %v406
        %v895 = vunpack.c.h.b16 %v406
        %v896 = vunpack.c.l.b16 %v407
        %v897 = vunpack.c.h.b16 %v407
        %v898 = vunpack.c.l.b16 %v408
        %v899 = vunpack.c.h.b16 %v408
        %v900 = vunpack.c.l.b16 %v409
        %v901 = vunpack.c.h.b16 %v409
        %v902 = vunpack.c.l.b16 %v410
        %v903 = vunpack.c.h.b16 %v410
        %v904 = vunpack.c.l.b16 %v411
        %v905 = vunpack.c.h.b16 %v411
        %v906 = vunpack.c.l.b16 %v412
        %v907 = vunpack.c.h.b16 %v412
        %v908 = vunpack.c.l.b16 %v413
        %v909 = vunpack.c.h.b16 %v413
        %v910 = vunpack.c.l.b16 %v414
        %v911 = vunpack.c.h.b16 %v414
        %v912 = vunpack.c.l.b16 %v415
        %v913 = vunpack.c.h.b16 %v415
        %v914 = vunpack.c.l.b16 %v416
        %v915 = vunpack.c.h.b16 %v416
        %v916 = vunpack.c.l.b16 %v417
        %v917 = vunpack.c.h.b16 %v417
        %v918 = vunpack.c.l.b16 %v418
        %v919 = vunpack.c.h.b16 %v418
        %v920 = vunpack.c.l.b16 %v419
        %v921 = vunpack.c.h.b16 %v419
        %v922 = vunpack.c.l.b16 %v420
        %v923 = vunpack.c.h.b16 %v420
        %v924 = vunpack.c.l.b16 %v421
        %v925 = vunpack.c.h.b16 %v421
        %v926 = vunpack.c.l.b16 %v422
        %v927 = vunpack.c.h.b16 %v422
        %v928 = vunpack.c.l.b16 %v423
        %v929 = vunpack.c.h.b16 %v423
        %v930 = vunpack.c.l.b16 %v424
        %v931 = vunpack.c.h.b16 %v424
        %v932 = vunpack.c.l.b16 %v425
        %v933 = vunpack.c.h.b16 %v425
        %v934 = vunpack.c.l.b16 %v426
        %v935 = vunpack.c.h.b16 %v426
        %v936 = vunpack.c.l.b16 %v427
        %v937 = vunpack.c.h.b16 %v427
        %v938 = vunpack.c.l.b16 %v428
        %v939 = vunpack.c.h.b16 %v428
        %v940 = vunpack.c.l.b16 %v429
        %v941 = vunpack.c.h.b16 %v429
        %v942 = vunpack.c.l.b16 %v430
        %v943 = vunpack.c.h.b16 %v430
        %v944 = vunpack.c.l.b16 %v431
        %v945 = vunpack.c.h.b16 %v431
        %v946 = vunpack.c.l.b16 %v432
        %v947 = vunpack.c.h.b16 %v432
        %v948 = vunpack.c.l.b16 %v433
        %v949 = vunpack.c.h.b16 %v433
        %v950 = vunpack.c.l.b16 %v434
        %v951 = vunpack.c.h.b16 %v434
        %v952 = vunpack.c.l.b16 %v435
        %v953 = vunpack.c.h.b16 %v435
        %v954 = vunpack.c.l.b16 %v436
        %v955 = vunpack.c.h.b16 %v436
        %v956 = vunpack.c.l.b16 %v437
        %v957 = vunpack.c.h.b16 %v437
        %v958 = vunpack.c.l.b16 %v438
        %v959 = vunpack.c.h.b16 %v438
        %v960 = vunpack.c.l.b16 %v439
        %v961 = vunpack.c.h.b16 %v439
        %v962 = vunpack.c.l.b16 %v440
        %v963 = vunpack.c.h.b16 %v440
        %v964 = vunpack.c.l.b16 %v441
        %v965 = vunpack.c.h.b16 %v441
        %v966 = vunpack.c.l.b16 %v442
        %v967 = vunpack.c.h.b16 %v442
        %v968 = vunpack.c.l.b16 %v443
        %v969 = vunpack.c.h.b16 %v443
        %v970 = vunpack.c.l.b16 %v444
        %v971 = vunpack.c.h.b16 %v444
        %v972 = vunpack.c.l.b16 %v445
        %v973 = vunpack.c.h.b16 %v445
        %v974 = vunpack.c.l.b16 %v446
        %v975 = vunpack.c.h.b16 %v446
        %v976 = vunpack.c.l.b16 %v447
        %v977 = vunpack.c.h.b16 %v447
        %v978 = vunpack.c.l.b16 %v448
        %v979 = vunpack.c.h.b16 %v448
        %v980 = vunpack.c.l.b16 %v449
        %v981 = vunpack.c.h.b16 %v449
        %v982 = vunpack.c.l.b16 %v450
        %v983 = vunpack.c.h.b16 %v450
        %v984 = vunpack.c.l.b16 %v451
        %v985 = vunpack.c.h.b16 %v451
        %v986 = vunpack.c.l.b16 %v452
        %v987 = vunpack.c.h.b16 %v452
        %v988 = vunpack.c.l.b16 %v453
        %v989 = vunpack.c.h.b16 %v453
        %v990 = vunpack.c.l.b16 %v454
        %v991 = vunpack.c.h.b16 %v454
        %v992 = vunpack.c.l.b16 %v455
        %v993 = vunpack.c.h.b16 %v455
        %v994 = vunpack.c.l.b16 %v456
        %v995 = vunpack.c.h.b16 %v456
        %v996 = vunpack.c.l.b16 %v457
        %v997 = vunpack.c.h.b16 %v457
        %v998 = vunpack.c.l.b16 %v458
        %v999 = vunpack.c.h.b16 %v458
        %v1000 = vunpack.c.l.b16 %v459
        %v1001 = vunpack.c.h.b16 %v459
        %v1002 = vunpack.c.l.b16 %v460
        %v1003 = vunpack.c.h.b16 %v460
        %v1004 = vunpack.c.l.b16 %v461
        %v1005 = vunpack.c.h.b16 %v461
        %v1006 = vunpack.c.l.b16 %v462
        %v1007 = vunpack.c.h.b16 %v462
        %v1008 = vunpack.c.l.b16 %v463
        %v1009 = vunpack.c.h.b16 %v463
        %v1010 = vunpack.c.l.b16 %v464
        %v1011 = vunpack.c.h.b16 %v464
        %v1012 = vunpack.c.l.b16 %v465
        %v1013 = vunpack.c.h.b16 %v465
        %v1014 = vunpack.c.l.b16 %v466
        %v1015 = vunpack.c.h.b16 %v466
        %v1016 = vunpack.c.l.b16 %v467
        %v1017 = vunpack.c.h.b16 %v467
        %v1018 = vunpack.c.l.b16 %v468
        %v1019 = vunpack.c.h.b16 %v468
        %v1020 = vunpack.c.l.b16 %v469
        %v1021 = vunpack.c.h.b16 %v469
        %v1022 = vunpack.c.l.b16 %v470
        %v1023 = vunpack.c.h.b16 %v470
        %v1024 = vunpack.c.l.b16 %v471
        %v1025 = vunpack.c.h.b16 %v471
        %v1026 = vunpack.c.l.b16 %v472
        %v1027 = vunpack.c.h.b16 %v472
        %v1028 = vunpack.c.l.b16 %v473
        %v1029 = vunpack.c.h.b16 %v473
        %v1030 = vunpack.c.l.b16 %v474
        %v1031 = vunpack.c.h.b16 %v474
        %v1032 = vunpack.c.l.b16 %v475
        %v1033 = vunpack.c.h.b16 %v475
        %v1034 = vunpack.c.l.b16 %v476
        %v1035 = vunpack.c.h.b16 %v476
        %v1036 = vunpack.c.l.b16 %v477
        %v1037 = vunpack.c.h.b16 %v477
        %v1038 = vunpack.c.l.b16 %v478
        %v1039 = vunpack.c.h.b16 %v478
        %v1040 = vunpack.c.l.b16 %v479
        %v1041 = vunpack.c.h.b16 %v479
        %v1042 = vunpack.c.l.b16 %v480
        %v1043 = vunpack.c.h.b16 %v480
        %v1044 = vunpack.c.l.b16 %v481
        %v1045 = vunpack.c.h.b16 %v481
        %v1046 = vunpack.c.l.b16 %v482
        %v1047 = vunpack.c.h.b16 %v482
        %v1048 = vunpack.c.l.b16 %v483
        %v1049 = vunpack.c.h.b16 %v483
        %v1050 = vunpack.c.l.b16 %v484
        %v1051 = vunpack.c.h.b16 %v484
        %v1052 = vunpack.c.l.b16 %v485
        %v1053 = vunpack.c.h.b16 %v485
        %v1054 = vunpack.c.l.b16 %v486
        %v1055 = vunpack.c.h.b16 %v486
        %v1056 = vunpack.c.l.b16 %v487
        %v1057 = vunpack.c.h.b16 %v487
        %v1058 = vunpack.c.l.b16 %v488
        %v1059 = vunpack.c.h.b16 %v488
        %v1060 = vunpack.c.l.b16 %v489
        %v1061 = vunpack.c.h.b16 %v489
        %v1062 = vunpack.c.l.b16 %v490
        %v1063 = vunpack.c.h.b16 %v490
        %v1064 = vunpack.c.l.b16 %v491
        %v1065 = vunpack.c.h.b16 %v491
        %v1066 = vunpack.c.l.b16 %v492
        %v1067 = vunpack.c.h.b16 %v492
        %v1068 = vunpack.c.l.b16 %v493
        %v1069 = vunpack.c.h.b16 %v493
        %v1070 = vunpack.c.l.b16 %v494
        %v1071 = vunpack.c.h.b16 %v494
        %v1072 = vunpack.c.l.b16 %v495
        %v1073 = vunpack.c.h.b16 %v495
        %v1074 = vunpack.c.l.b16 %v496
        %v1075 = vunpack.c.h.b16 %v496
        %v1076 = vunpack.c.l.b16 %v497
        %v1077 = vunpack.c.h.b16 %v497
        %v1078 = vunpack.c.l.b16 %v498
        %v1079 = vunpack.c.h.b16 %v498
        %v1080 = vunpack.c.l.b16 %v499
        %v1081 = vunpack.c.h.b16 %v499
        %v1082 = vunpack.c.l.b16 %v500
        %v1083 = vunpack.c.h.b16 %v500
        %v1084 = vunpack.c.l.b16 %v501
        %v1085 = vunpack.c.h.b16 %v501
        %v1086 = vunpack.c.l.b16 %v502
        %v1087 = vunpack.c.h.b16 %v502
        %v1088 = vunpack.c.l.b16 %v503
        %v1089 = vunpack.c.h.b16 %v503
        %v1090 = vunpack.c.l.b16 %v504
        %v1091 = vunpack.c.h.b16 %v504
        %v1092 = vunpack.c.l.b16 %v505
        %v1093 = vunpack.c.h.b16 %v505
        %v1094 = vunpack.c.l.b16 %v506
        %v1095 = vunpack.c.h.b16 %v506
        %v1096 = vunpack.c.l.b16 %v507
        %v1097 = vunpack.c.h.b16 %v507
        %v1098 = vunpack.c.l.b16 %v508
        %v1099 = vunpack.c.h.b16 %v508
        %v1100 = vunpack.c.l.b16 %v509
        %v1101 = vunpack.c.h.b16 %v509
        %v1102 = vunpack.c.l.b16 %v510
        %v1103 = vunpack.c.h.b16 %v510
        %v1104 = vunpack.c.l.b16 %v511
        %v1105 = vunpack.c.h.b16 %v511
        %v1106 = vunpack.c.l.b16 %v512
        %v1107 = vunpack.c.h.b16 %v512
        %v1108 = vunpack.c.l.b16 %v513
        %v1109 = vunpack.c.h.b16 %v513
        %v1110 = vunpack.c.l.b16 %v514
        %v1111 = vunpack.c.h.b16 %v514
        %v1112 = vunpack.c.l.b16 %v515
        %v1113 = vunpack.c.h.b16 %v515
        %v1114 = vunpack.c.l.b16 %v516
        %v1115 = vunpack.c.h.b16 %v516
        %v1116 = vunpack.c.l.b16 %v517
        %v1117 = vunpack.c.h.b16 %v517
        %v1118 = vunpack.c.l.b16 %v518
        %v1119 = vunpack.c.h.b16 %v518
        %v1120 = vunpack.c.l.b16 %v519
        %v1121 = vunpack.c.h.b16 %v519
        %v1122 = vunpack.c.l.b16 %v520
        %v1123 = vunpack.c.h.b16 %v520
        %v1124 = vunpack.c.l.b16 %v521
        %v1125 = vunpack.c.h.b16 %v521
        %v1126 = vunpack.c.l.b16 %v522
        %v1127 = vunpack.c.h.b16 %v522
        %v1128 = vunpack.c.l.b16 %v523
        %v1129 = vunpack.c.h.b16 %v523
        %v1130 = vunpack.c.l.b16 %v524
        %v1131 = vunpack.c.h.b16 %v524
        %v1132 = vunpack.c.l.b16 %v525
        %v1133 = vunpack.c.h.b16 %v525
        %v1134 = vunpack.c.l.b16 %v526
        %v1135 = vunpack.c.h.b16 %v526
        %v1136 = vunpack.c.l.b16 %v527
        %v1137 = vunpack.c.h.b16 %v527
        %v1138 = vunpack.c.l.b16 %v528
        %v1139 = vunpack.c.h.b16 %v528
        %v1140 = vunpack.c.l.b16 %v529
        %v1141 = vunpack.c.h.b16 %v529
        %v1142 = vunpack.c.l.b16 %v530
        %v1143 = vunpack.c.h.b16 %v530
        %v1144 = vunpack.c.l.b16 %v531
        %v1145 = vunpack.c.h.b16 %v531
        %v1146 = vunpack.c.l.b16 %v532
        %v1147 = vunpack.c.h.b16 %v532
        %v1148 = vunpack.c.l.b16 %v533
        %v1149 = vunpack.c.h.b16 %v533
        %v1150 = vunpack.c.l.b16 %v534
        %v1151 = vunpack.c.h.b16 %v534
        %v1152 = vpack.c.b16 %v776, %v768
        %v1153 = vpack.c.b16 %v777, %v769
        %v1154 = vpack.c.b16 %v778, %v770
        %v1155 = vpack.c.b16 %v779, %v771
        %v1156 = vpack.c.b16 %v780, %v772
        %v1157 = vpack.c.b16 %v781, %v773
        %v1158 = vpack.c.b16 %v782, %v774
        %v1159 = vpack.c.b16 %v783, %v775
        %v1160 = vpack.c.b16 %v792, %v784
        %v1161 = vpack.c.b16 %v793, %v785
        %v1162 = vpack.c.b16 %v794, %v786
        %v1163 = vpack.c.b16 %v795, %v787
        %v1164 = vpack.c.b16 %v796, %v788
        %v1165 = vpack.c.b16 %v797, %v789
        %v1166 = vpack.c.b16 %v798, %v790
        %v1167 = vpack.c.b16 %v799, %v791
        %v1168 = vpack.c.b16 %v808, %v800
        %v1169 = vpack.c.b16 %v809, %v801
        %v1170 = vpack.c.b16 %v810, %v802
        %v1171 = vpack.c.b16 %v811, %v803
        %v1172 = vpack.c.b16 %v812, %v804
        %v1173 = vpack.c.b16 %v813, %v805
        %v1174 = vpack.c.b16 %v814, %v806
        %v1175 = vpack.c.b16 %v815, %v807
        %v1176 = vpack.c.b16 %v824, %v816
        %v1177 = vpack.c.b16 %v825, %v817
        %v1178 = vpack.c.b16 %v826, %v818
        %v1179 = vpack.c.b16 %v827, %v819
        %v1180 = vpack.c.b16 %v828, %v820
        %v1181 = vpack.c.b16 %v829, %v821
        %v1182 = vpack.c.b16 %v830, %v822
        %v1183 = vpack.c.b16 %v831, %v823
        %v1184 = vpack.c.b16 %v840, %v832
        %v1185 = vpack.c.b16 %v841, %v833
        %v1186 = vpack.c.b16 %v842, %v834
        %v1187 = vpack.c.b16 %v843, %v835
        %v1188 = vpack.c.b16 %v844, %v836
        %v1189 = vpack.c.b16 %v845, %v837
        %v1190 = vpack.c.b16 %v846, %v838
        %v1191 = vpack.c.b16 %v847, %v839
        %v1192 = vpack.c.b16 %v856, %v848
        %v1193 = vpack.c.b16 %v857, %v849
        %v1194 = vpack.c.b16 %v858, %v850
        %v1195 = vpack.c.b16 %v859, %v851
        %v1196 = vpack.c.b16 %v860, %v852
        %v1197 = vpack.c.b16 %v861, %v853
        %v1198 = vpack.c.b16 %v862, %v854
        %v1199 = vpack.c.b16 %v863, %v855
        %v1200 = vpack.c.b16 %v872, %v864
        %v1201 = vpack.c.b16 %v873, %v865
        %v1202 = vpack.c.b16 %v874, %v866
        %v1203 = vpack.c.b16 %v875, %v867
        %v1204 = vpack.c.b16 %v876, %v868
        %v1205 = vpack.c.b16 %v877, %v869
        %v1206 = vpack.c.b16 %v878, %v870
        %v1207 = vpack.c.b16 %v879, %v871
        %v1208 = vpack.c.b16 %v888, %v880
        %v1209 = vpack.c.b16 %v889, %v881
        %v1210 = vpack.c.b16 %v890, %v882
        %v1211 = vpack.c.b16 %v891, %v883
        %v1212 = vpack.c.b16 %v892, %v884
        %v1213 = vpack.c.b16 %v893, %v885
        %v1214 = vpack.c.b16 %v894, %v886
        %v1215 = vpack.c.b16 %v895, %v887
        %v1216 = vpack.c.b16 %v904, %v896
        %v1217 = vpack.c.b16 %v905, %v897
        %v1218 = vpack.c.b16 %v906, %v898
        %v1219 = vpack.c.b16 %v907, %v899
        %v1220 = vpack.c.b16 %v908, %v900
        %v1221 = vpack.c.b16 %v909, %v901
        %v1222 = vpack.c.b16 %v910, %v902
        %v1223 = vpack.c.b16 %v911, %v903
        %v1224 = vpack.c.b16 %v920, %v912
        %v1225 = vpack.c.b16 %v921, %v913
        %v1226 = vpack.c.b16 %v922, %v914
        %v1227 = vpack.c.b16 %v923, %v915
        %v1228 = vpack.c.b16 %v924, %v916
        %v1229 = vpack.c.b16 %v925, %v917
        %v1230 = vpack.c.b16 %v926, %v918
        %v1231 = vpack.c.b16 %v927, %v919
        %v1232 = vpack.c.b16 %v936, %v928
        %v1233 = vpack.c.b16 %v937, %v929
        %v1234 = vpack.c.b16 %v938, %v930
        %v1235 = vpack.c.b16 %v939, %v931
        %v1236 = vpack.c.b16 %v940, %v932
        %v1237 = vpack.c.b16 %v941, %v933
        %v1238 = vpack.c.b16 %v942, %v934
        %v1239 = vpack.c.b16 %v943, %v935
        %v1240 = vpack.c.b16 %v952, %v944
        %v1241 = vpack.c.b16 %v953, %v945
        %v1242 = vpack.c.b16 %v954, %v946
        %v1243 = vpack.c.b16 %v955, %v947
        %v1244 = vpack.c.b16 %v956, %v948
        %v1245 = vpack.c.b16 %v957, %v949
        %v1246 = vpack.c.b16 %v958, %v950
        %v1247 = vpack.c.b16 %v959, %v951
        %v1248 = vpack.c.b16 %v968, %v960
        %v1249 = vpack.c.b16 %v969, %v961
        %v1250 = vpack.c.b16 %v970, %v962
        %v1251 = vpack.c.b16 %v971, %v963
        %v1252 = vpack.c.b16 %v972, %v964
        %v1253 = vpack.c.b16 %v973, %v965
        %v1254 = vpack.c.b16 %v974, %v966
        %v1255 = vpack.c.b16 %v975, %v967
        %v1256 = vpack.c.b16 %v984, %v976
        %v1257 = vpack.c.b16 %v985, %v977
        %v1258 = vpack.c.b16 %v986, %v978
        %v1259 = vpack.c.b16 %v987, %v979
        %v1260 = vpack.c.b16 %v988, %v980
        %v1261 = vpack.c.b16 %v989, %v981
        %v1262 = vpack.c.b16 %v990, %v982
        %v1263 = vpack.c.b16 %v991, %v983
        %v1264 = vpack.c.b16 %v1000, %v992
        %v1265 = vpack.c.b16 %v1001, %v993
        %v1266 = vpack.c.b16 %v1002, %v994
        %v1267 = vpack.c.b16 %v1003, %v995
        %v1268 = vpack.c.b16 %v1004, %v996
        %v1269 = vpack.c.b16 %v1005, %v997
        %v1270 = vpack.c.b16 %v1006, %v998
        %v1271 = vpack.c.b16 %v1007, %v999
        %v1272 = vpack.c.b16 %v1016, %v1008
        %v1273 = vpack.c.b16 %v1017, %v1009
        %v1274 = vpack.c.b16 %v1018, %v1010
        %v1275 = vpack.c.b16 %v1019, %v1011
        %v1276 = vpack.c.b16 %v1020, %v1012
        %v1277 = vpack.c.b16 %v1021, %v1013
        %v1278 = vpack.c.b16 %v1022, %v1014
        %v1279 = vpack.c.b16 %v1023, %v1015
        %v1280 = vpack.c.b16 %v1032, %v1024
        %v1281 = vpack.c.b16 %v1033, %v1025
        %v1282 = vpack.c.b16 %v1034, %v1026
        %v1283 = vpack.c.b16 %v1035, %v1027
        %v1284 = vpack.c.b16 %v1036, %v1028
        %v1285 = vpack.c.b16 %v1037, %v1029
        %v1286 = vpack.c.b16 %v1038, %v1030
        %v1287 = vpack.c.b16 %v1039, %v1031
        %v1288 = vpack.c.b16 %v1048, %v1040
        %v1289 = vpack.c.b16 %v1049, %v1041
        %v1290 = vpack.c.b16 %v1050, %v1042
        %v1291 = vpack.c.b16 %v1051, %v1043
        %v1292 = vpack.c.b16 %v1052, %v1044
        %v1293 = vpack.c.b16 %v1053, %v1045
        %v1294 = vpack.c.b16 %v1054, %v1046
        %v1295 = vpack.c.b16 %v1055, %v1047
        %v1296 = vpack.c.b16 %v1064, %v1056
        %v1297 = vpack.c.b16 %v1065, %v1057
        %v1298 = vpack.c.b16 %v1066, %v1058
        %v1299 = vpack.c.b16 %v1067, %v1059
        %v1300 = vpack.c.b16 %v1068, %v1060
        %v1301 = vpack.c.b16 %v1069, %v1061
        %v1302 = vpack.c.b16 %v1070, %v1062
        %v1303 = vpack.c.b16 %v1071, %v1063
        %v1304 = vpack.c.b16 %v1080, %v1072
        %v1305 = vpack.c.b16 %v1081, %v1073
        %v1306 = vpack.c.b16 %v1082, %v1074
        %v1307 = vpack.c.b16 %v1083, %v1075
        %v1308 = vpack.c.b16 %v1084, %v1076
        %v1309 = vpack.c.b16 %v1085, %v1077
        %v1310 = vpack.c.b16 %v1086, %v1078
        %v1311 = vpack.c.b16 %v1087, %v1079
        %v1312 = vpack.c.b16 %v1096, %v1088
        %v1313 = vpack.c.b16 %v1097, %v1089
        %v1314 = vpack.c.b16 %v1098, %v1090
        %v1315 = vpack.c.b16 %v1099, %v1091
        %v1316 = vpack.c.b16 %v1100, %v1092
        %v1317 = vpack.c.b16 %v1101, %v1093
        %v1318 = vpack.c.b16 %v1102, %v1094
        %v1319 = vpack.c.b16 %v1103, %v1095
        %v1320 = vpack.c.b16 %v1112, %v1104
        %v1321 = vpack.c.b16 %v1113, %v1105
        %v1322 = vpack.c.b16 %v1114, %v1106
        %v1323 = vpack.c.b16 %v1115, %v1107
        %v1324 = vpack.c.b16 %v1116, %v1108
        %v1325 = vpack.c.b16 %v1117, %v1109
        %v1326 = vpack.c.b16 %v1118, %v1110
        %v1327 = vpack.c.b16 %v1119, %v1111
        %v1328 = vpack.c.b16 %v1128, %v1120
        %v1329 = vpack.c.b16 %v1129, %v1121
        %v1330 = vpack.c.b16 %v1130, %v1122
        %v1331 = vpack.c.b16 %v1131, %v1123
        %v1332 = vpack.c.b16 %v1132, %v1124
        %v1333 = vpack.c.b16 %v1133, %v1125
        %v1334 = vpack.c.b16 %v1134, %v1126
        %v1335 = vpack.c.b16 %v1135, %v1127
        %v1336 = vpack.c.b16 %v1144, %v1136
        %v1337 = vpack.c.b16 %v1145, %v1137
        %v1338 = vpack.c.b16 %v1146, %v1138
        %v1339 = vpack.c.b16 %v1147, %v1139
        %v1340 = vpack.c.b16 %v1148, %v1140
        %v1341 = vpack.c.b16 %v1149, %v1141
        %v1342 = vpack.c.b16 %v1150, %v1142
        %v1343 = vpack.c.b16 %v1151, %v1143
        %1536 = vmatprep.subr.bf16.mxu0 %v1153
        %1537 = vmatpush1.bf16.msra.mxu0 %v1152
        %1538 = vmatprep.subr.bf16.mxu0 %v1161
        %1539 = vmatpush1.bf16.msra.mxu0 %v1160
        %1540 = vmatprep.subr.bf16.mxu0 %v1169
        %1541 = vmatpush1.bf16.msra.mxu0 %v1168
        %1542 = vmatprep.subr.bf16.mxu0 %v1177
        %1543 = vmatpush1.bf16.msra.mxu0 %v1176
        %1544 = vmatprep.subr.bf16.mxu0 %v1185
        %1545 = vmatpush1.bf16.msra.mxu0 %v1184
        %1546 = vmatprep.subr.bf16.mxu0 %v1193
        %1547 = vmatpush1.bf16.msra.mxu0 %v1192
        %1548 = vmatprep.subr.bf16.mxu0 %v1201
        %1549 = vmatpush1.bf16.msra.mxu0 %v1200
        %1550 = vmatprep.subr.bf16.mxu0 %v1209
        %1551 = vmatpush1.bf16.msra.mxu0 %v1208
        %1552 = vmatprep.subr.bf16.mxu0 %v1217
        %1553 = vmatpush1.bf16.msra.mxu0 %v1216
        %1554 = vmatprep.subr.bf16.mxu0 %v1225
        %1555 = vmatpush1.bf16.msra.mxu0 %v1224
        %1556 = vmatprep.subr.bf16.mxu0 %v1233
        %1557 = vmatpush1.bf16.msra.mxu0 %v1232
        %1558 = vmatprep.subr.bf16.mxu0 %v1241
        %1559 = vmatpush1.bf16.msra.mxu0 %v1240
        %1560 = vmatprep.subr.bf16.mxu0 %v1249
        %1561 = vmatpush1.bf16.msra.mxu0 %v1248
        %1562 = vmatprep.subr.bf16.mxu0 %v1257
        %1563 = vmatpush1.bf16.msra.mxu0 %v1256
        %1564 = vmatprep.subr.bf16.mxu0 %v1265
        %1565 = vmatpush1.bf16.msra.mxu0 %v1264
        %1566 = vmatprep.subr.bf16.mxu0 %v1273
        %1567 = vmatpush1.bf16.msra.mxu0 %v1272
        %1568 = vmatprep.mubr.bf16.mxu0 %v341
        %1569 = vmatmul.mubr.bf16.gmra.mrb[0].mxu0 %v340
        %v1570 = vpop.f32.mrb[0].mxu0
        %v1571 = vadd.f32 %v539, %v1570
        %v1572 = vpop.f32.mrb[0].mxu0
        %v1573 = vadd.f32 %v543, %v1572
        %v1574 = vpop.f32.mrb[0].mxu0
        %v1575 = vpop.f32.mrb[0].mxu0
        %1576 = vdwg.mxu0
        %1577 = vmatprep.subr.bf16.mxu0 %v1281
        %1578 = vmatpush1.bf16.msra.mxu0 %v1280
        %1579 = vmatprep.subr.bf16.mxu0 %v1289
        %1580 = vmatpush1.bf16.msra.mxu0 %v1288
        %1581 = vmatprep.subr.bf16.mxu0 %v1297
        %1582 = vmatpush1.bf16.msra.mxu0 %v1296
        %1583 = vmatprep.subr.bf16.mxu0 %v1305
        %1584 = vmatpush1.bf16.msra.mxu0 %v1304
        %1585 = vmatprep.subr.bf16.mxu0 %v1313
        %1586 = vmatpush1.bf16.msra.mxu0 %v1312
        %1587 = vmatprep.subr.bf16.mxu0 %v1321
        %1588 = vmatpush1.bf16.msra.mxu0 %v1320
        %1589 = vmatprep.subr.bf16.mxu0 %v1329
        %1590 = vmatpush1.bf16.msra.mxu0 %v1328
        %1591 = vmatprep.subr.bf16.mxu0 %v1337
        %1592 = vmatpush1.bf16.msra.mxu0 %v1336
        %1593 = vmatprep.subr.bf16.mxu0 0
        %1594 = vmatpush1.bf16.msra.mxu0 0
        %1595 = vmatprep.subr.bf16.mxu0 0
        %1596 = vmatpush1.bf16.msra.mxu0 0
        %1597 = vmatprep.subr.bf16.mxu0 0
        %1598 = vmatpush1.bf16.msra.mxu0 0
        %1599 = vmatprep.subr.bf16.mxu0 0
        %1600 = vmatpush1.bf16.msra.mxu0 0
        %1601 = vmatprep.subr.bf16.mxu0 0
        %1602 = vmatpush1.bf16.msra.mxu0 0
        %1603 = vmatprep.subr.bf16.mxu0 0
        %1604 = vmatpush1.bf16.msra.mxu0 0
        %1605 = vmatprep.subr.bf16.mxu0 0
        %1606 = vmatpush1.bf16.msra.mxu0 0
        %1607 = vmatprep.subr.bf16.mxu0 0
        %1608 = vmatpush1.bf16.msra.mxu0 0
        %1609 = vmatprep.mubr.bf16.mxu0 0
        %1610 = vmatmul.mubr.bf16.gmra.mrb[0].mxu0 %v342
        %v1611 = vpop.f32.mrb[0].mxu0
        %v1612 = vadd.f32 %v1571, %v1611
        %v1613 = vpop.f32.mrb[0].mxu0
        %v1614 = vadd.f32 %v1573, %v1613
        %v1615 = vpop.f32.mrb[0].mxu0
        %v1616 = vpop.f32.mrb[0].mxu0
        %1617 = vdwg.mxu0
        %1618 = vmatprep.subr.bf16.mxu0 %v1155
        %1619 = vmatpush1.bf16.msra.mxu0 %v1154
        %1620 = vmatprep.subr.bf16.mxu0 %v1163
        %1621 = vmatpush1.bf16.msra.mxu0 %v1162
        %1622 = vmatprep.subr.bf16.mxu0 %v1171
        %1623 = vmatpush1.bf16.msra.mxu0 %v1170
        %1624 = vmatprep.subr.bf16.mxu0 %v1179
        %1625 = vmatpush1.bf16.msra.mxu0 %v1178
        %1626 = vmatprep.subr.bf16.mxu0 %v1187
        %1627 = vmatpush1.bf16.msra.mxu0 %v1186
        %1628 = vmatprep.subr.bf16.mxu0 %v1195
        %1629 = vmatpush1.bf16.msra.mxu0 %v1194
        %1630 = vmatprep.subr.bf16.mxu0 %v1203
        %1631 = vmatpush1.bf16.msra.mxu0 %v1202
        %1632 = vmatprep.subr.bf16.mxu0 %v1211
        %1633 = vmatpush1.bf16.msra.mxu0 %v1210
        %1634 = vmatprep.subr.bf16.mxu0 %v1219
        %1635 = vmatpush1.bf16.msra.mxu0 %v1218
        %1636 = vmatprep.subr.bf16.mxu0 %v1227
        %1637 = vmatpush1.bf16.msra.mxu0 %v1226
        %1638 = vmatprep.subr.bf16.mxu0 %v1235
        %1639 = vmatpush1.bf16.msra.mxu0 %v1234
        %1640 = vmatprep.subr.bf16.mxu0 %v1243
        %1641 = vmatpush1.bf16.msra.mxu0 %v1242
        %1642 = vmatprep.subr.bf16.mxu0 %v1251
        %1643 = vmatpush1.bf16.msra.mxu0 %v1250
        %1644 = vmatprep.subr.bf16.mxu0 %v1259
        %1645 = vmatpush1.bf16.msra.mxu0 %v1258
        %1646 = vmatprep.subr.bf16.mxu0 %v1267
        %1647 = vmatpush1.bf16.msra.mxu0 %v1266
        %1648 = vmatprep.subr.bf16.mxu0 %v1275
        %1649 = vmatpush1.bf16.msra.mxu0 %v1274
        %1650 = vmatprep.mubr.bf16.mxu0 %v341
        %1651 = vmatmul.mubr.bf16.gmra.mrb[0].mxu0 %v340
        %v1652 = vpop.f32.mrb[0].mxu0
        %v1653 = vadd.f32 %v547, %v1652
        %v1654 = vpop.f32.mrb[0].mxu0
        %v1655 = vadd.f32 %v551, %v1654
        %v1656 = vpop.f32.mrb[0].mxu0
        %v1657 = vpop.f32.mrb[0].mxu0
        %1658 = vdwg.mxu0
        %1659 = vmatprep.subr.bf16.mxu0 %v1283
        %1660 = vmatpush1.bf16.msra.mxu0 %v1282
        %1661 = vmatprep.subr.bf16.mxu0 %v1291
        %1662 = vmatpush1.bf16.msra.mxu0 %v1290
        %1663 = vmatprep.subr.bf16.mxu0 %v1299
        %1664 = vmatpush1.bf16.msra.mxu0 %v1298
        %1665 = vmatprep.subr.bf16.mxu0 %v1307
        %1666 = vmatpush1.bf16.msra.mxu0 %v1306
        %1667 = vmatprep.subr.bf16.mxu0 %v1315
        %1668 = vmatpush1.bf16.msra.mxu0 %v1314
        %1669 = vmatprep.subr.bf16.mxu0 %v1323
        %1670 = vmatpush1.bf16.msra.mxu0 %v1322
        %1671 = vmatprep.subr.bf16.mxu0 %v1331
        %1672 = vmatpush1.bf16.msra.mxu0 %v1330
        %1673 = vmatprep.subr.bf16.mxu0 %v1339
        %1674 = vmatpush1.bf16.msra.mxu0 %v1338
        %1675 = vmatprep.subr.bf16.mxu0 0
        %1676 = vmatpush1.bf16.msra.mxu0 0
        %1677 = vmatprep.subr.bf16.mxu0 0
        %1678 = vmatpush1.bf16.msra.mxu0 0
        %1679 = vmatprep.subr.bf16.mxu0 0
        %1680 = vmatpush1.bf16.msra.mxu0 0
        %1681 = vmatprep.subr.bf16.mxu0 0
        %1682 = vmatpush1.bf16.msra.mxu0 0
        %1683 = vmatprep.subr.bf16.mxu0 0
        %1684 = vmatpush1.bf16.msra.mxu0 0
        %1685 = vmatprep.subr.bf16.mxu0 0
        %1686 = vmatpush1.bf16.msra.mxu0 0
        %1687 = vmatprep.subr.bf16.mxu0 0
        %1688 = vmatpush1.bf16.msra.mxu0 0
        %1689 = vmatprep.subr.bf16.mxu0 0
        %1690 = vmatpush1.bf16.msra.mxu0 0
        %1691 = vmatprep.mubr.bf16.mxu0 0
        %1692 = vmatmul.mubr.bf16.gmra.mrb[0].mxu0 %v342
        %v1693 = vpop.f32.mrb[0].mxu0
        %v1694 = vadd.f32 %v1653, %v1693
        %v1695 = vpop.f32.mrb[0].mxu0
        %v1696 = vadd.f32 %v1655, %v1695
        %v1697 = vpop.f32.mrb[0].mxu0
        %v1698 = vpop.f32.mrb[0].mxu0
        %1699 = vdwg.mxu0
        %1700 = vmatprep.subr.bf16.mxu0 %v1157
        %1701 = vmatpush1.bf16.msra.mxu0 %v1156
        %1702 = vmatprep.subr.bf16.mxu0 %v1165
        %1703 = vmatpush1.bf16.msra.mxu0 %v1164
        %1704 = vmatprep.subr.bf16.mxu0 %v1173
        %1705 = vmatpush1.bf16.msra.mxu0 %v1172
        %1706 = vmatprep.subr.bf16.mxu0 %v1181
        %1707 = vmatpush1.bf16.msra.mxu0 %v1180
        %1708 = vmatprep.subr.bf16.mxu0 %v1189
        %1709 = vmatpush1.bf16.msra.mxu0 %v1188
        %1710 = vmatprep.subr.bf16.mxu0 %v1197
        %1711 = vmatpush1.bf16.msra.mxu0 %v1196
        %1712 = vmatprep.subr.bf16.mxu0 %v1205
        %1713 = vmatpush1.bf16.msra.mxu0 %v1204
        %1714 = vmatprep.subr.bf16.mxu0 %v1213
        %1715 = vmatpush1.bf16.msra.mxu0 %v1212
        %1716 = vmatprep.subr.bf16.mxu0 %v1221
        %1717 = vmatpush1.bf16.msra.mxu0 %v1220
        %1718 = vmatprep.subr.bf16.mxu0 %v1229
        %1719 = vmatpush1.bf16.msra.mxu0 %v1228
        %1720 = vmatprep.subr.bf16.mxu0 %v1237
        %1721 = vmatpush1.bf16.msra.mxu0 %v1236
        %1722 = vmatprep.subr.bf16.mxu0 %v1245
        %1723 = vmatpush1.bf16.msra.mxu0 %v1244
        %1724 = vmatprep.subr.bf16.mxu0 %v1253
        %1725 = vmatpush1.bf16.msra.mxu0 %v1252
        %1726 = vmatprep.subr.bf16.mxu0 %v1261
        %1727 = vmatpush1.bf16.msra.mxu0 %v1260
        %1728 = vmatprep.subr.bf16.mxu0 %v1269
        %1729 = vmatpush1.bf16.msra.mxu0 %v1268
        %1730 = vmatprep.subr.bf16.mxu0 %v1277
        %1731 = vmatpush1.bf16.msra.mxu0 %v1276
        %1732 = vmatprep.mubr.bf16.mxu0 %v341
        %1733 = vmatmul.mubr.bf16.gmra.mrb[0].mxu0 %v340
        %v1734 = vpop.f32.mrb[0].mxu0
        %v1735 = vadd.f32 %v555, %v1734
        %v1736 = vpop.f32.mrb[0].mxu0
        %v1737 = vadd.f32 %v559, %v1736
        %v1738 = vpop.f32.mrb[0].mxu0
        %v1739 = vpop.f32.mrb[0].mxu0
        %1740 = vdwg.mxu0
        %1741 = vmatprep.subr.bf16.mxu0 %v1285
        %1742 = vmatpush1.bf16.msra.mxu0 %v1284
        %1743 = vmatprep.subr.bf16.mxu0 %v1293
        %1744 = vmatpush1.bf16.msra.mxu0 %v1292
        %1745 = vmatprep.subr.bf16.mxu0 %v1301
        %1746 = vmatpush1.bf16.msra.mxu0 %v1300
        %1747 = vmatprep.subr.bf16.mxu0 %v1309
        %1748 = vmatpush1.bf16.msra.mxu0 %v1308
        %1749 = vmatprep.subr.bf16.mxu0 %v1317
        %1750 = vmatpush1.bf16.msra.mxu0 %v1316
        %1751 = vmatprep.subr.bf16.mxu0 %v1325
        %1752 = vmatpush1.bf16.msra.mxu0 %v1324
        %1753 = vmatprep.subr.bf16.mxu0 %v1333
        %1754 = vmatpush1.bf16.msra.mxu0 %v1332
        %1755 = vmatprep.subr.bf16.mxu0 %v1341
        %1756 = vmatpush1.bf16.msra.mxu0 %v1340
        %1757 = vmatprep.subr.bf16.mxu0 0
        %1758 = vmatpush1.bf16.msra.mxu0 0
        %1759 = vmatprep.subr.bf16.mxu0 0
        %1760 = vmatpush1.bf16.msra.mxu0 0
        %1761 = vmatprep.subr.bf16.mxu0 0
        %1762 = vmatpush1.bf16.msra.mxu0 0
        %1763 = vmatprep.subr.bf16.mxu0 0
        %1764 = vmatpush1.bf16.msra.mxu0 0
        %1765 = vmatprep.subr.bf16.mxu0 0
        %1766 = vmatpush1.bf16.msra.mxu0 0
        %1767 = vmatprep.subr.bf16.mxu0 0
        %1768 = vmatpush1.bf16.msra.mxu0 0
        %1769 = vmatprep.subr.bf16.mxu0 0
        %1770 = vmatpush1.bf16.msra.mxu0 0
        %1771 = vmatprep.subr.bf16.mxu0 0
        %1772 = vmatpush1.bf16.msra.mxu0 0
        %1773 = vmatprep.mubr.bf16.mxu0 0
        %1774 = vmatmul.mubr.bf16.gmra.mrb[0].mxu0 %v342
        %v1775 = vpop.f32.mrb[0].mxu0
        %v1776 = vadd.f32 %v1735, %v1775
        %v1777 = vpop.f32.mrb[0].mxu0
        %v1778 = vadd.f32 %v1737, %v1777
        %v1779 = vpop.f32.mrb[0].mxu0
        %v1780 = vpop.f32.mrb[0].mxu0
        %1781 = vdwg.mxu0
        %1782 = vmatprep.subr.bf16.mxu0 %v1159
        %1783 = vmatpush1.bf16.msra.mxu0 %v1158
        %1784 = vmatprep.subr.bf16.mxu0 %v1167
        %1785 = vmatpush1.bf16.msra.mxu0 %v1166
        %1786 = vmatprep.subr.bf16.mxu0 %v1175
        %1787 = vmatpush1.bf16.msra.mxu0 %v1174
        %1788 = vmatprep.subr.bf16.mxu0 %v1183
        %1789 = vmatpush1.bf16.msra.mxu0 %v1182
        %1790 = vmatprep.subr.bf16.mxu0 %v1191
        %1791 = vmatpush1.bf16.msra.mxu0 %v1190
        %1792 = vmatprep.subr.bf16.mxu0 %v1199
        %1793 = vmatpush1.bf16.msra.mxu0 %v1198
        %1794 = vmatprep.subr.bf16.mxu0 %v1207
        %1795 = vmatpush1.bf16.msra.mxu0 %v1206
        %1796 = vmatprep.subr.bf16.mxu0 %v1215
        %1797 = vmatpush1.bf16.msra.mxu0 %v1214
        %1798 = vmatprep.subr.bf16.mxu0 %v1223
        %1799 = vmatpush1.bf16.msra.mxu0 %v1222
        %1800 = vmatprep.subr.bf16.mxu0 %v1231
        %1801 = vmatpush1.bf16.msra.mxu0 %v1230
        %1802 = vmatprep.subr.bf16.mxu0 %v1239
        %1803 = vmatpush1.bf16.msra.mxu0 %v1238
        %1804 = vmatprep.subr.bf16.mxu0 %v1247
        %1805 = vmatpush1.bf16.msra.mxu0 %v1246
        %1806 = vmatprep.subr.bf16.mxu0 %v1255
        %1807 = vmatpush1.bf16.msra.mxu0 %v1254
        %1808 = vmatprep.subr.bf16.mxu0 %v1263
        %1809 = vmatpush1.bf16.msra.mxu0 %v1262
        %1810 = vmatprep.subr.bf16.mxu0 %v1271
        %1811 = vmatpush1.bf16.msra.mxu0 %v1270
        %1812 = vmatprep.subr.bf16.mxu0 %v1279
        %1813 = vmatpush1.bf16.msra.mxu0 %v1278
        %1814 = vmatprep.mubr.bf16.mxu0 %v341
        %1815 = vmatmul.mubr.bf16.gmra.mrb[0].mxu0 %v340
        %v1816 = vpop.f32.mrb[0].mxu0
        %v1817 = vadd.f32 %v563, %v1816
        %v1818 = vpop.f32.mrb[0].mxu0
        %v1819 = vadd.f32 %v567, %v1818
        %v1820 = vpop.f32.mrb[0].mxu0
        %v1821 = vpop.f32.mrb[0].mxu0
        %1822 = vdwg.mxu0
        %1823 = vmatprep.subr.bf16.mxu0 %v1287
        %1824 = vmatpush1.bf16.msra.mxu0 %v1286
        %1825 = vmatprep.subr.bf16.mxu0 %v1295
        %1826 = vmatpush1.bf16.msra.mxu0 %v1294
        %1827 = vmatprep.subr.bf16.mxu0 %v1303
        %1828 = vmatpush1.bf16.msra.mxu0 %v1302
        %1829 = vmatprep.subr.bf16.mxu0 %v1311
        %1830 = vmatpush1.bf16.msra.mxu0 %v1310
        %1831 = vmatprep.subr.bf16.mxu0 %v1319
        %1832 = vmatpush1.bf16.msra.mxu0 %v1318
        %1833 = vmatprep.subr.bf16.mxu0 %v1327
        %1834 = vmatpush1.bf16.msra.mxu0 %v1326
        %1835 = vmatprep.subr.bf16.mxu0 %v1335
        %1836 = vmatpush1.bf16.msra.mxu0 %v1334
        %1837 = vmatprep.subr.bf16.mxu0 %v1343
        %1838 = vmatpush1.bf16.msra.mxu0 %v1342
        %1839 = vmatprep.subr.bf16.mxu0 0
        %1840 = vmatpush1.bf16.msra.mxu0 0
        %1841 = vmatprep.subr.bf16.mxu0 0
        %1842 = vmatpush1.bf16.msra.mxu0 0
        %1843 = vmatprep.subr.bf16.mxu0 0
        %1844 = vmatpush1.bf16.msra.mxu0 0
        %1845 = vmatprep.subr.bf16.mxu0 0
        %1846 = vmatpush1.bf16.msra.mxu0 0
        %1847 = vmatprep.subr.bf16.mxu0 0
        %1848 = vmatpush1.bf16.msra.mxu0 0
        %1849 = vmatprep.subr.bf16.mxu0 0
        %1850 = vmatpush1.bf16.msra.mxu0 0
        %1851 = vmatprep.subr.bf16.mxu0 0
        %1852 = vmatpush1.bf16.msra.mxu0 0
        %1853 = vmatprep.subr.bf16.mxu0 0
        %1854 = vmatpush1.bf16.msra.mxu0 0
        %1855 = vmatprep.mubr.bf16.mxu0 0
        %1856 = vmatmul.mubr.bf16.gmra.mrb[0].mxu0 %v342
        %v1857 = vpop.f32.mrb[0].mxu0
        %v1858 = vadd.f32 %v1817, %v1857
        %v1859 = vpop.f32.mrb[0].mxu0
        %v1860 = vadd.f32 %v1819, %v1859
        %v1861 = vpop.f32.mrb[0].mxu0
        %v1862 = vpop.f32.mrb[0].mxu0
        %1863 = vdwg.mxu0
        %v1864 = vxor.u32 %v1612, 2147483648
        %v1865 = vxor.u32 %v1614, 2147483648
        %v1866 = vmul.f32 %v1864, 1.442695
        %v1867 = vpow.pop %v1866
        %v1868 = vmul.f32 %v1865, 1.442695
        %v1869 = vpow.pop %v1868
        %v1870 = vadd.f32 %v1867, 1.0
        %v1871 = vadd.f32 %v1869, 1.0
        %v1872 = vrcp.pop %v1870
        %v1873 = vmul.f32 1.0, %v1872
        %v1874 = vrcp.pop %v1871
        %v1875 = vmul.f32 1.0, %v1874
        %v1876 = vxor.u32 %v1694, 2147483648
        %v1877 = vxor.u32 %v1696, 2147483648
        %v1878 = vmul.f32 %v1876, 1.442695
        %v1879 = vpow.pop %v1878
        %v1880 = vmul.f32 %v1877, 1.442695
        %v1881 = vpow.pop %v1880
        %v1882 = vadd.f32 %v1879, 1.0
        %v1883 = vadd.f32 %v1881, 1.0
        %v1884 = vrcp.pop %v1882
        %v1885 = vmul.f32 1.0, %v1884
        %v1886 = vrcp.pop %v1883
        %v1887 = vmul.f32 1.0, %v1886
        %v1888 = vxor.u32 %v1776, 2147483648
        %v1889 = vxor.u32 %v1778, 2147483648
        %v1890 = vmul.f32 %v1888, 1.442695
        %v1891 = vpow.pop %v1890
        %v1892 = vmul.f32 %v1889, 1.442695
        %v1893 = vpow.pop %v1892
        %v1894 = vadd.f32 %v1891, 1.0
        %v1895 = vadd.f32 %v1893, 1.0
        %v1896 = vrcp.pop %v1894
        %v1897 = vmul.f32 1.0, %v1896
        %v1898 = vrcp.pop %v1895
        %v1899 = vmul.f32 1.0, %v1898
        %v1900 = vtanh.pop %v1858
        %v1901 = vtanh.pop %v1860
        %v1904 = vunpack.c.l.s4 1983009808
        %v1905 = vunpack.c.0.s8 %v1904
        %v1906 = vlaneseq
        %v1907 = vshrl.u32 %v1906, 7
        %v1908 = vsub.s32 %v1905, %v1907
        %v1909 = vrot.slane %v324, %v1908
        %v1910 = vcombine.high %v1909, %v1909
        %v1913 = vmul.f32 %v1885, %v1909
        %v1914 = vmul.f32 %v1887, %v1910
        %v1915 = vmul.f32 %v1873, %v1900
        %v1916 = vmul.f32 %v1875, %v1901
        %v1917 = vadd.f32 %v1913, %v1915
        %v1918 = vadd.f32 %v1914, %v1916
        %v1919 = vtanh.pop %v1917
        %v1920 = vtanh.pop %v1918
        %v1921 = vmul.f32 %v1897, %v1919
        %v1922 = vmul.f32 %v1899, %v1920
        %v1925 = vunpack.c.l.s4 1983009808
        %v1926 = vunpack.c.0.s8 %v1925
        %v1927 = vlaneseq
        %v1928 = vshrl.u32 %v1927, 7
        %v1929 = vsub.s32 %v1926, %v1928
        %v1930 = vrot.slane %v325, %v1929
        %v1931 = vcombine.high %v1930, %v1930
        %s1934 = scalar_lea.vmem [#allocation4], 1
        %v1935 = vld [vmem:[%s1934] ss:$2 sm:$0xff]
        %v1936 = vpack.c.bf16 %v1921, %v1921
        %v1937 = vpack.c.bf16 %v1922, %v1922
        %v1938 = vpack.c.bf16 %v1930, %v1930
        %v1939 = vpack.c.bf16 %v1931, %v1931
        %v1940 = vld [vmem:[#allocation6] sm:$0xff]
        %v1941 = vld [vmem:[#allocation6 + $0x8] sm:$0xff]
        %v1942 = vld [vmem:[#allocation6 + $0x10] sm:$0xff]
        %v1943 = vld [vmem:[#allocation6 + $0x18] sm:$0xff]
        %v1944 = vld [vmem:[#allocation6 + $0x20] sm:$0xff]
        %v1945 = vld [vmem:[#allocation6 + $0x28] sm:$0xff]
        %v1946 = vld [vmem:[#allocation6 + $0x30] sm:$0xff]
        %v1947 = vld [vmem:[#allocation6 + $0x38] sm:$0xff]
        %v1948 = vld [vmem:[#allocation6 + $0x40] sm:$0xff]
        %v1949 = vld [vmem:[#allocation6 + $0x48] sm:$0xff]
        %v1950 = vld [vmem:[#allocation6 + $0x50] sm:$0xff]
        %v1951 = vld [vmem:[#allocation6 + $0x58] sm:$0xff]
        %v1952 = vld [vmem:[#allocation6 + $0x60] sm:$0xff]
        %v1953 = vld [vmem:[#allocation6 + $0x68] sm:$0xff]
        %v1954 = vld [vmem:[#allocation6 + $0x70] sm:$0xff]
        %v1955 = vld [vmem:[#allocation6 + $0x78] sm:$0xff]
        %v1956 = vld [vmem:[#allocation6 + $0x80] sm:$0xff]
        %v1957 = vld [vmem:[#allocation6 + $0x88] sm:$0xff]
        %v1958 = vld [vmem:[#allocation6 + $0x90] sm:$0xff]
        %v1959 = vld [vmem:[#allocation6 + $0x98] sm:$0xff]
        %v1960 = vld [vmem:[#allocation6 + $0xa0] sm:$0xff]
        %v1961 = vld [vmem:[#allocation6 + $0xa8] sm:$0xff]
        %v1962 = vld [vmem:[#allocation6 + $0xb0] sm:$0xff]
        %v1963 = vld [vmem:[#allocation6 + $0xb8] sm:$0xff]
        %v1964 = vld [vmem:[#allocation6 + $0xc0] sm:$0xff]
        %v1965 = vld [vmem:[#allocation6 + $0xc8] sm:$0xff]
        %v1966 = vld [vmem:[#allocation6 + $0xd0] sm:$0xff]
        %v1967 = vld [vmem:[#allocation6 + $0xd8] sm:$0xff]
        %v1968 = vld [vmem:[#allocation6 + $0xe0] sm:$0xff]
        %v1969 = vld [vmem:[#allocation6 + $0xe8] sm:$0xff]
        %v1970 = vld [vmem:[#allocation6 + $0xf0] sm:$0xff]
        %v1971 = vld [vmem:[#allocation6 + $0xf8] sm:$0xff]
        %v1972 = vld [vmem:[#allocation6 + $0x100] sm:$0xff]
        %v1973 = vld [vmem:[#allocation6 + $0x108] sm:$0xff]
        %v1974 = vld [vmem:[#allocation6 + $0x110] sm:$0xff]
        %v1975 = vld [vmem:[#allocation6 + $0x118] sm:$0xff]
        %v1976 = vld [vmem:[#allocation6 + $0x120] sm:$0xff]
        %v1977 = vld [vmem:[#allocation6 + $0x128] sm:$0xff]
        %v1978 = vld [vmem:[#allocation6 + $0x130] sm:$0xff]
        %v1979 = vld [vmem:[#allocation6 + $0x138] sm:$0xff]
        %v1980 = vld [vmem:[#allocation6 + $0x140] sm:$0xff]
        %v1981 = vld [vmem:[#allocation6 + $0x148] sm:$0xff]
        %v1982 = vld [vmem:[#allocation6 + $0x150] sm:$0xff]
        %v1983 = vld [vmem:[#allocation6 + $0x158] sm:$0xff]
        %v1984 = vld [vmem:[#allocation6 + $0x160] sm:$0xff]
        %v1985 = vld [vmem:[#allocation6 + $0x168] sm:$0xff]
        %v1986 = vld [vmem:[#allocation6 + $0x170] sm:$0xff]
        %v1987 = vld [vmem:[#allocation6 + $0x178] sm:$0xff]
        %v1988 = vld [vmem:[#allocation6 + $0x180] sm:$0xff]
        %v1989 = vld [vmem:[#allocation6 + $0x188] sm:$0xff]
        %v1990 = vld [vmem:[#allocation6 + $0x190] sm:$0xff]
        %v1991 = vld [vmem:[#allocation6 + $0x198] sm:$0xff]
        %v1992 = vld [vmem:[#allocation6 + $0x1a0] sm:$0xff]
        %v1993 = vld [vmem:[#allocation6 + $0x1a8] sm:$0xff]
        %v1994 = vld [vmem:[#allocation6 + $0x1b0] sm:$0xff]
        %v1995 = vld [vmem:[#allocation6 + $0x1b8] sm:$0xff]
        %v1996 = vld [vmem:[#allocation6 + $0x1c0] sm:$0xff]
        %v1997 = vld [vmem:[#allocation6 + $0x1c8] sm:$0xff]
        %v1998 = vld [vmem:[#allocation6 + $0x1d0] sm:$0xff]
        %v1999 = vld [vmem:[#allocation6 + $0x1d8] sm:$0xff]
        %v2000 = vld [vmem:[#allocation6 + $0x1e0] sm:$0xff]
        %v2001 = vld [vmem:[#allocation6 + $0x1e8] sm:$0xff]
        %v2002 = vld [vmem:[#allocation6 + $0x1f0] sm:$0xff]
        %v2003 = vld [vmem:[#allocation6 + $0x1f8] sm:$0xff]
        %v2004 = vld [vmem:[#allocation6 + $0x200] sm:$0xff]
        %v2005 = vld [vmem:[#allocation6 + $0x208] sm:$0xff]
        %v2006 = vld [vmem:[#allocation6 + $0x210] sm:$0xff]
        %v2007 = vld [vmem:[#allocation6 + $0x218] sm:$0xff]
        %v2008 = vld [vmem:[#allocation6 + $0x220] sm:$0xff]
        %v2009 = vld [vmem:[#allocation6 + $0x228] sm:$0xff]
        %v2010 = vld [vmem:[#allocation6 + $0x230] sm:$0xff]
        %v2011 = vld [vmem:[#allocation6 + $0x238] sm:$0xff]
        %v2012 = vld [vmem:[#allocation6 + $0x240] sm:$0xff]
        %v2013 = vld [vmem:[#allocation6 + $0x248] sm:$0xff]
        %v2014 = vld [vmem:[#allocation6 + $0x250] sm:$0xff]
        %v2015 = vld [vmem:[#allocation6 + $0x258] sm:$0xff]
        %v2016 = vld [vmem:[#allocation6 + $0x260] sm:$0xff]
        %v2017 = vld [vmem:[#allocation6 + $0x268] sm:$0xff]
        %v2018 = vld [vmem:[#allocation6 + $0x270] sm:$0xff]
        %v2019 = vld [vmem:[#allocation6 + $0x278] sm:$0xff]
        %v2020 = vld [vmem:[#allocation6 + $0x280] sm:$0xff]
        %v2021 = vld [vmem:[#allocation6 + $0x288] sm:$0xff]
        %v2022 = vld [vmem:[#allocation6 + $0x290] sm:$0xff]
        %v2023 = vld [vmem:[#allocation6 + $0x298] sm:$0xff]
        %v2024 = vld [vmem:[#allocation6 + $0x2a0] sm:$0xff]
        %v2025 = vld [vmem:[#allocation6 + $0x2a8] sm:$0xff]
        %v2026 = vld [vmem:[#allocation6 + $0x2b0] sm:$0xff]
        %v2027 = vld [vmem:[#allocation6 + $0x2b8] sm:$0xff]
        %v2028 = vld [vmem:[#allocation6 + $0x2c0] sm:$0xff]
        %v2029 = vld [vmem:[#allocation6 + $0x2c8] sm:$0xff]
        %v2030 = vld [vmem:[#allocation6 + $0x2d0] sm:$0xff]
        %v2031 = vld [vmem:[#allocation6 + $0x2d8] sm:$0xff]
        %v2032 = vld [vmem:[#allocation6 + $0x2e0] sm:$0xff]
        %v2033 = vld [vmem:[#allocation6 + $0x2e8] sm:$0xff]
        %v2034 = vld [vmem:[#allocation6 + $0x2f0] sm:$0xff]
        %v2035 = vld [vmem:[#allocation6 + $0x2f8] sm:$0xff]
        %v2036 = vld [vmem:[#allocation6 + $0x300] sm:$0xff]
        %v2037 = vld [vmem:[#allocation6 + $0x308] sm:$0xff]
        %v2038 = vld [vmem:[#allocation6 + $0x310] sm:$0xff]
        %v2039 = vld [vmem:[#allocation6 + $0x318] sm:$0xff]
        %v2040 = vld [vmem:[#allocation6 + $0x320] sm:$0xff]
        %v2041 = vld [vmem:[#allocation6 + $0x328] sm:$0xff]
        %v2042 = vld [vmem:[#allocation6 + $0x330] sm:$0xff]
        %v2043 = vld [vmem:[#allocation6 + $0x338] sm:$0xff]
        %v2044 = vld [vmem:[#allocation6 + $0x340] sm:$0xff]
        %v2045 = vld [vmem:[#allocation6 + $0x348] sm:$0xff]
        %v2046 = vld [vmem:[#allocation6 + $0x350] sm:$0xff]
        %v2047 = vld [vmem:[#allocation6 + $0x358] sm:$0xff]
        %v2048 = vld [vmem:[#allocation6 + $0x360] sm:$0xff]
        %v2049 = vld [vmem:[#allocation6 + $0x368] sm:$0xff]
        %v2050 = vld [vmem:[#allocation6 + $0x370] sm:$0xff]
        %v2051 = vld [vmem:[#allocation6 + $0x378] sm:$0xff]
        %v2052 = vld [vmem:[#allocation6 + $0x380] sm:$0xff]
        %v2053 = vld [vmem:[#allocation6 + $0x388] sm:$0xff]
        %v2054 = vld [vmem:[#allocation6 + $0x390] sm:$0xff]
        %v2055 = vld [vmem:[#allocation6 + $0x398] sm:$0xff]
        %v2056 = vld [vmem:[#allocation6 + $0x3a0] sm:$0xff]
        %v2057 = vld [vmem:[#allocation6 + $0x3a8] sm:$0xff]
        %v2058 = vld [vmem:[#allocation6 + $0x3b0] sm:$0xff]
        %v2059 = vld [vmem:[#allocation6 + $0x3b8] sm:$0xff]
        %v2060 = vld [vmem:[#allocation6 + $0x3c0] sm:$0xff]
        %v2061 = vld [vmem:[#allocation6 + $0x3c8] sm:$0xff]
        %v2062 = vld [vmem:[#allocation6 + $0x3d0] sm:$0xff]
        %v2063 = vld [vmem:[#allocation6 + $0x3d8] sm:$0xff]
        %v2064 = vld [vmem:[#allocation6 + $0x3e0] sm:$0xff]
        %v2065 = vld [vmem:[#allocation6 + $0x3e8] sm:$0xff]
        %v2066 = vld [vmem:[#allocation6 + $0x3f0] sm:$0xff]
        %v2067 = vld [vmem:[#allocation6 + $0x3f8] sm:$0xff]
        %v2068 = vld [vmem:[#allocation6 + $0x400] sm:$0xff]
        %v2069 = vld [vmem:[#allocation6 + $0x408] sm:$0xff]
        %v2070 = vld [vmem:[#allocation6 + $0x410] sm:$0xff]
        %v2071 = vld [vmem:[#allocation6 + $0x418] sm:$0xff]
        %v2072 = vld [vmem:[#allocation6 + $0x420] sm:$0xff]
        %v2073 = vld [vmem:[#allocation6 + $0x428] sm:$0xff]
        %v2074 = vld [vmem:[#allocation6 + $0x430] sm:$0xff]
        %v2075 = vld [vmem:[#allocation6 + $0x438] sm:$0xff]
        %v2076 = vld [vmem:[#allocation6 + $0x440] sm:$0xff]
        %v2077 = vld [vmem:[#allocation6 + $0x448] sm:$0xff]
        %v2078 = vld [vmem:[#allocation6 + $0x450] sm:$0xff]
        %v2079 = vld [vmem:[#allocation6 + $0x458] sm:$0xff]
        %v2080 = vld [vmem:[#allocation6 + $0x460] sm:$0xff]
        %v2081 = vld [vmem:[#allocation6 + $0x468] sm:$0xff]
        %v2082 = vld [vmem:[#allocation6 + $0x470] sm:$0xff]
        %v2083 = vld [vmem:[#allocation6 + $0x478] sm:$0xff]
        %v2084 = vld [vmem:[#allocation6 + $0x480] sm:$0xff]
        %v2085 = vld [vmem:[#allocation6 + $0x488] sm:$0xff]
        %v2086 = vld [vmem:[#allocation6 + $0x490] sm:$0xff]
        %v2087 = vld [vmem:[#allocation6 + $0x498] sm:$0xff]
        %v2088 = vld [vmem:[#allocation6 + $0x4a0] sm:$0xff]
        %v2089 = vld [vmem:[#allocation6 + $0x4a8] sm:$0xff]
        %v2090 = vld [vmem:[#allocation6 + $0x4b0] sm:$0xff]
        %v2091 = vld [vmem:[#allocation6 + $0x4b8] sm:$0xff]
        %v2092 = vld [vmem:[#allocation6 + $0x4c0] sm:$0xff]
        %v2093 = vld [vmem:[#allocation6 + $0x4c8] sm:$0xff]
        %v2094 = vld [vmem:[#allocation6 + $0x4d0] sm:$0xff]
        %v2095 = vld [vmem:[#allocation6 + $0x4d8] sm:$0xff]
        %v2096 = vld [vmem:[#allocation6 + $0x4e0] sm:$0xff]
        %v2097 = vld [vmem:[#allocation6 + $0x4e8] sm:$0xff]
        %v2098 = vld [vmem:[#allocation6 + $0x4f0] sm:$0xff]
        %v2099 = vld [vmem:[#allocation6 + $0x4f8] sm:$0xff]
        %v2100 = vld [vmem:[#allocation6 + $0x500] sm:$0xff]
        %v2101 = vld [vmem:[#allocation6 + $0x508] sm:$0xff]
        %v2102 = vld [vmem:[#allocation6 + $0x510] sm:$0xff]
        %v2103 = vld [vmem:[#allocation6 + $0x518] sm:$0xff]
        %v2104 = vld [vmem:[#allocation6 + $0x520] sm:$0xff]
        %v2105 = vld [vmem:[#allocation6 + $0x528] sm:$0xff]
        %v2106 = vld [vmem:[#allocation6 + $0x530] sm:$0xff]
        %v2107 = vld [vmem:[#allocation6 + $0x538] sm:$0xff]
        %v2108 = vld [vmem:[#allocation6 + $0x540] sm:$0xff]
        %v2109 = vld [vmem:[#allocation6 + $0x548] sm:$0xff]
        %v2110 = vld [vmem:[#allocation6 + $0x550] sm:$0xff]
        %v2111 = vld [vmem:[#allocation6 + $0x558] sm:$0xff]
        %v2112 = vld [vmem:[#allocation6 + $0x560] sm:$0xff]
        %v2113 = vld [vmem:[#allocation6 + $0x568] sm:$0xff]
        %v2114 = vld [vmem:[#allocation6 + $0x570] sm:$0xff]
        %v2115 = vld [vmem:[#allocation6 + $0x578] sm:$0xff]
        %v2116 = vld [vmem:[#allocation6 + $0x580] sm:$0xff]
        %v2117 = vld [vmem:[#allocation6 + $0x588] sm:$0xff]
        %v2118 = vld [vmem:[#allocation6 + $0x590] sm:$0xff]
        %v2119 = vld [vmem:[#allocation6 + $0x598] sm:$0xff]
        %v2120 = vld [vmem:[#allocation6 + $0x5a0] sm:$0xff]
        %v2121 = vld [vmem:[#allocation6 + $0x5a8] sm:$0xff]
        %v2122 = vld [vmem:[#allocation6 + $0x5b0] sm:$0xff]
        %v2123 = vld [vmem:[#allocation6 + $0x5b8] sm:$0xff]
        %v2124 = vld [vmem:[#allocation6 + $0x5c0] sm:$0xff]
        %v2125 = vld [vmem:[#allocation6 + $0x5c8] sm:$0xff]
        %v2126 = vld [vmem:[#allocation6 + $0x5d0] sm:$0xff]
        %v2127 = vld [vmem:[#allocation6 + $0x5d8] sm:$0xff]
        %v2128 = vld [vmem:[#allocation6 + $0x5e0] sm:$0xff]
        %v2129 = vld [vmem:[#allocation6 + $0x5e8] sm:$0xff]
        %v2130 = vld [vmem:[#allocation6 + $0x5f0] sm:$0xff]
        %v2131 = vld [vmem:[#allocation6 + $0x5f8] sm:$0xff]
        %v2132 = vld [vmem:[#allocation6 + $0x600] sm:$0xff]
        %v2133 = vld [vmem:[#allocation6 + $0x608] sm:$0xff]
        %v2134 = vld [vmem:[#allocation6 + $0x610] sm:$0xff]
        %v2135 = vld [vmem:[#allocation6 + $0x618] sm:$0xff]
        %v2136 = vld [vmem:[#allocation6 + $0x620] sm:$0xff]
        %v2137 = vld [vmem:[#allocation6 + $0x628] sm:$0xff]
        %v2138 = vld [vmem:[#allocation6 + $0x630] sm:$0xff]
        %v2139 = vld [vmem:[#allocation6 + $0x638] sm:$0xff]
        %v2140 = vld [vmem:[#allocation6 + $0x640] sm:$0xff]
        %v2141 = vld [vmem:[#allocation6 + $0x648] sm:$0xff]
        %v2142 = vld [vmem:[#allocation6 + $0x650] sm:$0xff]
        %v2143 = vld [vmem:[#allocation6 + $0x658] sm:$0xff]
        %v2144 = vld [vmem:[#allocation6 + $0x660] sm:$0xff]
        %v2145 = vld [vmem:[#allocation6 + $0x668] sm:$0xff]
        %v2146 = vld [vmem:[#allocation6 + $0x670] sm:$0xff]
        %v2147 = vld [vmem:[#allocation6 + $0x678] sm:$0xff]
        %v2148 = vld [vmem:[#allocation6 + $0x680] sm:$0xff]
        %v2149 = vld [vmem:[#allocation6 + $0x688] sm:$0xff]
        %v2150 = vld [vmem:[#allocation6 + $0x690] sm:$0xff]
        %v2151 = vld [vmem:[#allocation6 + $0x698] sm:$0xff]
        %v2152 = vld [vmem:[#allocation6 + $0x6a0] sm:$0xff]
        %v2153 = vld [vmem:[#allocation6 + $0x6a8] sm:$0xff]
        %v2154 = vld [vmem:[#allocation6 + $0x6b0] sm:$0xff]
        %v2155 = vld [vmem:[#allocation6 + $0x6b8] sm:$0xff]
        %v2156 = vld [vmem:[#allocation6 + $0x6c0] sm:$0xff]
        %v2157 = vld [vmem:[#allocation6 + $0x6c8] sm:$0xff]
        %v2158 = vld [vmem:[#allocation6 + $0x6d0] sm:$0xff]
        %v2159 = vld [vmem:[#allocation6 + $0x6d8] sm:$0xff]
        %v2160 = vld [vmem:[#allocation6 + $0x6e0] sm:$0xff]
        %v2161 = vld [vmem:[#allocation6 + $0x6e8] sm:$0xff]
        %v2162 = vld [vmem:[#allocation6 + $0x6f0] sm:$0xff]
        %v2163 = vld [vmem:[#allocation6 + $0x6f8] sm:$0xff]
        %v2164 = vld [vmem:[#allocation6 + $0x700] sm:$0xff]
        %v2165 = vld [vmem:[#allocation6 + $0x708] sm:$0xff]
        %v2166 = vld [vmem:[#allocation6 + $0x710] sm:$0xff]
        %v2167 = vld [vmem:[#allocation6 + $0x718] sm:$0xff]
        %v2168 = vld [vmem:[#allocation6 + $0x720] sm:$0xff]
        %v2169 = vld [vmem:[#allocation6 + $0x728] sm:$0xff]
        %v2170 = vld [vmem:[#allocation6 + $0x730] sm:$0xff]
        %v2171 = vld [vmem:[#allocation6 + $0x738] sm:$0xff]
        %v2172 = vld [vmem:[#allocation6 + $0x740] sm:$0xff]
        %v2173 = vld [vmem:[#allocation6 + $0x748] sm:$0xff]
        %v2174 = vld [vmem:[#allocation6 + $0x750] sm:$0xff]
        %v2175 = vld [vmem:[#allocation6 + $0x758] sm:$0xff]
        %v2176 = vld [vmem:[#allocation6 + $0x760] sm:$0xff]
        %v2177 = vld [vmem:[#allocation6 + $0x768] sm:$0xff]
        %v2178 = vld [vmem:[#allocation6 + $0x770] sm:$0xff]
        %v2179 = vld [vmem:[#allocation6 + $0x778] sm:$0xff]
        %v2180 = vld [vmem:[#allocation6 + $0x780] sm:$0xff]
        %v2181 = vld [vmem:[#allocation6 + $0x788] sm:$0xff]
        %v2182 = vld [vmem:[#allocation6 + $0x790] sm:$0xff]
        %v2183 = vld [vmem:[#allocation6 + $0x798] sm:$0xff]
        %v2184 = vld [vmem:[#allocation6 + $0x7a0] sm:$0xff]
        %v2185 = vld [vmem:[#allocation6 + $0x7a8] sm:$0xff]
        %v2186 = vld [vmem:[#allocation6 + $0x7b0] sm:$0xff]
        %v2187 = vld [vmem:[#allocation6 + $0x7b8] sm:$0xff]
        %v2188 = vld [vmem:[#allocation6 + $0x7c0] sm:$0xff]
        %v2189 = vld [vmem:[#allocation6 + $0x7c8] sm:$0xff]
        %v2190 = vld [vmem:[#allocation6 + $0x7d0] sm:$0xff]
        %v2191 = vld [vmem:[#allocation6 + $0x7d8] sm:$0xff]
        %v2192 = vld [vmem:[#allocation6 + $0x7e0] sm:$0xff]
        %v2193 = vld [vmem:[#allocation6 + $0x7e8] sm:$0xff]
        %v2194 = vld [vmem:[#allocation6 + $0x7f0] sm:$0xff]
        %v2195 = vld [vmem:[#allocation6 + $0x7f8] sm:$0xff]
        %v2197 = vlaneseq
        %v2198 = vshrl.u32 %v2197, 7
        %v2199 = vsub.s32 0, %v2198
        %v2200 = vrot.slane %v1935, %v2199
        %v2201 = vlaneseq
        %v2202 = vshrl.u32 %v2201, 7
        %v2203 = vsub.s32 1, %v2202
        %v2204 = vrot.slane %v1935, %v2203
        %v2205 = vlaneseq
        %v2206 = vshrl.u32 %v2205, 7
        %v2207 = vsub.s32 2, %v2206
        %v2208 = vrot.slane %v1935, %v2207
        %v2209 = vlaneseq
        %v2210 = vshrl.u32 %v2209, 7
        %v2211 = vsub.s32 3, %v2210
        %v2212 = vrot.slane %v1935, %v2211
        %v2213 = vlaneseq
        %v2214 = vshrl.u32 %v2213, 7
        %v2215 = vsub.s32 4, %v2214
        %v2216 = vrot.slane %v1935, %v2215
        %v2217 = vlaneseq
        %v2218 = vshrl.u32 %v2217, 7
        %v2219 = vsub.s32 5, %v2218
        %v2220 = vrot.slane %v1935, %v2219
        %v2221 = vlaneseq
        %v2222 = vshrl.u32 %v2221, 7
        %v2223 = vsub.s32 6, %v2222
        %v2224 = vrot.slane %v1935, %v2223
        %v2225 = vlaneseq
        %v2226 = vshrl.u32 %v2225, 7
        %v2227 = vsub.s32 7, %v2226
        %v2228 = vrot.slane %v1935, %v2227
        %v2493 = vunpack.c.l.b16 %v1940
        %v2494 = vunpack.c.h.b16 %v1940
        %v2495 = vunpack.c.l.b16 %v1941
        %v2496 = vunpack.c.h.b16 %v1941
        %v2497 = vunpack.c.l.b16 %v1942
        %v2498 = vunpack.c.h.b16 %v1942
        %v2499 = vunpack.c.l.b16 %v1943
        %v2500 = vunpack.c.h.b16 %v1943
        %v2501 = vunpack.c.l.b16 %v1944
        %v2502 = vunpack.c.h.b16 %v1944
        %v2503 = vunpack.c.l.b16 %v1945
        %v2504 = vunpack.c.h.b16 %v1945
        %v2505 = vunpack.c.l.b16 %v1946
        %v2506 = vunpack.c.h.b16 %v1946
        %v2507 = vunpack.c.l.b16 %v1947
        %v2508 = vunpack.c.h.b16 %v1947
        %v2509 = vunpack.c.l.b16 %v1948
        %v2510 = vunpack.c.h.b16 %v1948
        %v2511 = vunpack.c.l.b16 %v1949
        %v2512 = vunpack.c.h.b16 %v1949
        %v2513 = vunpack.c.l.b16 %v1950
        %v2514 = vunpack.c.h.b16 %v1950
        %v2515 = vunpack.c.l.b16 %v1951
        %v2516 = vunpack.c.h.b16 %v1951
        %v2517 = vunpack.c.l.b16 %v1952
        %v2518 = vunpack.c.h.b16 %v1952
        %v2519 = vunpack.c.l.b16 %v1953
        %v2520 = vunpack.c.h.b16 %v1953
        %v2521 = vunpack.c.l.b16 %v1954
        %v2522 = vunpack.c.h.b16 %v1954
        %v2523 = vunpack.c.l.b16 %v1955
        %v2524 = vunpack.c.h.b16 %v1955
        %v2525 = vunpack.c.l.b16 %v1956
        %v2526 = vunpack.c.h.b16 %v1956
        %v2527 = vunpack.c.l.b16 %v1957
        %v2528 = vunpack.c.h.b16 %v1957
        %v2529 = vunpack.c.l.b16 %v1958
        %v2530 = vunpack.c.h.b16 %v1958
        %v2531 = vunpack.c.l.b16 %v1959
        %v2532 = vunpack.c.h.b16 %v1959
        %v2533 = vunpack.c.l.b16 %v1960
        %v2534 = vunpack.c.h.b16 %v1960
        %v2535 = vunpack.c.l.b16 %v1961
        %v2536 = vunpack.c.h.b16 %v1961
        %v2537 = vunpack.c.l.b16 %v1962
        %v2538 = vunpack.c.h.b16 %v1962
        %v2539 = vunpack.c.l.b16 %v1963
        %v2540 = vunpack.c.h.b16 %v1963
        %v2541 = vunpack.c.l.b16 %v1964
        %v2542 = vunpack.c.h.b16 %v1964
        %v2543 = vunpack.c.l.b16 %v1965
        %v2544 = vunpack.c.h.b16 %v1965
        %v2545 = vunpack.c.l.b16 %v1966
        %v2546 = vunpack.c.h.b16 %v1966
        %v2547 = vunpack.c.l.b16 %v1967
        %v2548 = vunpack.c.h.b16 %v1967
        %v2549 = vunpack.c.l.b16 %v1968
        %v2550 = vunpack.c.h.b16 %v1968
        %v2551 = vunpack.c.l.b16 %v1969
        %v2552 = vunpack.c.h.b16 %v1969
        %v2553 = vunpack.c.l.b16 %v1970
        %v2554 = vunpack.c.h.b16 %v1970
        %v2555 = vunpack.c.l.b16 %v1971
        %v2556 = vunpack.c.h.b16 %v1971
        %v2557 = vunpack.c.l.b16 %v1972
        %v2558 = vunpack.c.h.b16 %v1972
        %v2559 = vunpack.c.l.b16 %v1973
        %v2560 = vunpack.c.h.b16 %v1973
        %v2561 = vunpack.c.l.b16 %v1974
        %v2562 = vunpack.c.h.b16 %v1974
        %v2563 = vunpack.c.l.b16 %v1975
        %v2564 = vunpack.c.h.b16 %v1975
        %v2565 = vunpack.c.l.b16 %v1976
        %v2566 = vunpack.c.h.b16 %v1976
        %v2567 = vunpack.c.l.b16 %v1977
        %v2568 = vunpack.c.h.b16 %v1977
        %v2569 = vunpack.c.l.b16 %v1978
        %v2570 = vunpack.c.h.b16 %v1978
        %v2571 = vunpack.c.l.b16 %v1979
        %v2572 = vunpack.c.h.b16 %v1979
        %v2573 = vunpack.c.l.b16 %v1980
        %v2574 = vunpack.c.h.b16 %v1980
        %v2575 = vunpack.c.l.b16 %v1981
        %v2576 = vunpack.c.h.b16 %v1981
        %v2577 = vunpack.c.l.b16 %v1982
        %v2578 = vunpack.c.h.b16 %v1982
        %v2579 = vunpack.c.l.b16 %v1983
        %v2580 = vunpack.c.h.b16 %v1983
        %v2581 = vunpack.c.l.b16 %v1984
        %v2582 = vunpack.c.h.b16 %v1984
        %v2583 = vunpack.c.l.b16 %v1985
        %v2584 = vunpack.c.h.b16 %v1985
        %v2585 = vunpack.c.l.b16 %v1986
        %v2586 = vunpack.c.h.b16 %v1986
        %v2587 = vunpack.c.l.b16 %v1987
        %v2588 = vunpack.c.h.b16 %v1987
        %v2589 = vunpack.c.l.b16 %v1988
        %v2590 = vunpack.c.h.b16 %v1988
        %v2591 = vunpack.c.l.b16 %v1989
        %v2592 = vunpack.c.h.b16 %v1989
        %v2593 = vunpack.c.l.b16 %v1990
        %v2594 = vunpack.c.h.b16 %v1990
        %v2595 = vunpack.c.l.b16 %v1991
        %v2596 = vunpack.c.h.b16 %v1991
        %v2597 = vunpack.c.l.b16 %v1992
        %v2598 = vunpack.c.h.b16 %v1992
        %v2599 = vunpack.c.l.b16 %v1993
        %v2600 = vunpack.c.h.b16 %v1993
        %v2601 = vunpack.c.l.b16 %v1994
        %v2602 = vunpack.c.h.b16 %v1994
        %v2603 = vunpack.c.l.b16 %v1995
        %v2604 = vunpack.c.h.b16 %v1995
        %v2605 = vunpack.c.l.b16 %v1996
        %v2606 = vunpack.c.h.b16 %v1996
        %v2607 = vunpack.c.l.b16 %v1997
        %v2608 = vunpack.c.h.b16 %v1997
        %v2609 = vunpack.c.l.b16 %v1998
        %v2610 = vunpack.c.h.b16 %v1998
        %v2611 = vunpack.c.l.b16 %v1999
        %v2612 = vunpack.c.h.b16 %v1999
        %v2613 = vunpack.c.l.b16 %v2000
        %v2614 = vunpack.c.h.b16 %v2000
        %v2615 = vunpack.c.l.b16 %v2001
        %v2616 = vunpack.c.h.b16 %v2001
        %v2617 = vunpack.c.l.b16 %v2002
        %v2618 = vunpack.c.h.b16 %v2002
        %v2619 = vunpack.c.l.b16 %v2003
        %v2620 = vunpack.c.h.b16 %v2003
        %v2621 = vunpack.c.l.b16 %v2004
        %v2622 = vunpack.c.h.b16 %v2004
        %v2623 = vunpack.c.l.b16 %v2005
        %v2624 = vunpack.c.h.b16 %v2005
        %v2625 = vunpack.c.l.b16 %v2006
        %v2626 = vunpack.c.h.b16 %v2006
        %v2627 = vunpack.c.l.b16 %v2007
        %v2628 = vunpack.c.h.b16 %v2007
        %v2629 = vunpack.c.l.b16 %v2008
        %v2630 = vunpack.c.h.b16 %v2008
        %v2631 = vunpack.c.l.b16 %v2009
        %v2632 = vunpack.c.h.b16 %v2009
        %v2633 = vunpack.c.l.b16 %v2010
        %v2634 = vunpack.c.h.b16 %v2010
        %v2635 = vunpack.c.l.b16 %v2011
        %v2636 = vunpack.c.h.b16 %v2011
        %v2637 = vunpack.c.l.b16 %v2012
        %v2638 = vunpack.c.h.b16 %v2012
        %v2639 = vunpack.c.l.b16 %v2013
        %v2640 = vunpack.c.h.b16 %v2013
        %v2641 = vunpack.c.l.b16 %v2014
        %v2642 = vunpack.c.h.b16 %v2014
        %v2643 = vunpack.c.l.b16 %v2015
        %v2644 = vunpack.c.h.b16 %v2015
        %v2645 = vunpack.c.l.b16 %v2016
        %v2646 = vunpack.c.h.b16 %v2016
        %v2647 = vunpack.c.l.b16 %v2017
        %v2648 = vunpack.c.h.b16 %v2017
        %v2649 = vunpack.c.l.b16 %v2018
        %v2650 = vunpack.c.h.b16 %v2018
        %v2651 = vunpack.c.l.b16 %v2019
        %v2652 = vunpack.c.h.b16 %v2019
        %v2653 = vunpack.c.l.b16 %v2020
        %v2654 = vunpack.c.h.b16 %v2020
        %v2655 = vunpack.c.l.b16 %v2021
        %v2656 = vunpack.c.h.b16 %v2021
        %v2657 = vunpack.c.l.b16 %v2022
        %v2658 = vunpack.c.h.b16 %v2022
        %v2659 = vunpack.c.l.b16 %v2023
        %v2660 = vunpack.c.h.b16 %v2023
        %v2661 = vunpack.c.l.b16 %v2024
        %v2662 = vunpack.c.h.b16 %v2024
        %v2663 = vunpack.c.l.b16 %v2025
        %v2664 = vunpack.c.h.b16 %v2025
        %v2665 = vunpack.c.l.b16 %v2026
        %v2666 = vunpack.c.h.b16 %v2026
        %v2667 = vunpack.c.l.b16 %v2027
        %v2668 = vunpack.c.h.b16 %v2027
        %v2669 = vunpack.c.l.b16 %v2028
        %v2670 = vunpack.c.h.b16 %v2028
        %v2671 = vunpack.c.l.b16 %v2029
        %v2672 = vunpack.c.h.b16 %v2029
        %v2673 = vunpack.c.l.b16 %v2030
        %v2674 = vunpack.c.h.b16 %v2030
        %v2675 = vunpack.c.l.b16 %v2031
        %v2676 = vunpack.c.h.b16 %v2031
        %v2677 = vunpack.c.l.b16 %v2032
        %v2678 = vunpack.c.h.b16 %v2032
        %v2679 = vunpack.c.l.b16 %v2033
        %v2680 = vunpack.c.h.b16 %v2033
        %v2681 = vunpack.c.l.b16 %v2034
        %v2682 = vunpack.c.h.b16 %v2034
        %v2683 = vunpack.c.l.b16 %v2035
        %v2684 = vunpack.c.h.b16 %v2035
        %v2685 = vunpack.c.l.b16 %v2036
        %v2686 = vunpack.c.h.b16 %v2036
        %v2687 = vunpack.c.l.b16 %v2037
        %v2688 = vunpack.c.h.b16 %v2037
        %v2689 = vunpack.c.l.b16 %v2038
        %v2690 = vunpack.c.h.b16 %v2038
        %v2691 = vunpack.c.l.b16 %v2039
        %v2692 = vunpack.c.h.b16 %v2039
        %v2693 = vunpack.c.l.b16 %v2040
        %v2694 = vunpack.c.h.b16 %v2040
        %v2695 = vunpack.c.l.b16 %v2041
        %v2696 = vunpack.c.h.b16 %v2041
        %v2697 = vunpack.c.l.b16 %v2042
        %v2698 = vunpack.c.h.b16 %v2042
        %v2699 = vunpack.c.l.b16 %v2043
        %v2700 = vunpack.c.h.b16 %v2043
        %v2701 = vunpack.c.l.b16 %v2044
        %v2702 = vunpack.c.h.b16 %v2044
        %v2703 = vunpack.c.l.b16 %v2045
        %v2704 = vunpack.c.h.b16 %v2045
        %v2705 = vunpack.c.l.b16 %v2046
        %v2706 = vunpack.c.h.b16 %v2046
        %v2707 = vunpack.c.l.b16 %v2047
        %v2708 = vunpack.c.h.b16 %v2047
        %v2709 = vunpack.c.l.b16 %v2048
        %v2710 = vunpack.c.h.b16 %v2048
        %v2711 = vunpack.c.l.b16 %v2049
        %v2712 = vunpack.c.h.b16 %v2049
        %v2713 = vunpack.c.l.b16 %v2050
        %v2714 = vunpack.c.h.b16 %v2050
        %v2715 = vunpack.c.l.b16 %v2051
        %v2716 = vunpack.c.h.b16 %v2051
        %v2717 = vunpack.c.l.b16 %v2052
        %v2718 = vunpack.c.h.b16 %v2052
        %v2719 = vunpack.c.l.b16 %v2053
        %v2720 = vunpack.c.h.b16 %v2053
        %v2721 = vunpack.c.l.b16 %v2054
        %v2722 = vunpack.c.h.b16 %v2054
        %v2723 = vunpack.c.l.b16 %v2055
        %v2724 = vunpack.c.h.b16 %v2055
        %v2725 = vunpack.c.l.b16 %v2056
        %v2726 = vunpack.c.h.b16 %v2056
        %v2727 = vunpack.c.l.b16 %v2057
        %v2728 = vunpack.c.h.b16 %v2057
        %v2729 = vunpack.c.l.b16 %v2058
        %v2730 = vunpack.c.h.b16 %v2058
        %v2731 = vunpack.c.l.b16 %v2059
        %v2732 = vunpack.c.h.b16 %v2059
        %v2733 = vunpack.c.l.b16 %v2060
        %v2734 = vunpack.c.h.b16 %v2060
        %v2735 = vunpack.c.l.b16 %v2061
        %v2736 = vunpack.c.h.b16 %v2061
        %v2737 = vunpack.c.l.b16 %v2062
        %v2738 = vunpack.c.h.b16 %v2062
        %v2739 = vunpack.c.l.b16 %v2063
        %v2740 = vunpack.c.h.b16 %v2063
        %v2741 = vunpack.c.l.b16 %v2064
        %v2742 = vunpack.c.h.b16 %v2064
        %v2743 = vunpack.c.l.b16 %v2065
        %v2744 = vunpack.c.h.b16 %v2065
        %v2745 = vunpack.c.l.b16 %v2066
        %v2746 = vunpack.c.h.b16 %v2066
        %v2747 = vunpack.c.l.b16 %v2067
        %v2748 = vunpack.c.h.b16 %v2067
        %v2749 = vunpack.c.l.b16 %v2068
        %v2750 = vunpack.c.h.b16 %v2068
        %v2751 = vunpack.c.l.b16 %v2069
        %v2752 = vunpack.c.h.b16 %v2069
        %v2753 = vunpack.c.l.b16 %v2070
        %v2754 = vunpack.c.h.b16 %v2070
        %v2755 = vunpack.c.l.b16 %v2071
        %v2756 = vunpack.c.h.b16 %v2071
        %v2757 = vunpack.c.l.b16 %v2072
        %v2758 = vunpack.c.h.b16 %v2072
        %v2759 = vunpack.c.l.b16 %v2073
        %v2760 = vunpack.c.h.b16 %v2073
        %v2761 = vunpack.c.l.b16 %v2074
        %v2762 = vunpack.c.h.b16 %v2074
        %v2763 = vunpack.c.l.b16 %v2075
        %v2764 = vunpack.c.h.b16 %v2075
        %v2765 = vunpack.c.l.b16 %v2076
        %v2766 = vunpack.c.h.b16 %v2076
        %v2767 = vunpack.c.l.b16 %v2077
        %v2768 = vunpack.c.h.b16 %v2077
        %v2769 = vunpack.c.l.b16 %v2078
        %v2770 = vunpack.c.h.b16 %v2078
        %v2771 = vunpack.c.l.b16 %v2079
        %v2772 = vunpack.c.h.b16 %v2079
        %v2773 = vunpack.c.l.b16 %v2080
        %v2774 = vunpack.c.h.b16 %v2080
        %v2775 = vunpack.c.l.b16 %v2081
        %v2776 = vunpack.c.h.b16 %v2081
        %v2777 = vunpack.c.l.b16 %v2082
        %v2778 = vunpack.c.h.b16 %v2082
        %v2779 = vunpack.c.l.b16 %v2083
        %v2780 = vunpack.c.h.b16 %v2083
        %v2781 = vunpack.c.l.b16 %v2084
        %v2782 = vunpack.c.h.b16 %v2084
        %v2783 = vunpack.c.l.b16 %v2085
        %v2784 = vunpack.c.h.b16 %v2085
        %v2785 = vunpack.c.l.b16 %v2086
        %v2786 = vunpack.c.h.b16 %v2086
        %v2787 = vunpack.c.l.b16 %v2087
        %v2788 = vunpack.c.h.b16 %v2087
        %v2789 = vunpack.c.l.b16 %v2088
        %v2790 = vunpack.c.h.b16 %v2088
        %v2791 = vunpack.c.l.b16 %v2089
        %v2792 = vunpack.c.h.b16 %v2089
        %v2793 = vunpack.c.l.b16 %v2090
        %v2794 = vunpack.c.h.b16 %v2090
        %v2795 = vunpack.c.l.b16 %v2091
        %v2796 = vunpack.c.h.b16 %v2091
        %v2797 = vunpack.c.l.b16 %v2092
        %v2798 = vunpack.c.h.b16 %v2092
        %v2799 = vunpack.c.l.b16 %v2093
        %v2800 = vunpack.c.h.b16 %v2093
        %v2801 = vunpack.c.l.b16 %v2094
        %v2802 = vunpack.c.h.b16 %v2094
        %v2803 = vunpack.c.l.b16 %v2095
        %v2804 = vunpack.c.h.b16 %v2095
        %v2805 = vunpack.c.l.b16 %v2096
        %v2806 = vunpack.c.h.b16 %v2096
        %v2807 = vunpack.c.l.b16 %v2097
        %v2808 = vunpack.c.h.b16 %v2097
        %v2809 = vunpack.c.l.b16 %v2098
        %v2810 = vunpack.c.h.b16 %v2098
        %v2811 = vunpack.c.l.b16 %v2099
        %v2812 = vunpack.c.h.b16 %v2099
        %v2813 = vunpack.c.l.b16 %v2100
        %v2814 = vunpack.c.h.b16 %v2100
        %v2815 = vunpack.c.l.b16 %v2101
        %v2816 = vunpack.c.h.b16 %v2101
        %v2817 = vunpack.c.l.b16 %v2102
        %v2818 = vunpack.c.h.b16 %v2102
        %v2819 = vunpack.c.l.b16 %v2103
        %v2820 = vunpack.c.h.b16 %v2103
        %v2821 = vunpack.c.l.b16 %v2104
        %v2822 = vunpack.c.h.b16 %v2104
        %v2823 = vunpack.c.l.b16 %v2105
        %v2824 = vunpack.c.h.b16 %v2105
        %v2825 = vunpack.c.l.b16 %v2106
        %v2826 = vunpack.c.h.b16 %v2106
        %v2827 = vunpack.c.l.b16 %v2107
        %v2828 = vunpack.c.h.b16 %v2107
        %v2829 = vunpack.c.l.b16 %v2108
        %v2830 = vunpack.c.h.b16 %v2108
        %v2831 = vunpack.c.l.b16 %v2109
        %v2832 = vunpack.c.h.b16 %v2109
        %v2833 = vunpack.c.l.b16 %v2110
        %v2834 = vunpack.c.h.b16 %v2110
        %v2835 = vunpack.c.l.b16 %v2111
        %v2836 = vunpack.c.h.b16 %v2111
        %v2837 = vunpack.c.l.b16 %v2112
        %v2838 = vunpack.c.h.b16 %v2112
        %v2839 = vunpack.c.l.b16 %v2113
        %v2840 = vunpack.c.h.b16 %v2113
        %v2841 = vunpack.c.l.b16 %v2114
        %v2842 = vunpack.c.h.b16 %v2114
        %v2843 = vunpack.c.l.b16 %v2115
        %v2844 = vunpack.c.h.b16 %v2115
        %v2845 = vunpack.c.l.b16 %v2116
        %v2846 = vunpack.c.h.b16 %v2116
        %v2847 = vunpack.c.l.b16 %v2117
        %v2848 = vunpack.c.h.b16 %v2117
        %v2849 = vunpack.c.l.b16 %v2118
        %v2850 = vunpack.c.h.b16 %v2118
        %v2851 = vunpack.c.l.b16 %v2119
        %v2852 = vunpack.c.h.b16 %v2119
        %v2853 = vunpack.c.l.b16 %v2120
        %v2854 = vunpack.c.h.b16 %v2120
        %v2855 = vunpack.c.l.b16 %v2121
        %v2856 = vunpack.c.h.b16 %v2121
        %v2857 = vunpack.c.l.b16 %v2122
        %v2858 = vunpack.c.h.b16 %v2122
        %v2859 = vunpack.c.l.b16 %v2123
        %v2860 = vunpack.c.h.b16 %v2123
        %v2861 = vunpack.c.l.b16 %v2124
        %v2862 = vunpack.c.h.b16 %v2124
        %v2863 = vunpack.c.l.b16 %v2125
        %v2864 = vunpack.c.h.b16 %v2125
        %v2865 = vunpack.c.l.b16 %v2126
        %v2866 = vunpack.c.h.b16 %v2126
        %v2867 = vunpack.c.l.b16 %v2127
        %v2868 = vunpack.c.h.b16 %v2127
        %v2869 = vunpack.c.l.b16 %v2128
        %v2870 = vunpack.c.h.b16 %v2128
        %v2871 = vunpack.c.l.b16 %v2129
        %v2872 = vunpack.c.h.b16 %v2129
        %v2873 = vunpack.c.l.b16 %v2130
        %v2874 = vunpack.c.h.b16 %v2130
        %v2875 = vunpack.c.l.b16 %v2131
        %v2876 = vunpack.c.h.b16 %v2131
        %v2877 = vunpack.c.l.b16 %v2132
        %v2878 = vunpack.c.h.b16 %v2132
        %v2879 = vunpack.c.l.b16 %v2133
        %v2880 = vunpack.c.h.b16 %v2133
        %v2881 = vunpack.c.l.b16 %v2134
        %v2882 = vunpack.c.h.b16 %v2134
        %v2883 = vunpack.c.l.b16 %v2135
        %v2884 = vunpack.c.h.b16 %v2135
        %v2885 = vunpack.c.l.b16 %v2136
        %v2886 = vunpack.c.h.b16 %v2136
        %v2887 = vunpack.c.l.b16 %v2137
        %v2888 = vunpack.c.h.b16 %v2137
        %v2889 = vunpack.c.l.b16 %v2138
        %v2890 = vunpack.c.h.b16 %v2138
        %v2891 = vunpack.c.l.b16 %v2139
        %v2892 = vunpack.c.h.b16 %v2139
        %v2893 = vunpack.c.l.b16 %v2140
        %v2894 = vunpack.c.h.b16 %v2140
        %v2895 = vunpack.c.l.b16 %v2141
        %v2896 = vunpack.c.h.b16 %v2141
        %v2897 = vunpack.c.l.b16 %v2142
        %v2898 = vunpack.c.h.b16 %v2142
        %v2899 = vunpack.c.l.b16 %v2143
        %v2900 = vunpack.c.h.b16 %v2143
        %v2901 = vunpack.c.l.b16 %v2144
        %v2902 = vunpack.c.h.b16 %v2144
        %v2903 = vunpack.c.l.b16 %v2145
        %v2904 = vunpack.c.h.b16 %v2145
        %v2905 = vunpack.c.l.b16 %v2146
        %v2906 = vunpack.c.h.b16 %v2146
        %v2907 = vunpack.c.l.b16 %v2147
        %v2908 = vunpack.c.h.b16 %v2147
        %v2909 = vunpack.c.l.b16 %v2148
        %v2910 = vunpack.c.h.b16 %v2148
        %v2911 = vunpack.c.l.b16 %v2149
        %v2912 = vunpack.c.h.b16 %v2149
        %v2913 = vunpack.c.l.b16 %v2150
        %v2914 = vunpack.c.h.b16 %v2150
        %v2915 = vunpack.c.l.b16 %v2151
        %v2916 = vunpack.c.h.b16 %v2151
        %v2917 = vunpack.c.l.b16 %v2152
        %v2918 = vunpack.c.h.b16 %v2152
        %v2919 = vunpack.c.l.b16 %v2153
        %v2920 = vunpack.c.h.b16 %v2153
        %v2921 = vunpack.c.l.b16 %v2154
        %v2922 = vunpack.c.h.b16 %v2154
        %v2923 = vunpack.c.l.b16 %v2155
        %v2924 = vunpack.c.h.b16 %v2155
        %v2925 = vunpack.c.l.b16 %v2156
        %v2926 = vunpack.c.h.b16 %v2156
        %v2927 = vunpack.c.l.b16 %v2157
        %v2928 = vunpack.c.h.b16 %v2157
        %v2929 = vunpack.c.l.b16 %v2158
        %v2930 = vunpack.c.h.b16 %v2158
        %v2931 = vunpack.c.l.b16 %v2159
        %v2932 = vunpack.c.h.b16 %v2159
        %v2933 = vunpack.c.l.b16 %v2160
        %v2934 = vunpack.c.h.b16 %v2160
        %v2935 = vunpack.c.l.b16 %v2161
        %v2936 = vunpack.c.h.b16 %v2161
        %v2937 = vunpack.c.l.b16 %v2162
        %v2938 = vunpack.c.h.b16 %v2162
        %v2939 = vunpack.c.l.b16 %v2163
        %v2940 = vunpack.c.h.b16 %v2163
        %v2941 = vunpack.c.l.b16 %v2164
        %v2942 = vunpack.c.h.b16 %v2164
        %v2943 = vunpack.c.l.b16 %v2165
        %v2944 = vunpack.c.h.b16 %v2165
        %v2945 = vunpack.c.l.b16 %v2166
        %v2946 = vunpack.c.h.b16 %v2166
        %v2947 = vunpack.c.l.b16 %v2167
        %v2948 = vunpack.c.h.b16 %v2167
        %v2949 = vunpack.c.l.b16 %v2168
        %v2950 = vunpack.c.h.b16 %v2168
        %v2951 = vunpack.c.l.b16 %v2169
        %v2952 = vunpack.c.h.b16 %v2169
        %v2953 = vunpack.c.l.b16 %v2170
        %v2954 = vunpack.c.h.b16 %v2170
        %v2955 = vunpack.c.l.b16 %v2171
        %v2956 = vunpack.c.h.b16 %v2171
        %v2957 = vunpack.c.l.b16 %v2172
        %v2958 = vunpack.c.h.b16 %v2172
        %v2959 = vunpack.c.l.b16 %v2173
        %v2960 = vunpack.c.h.b16 %v2173
        %v2961 = vunpack.c.l.b16 %v2174
        %v2962 = vunpack.c.h.b16 %v2174
        %v2963 = vunpack.c.l.b16 %v2175
        %v2964 = vunpack.c.h.b16 %v2175
        %v2965 = vunpack.c.l.b16 %v2176
        %v2966 = vunpack.c.h.b16 %v2176
        %v2967 = vunpack.c.l.b16 %v2177
        %v2968 = vunpack.c.h.b16 %v2177
        %v2969 = vunpack.c.l.b16 %v2178
        %v2970 = vunpack.c.h.b16 %v2178
        %v2971 = vunpack.c.l.b16 %v2179
        %v2972 = vunpack.c.h.b16 %v2179
        %v2973 = vunpack.c.l.b16 %v2180
        %v2974 = vunpack.c.h.b16 %v2180
        %v2975 = vunpack.c.l.b16 %v2181
        %v2976 = vunpack.c.h.b16 %v2181
        %v2977 = vunpack.c.l.b16 %v2182
        %v2978 = vunpack.c.h.b16 %v2182
        %v2979 = vunpack.c.l.b16 %v2183
        %v2980 = vunpack.c.h.b16 %v2183
        %v2981 = vunpack.c.l.b16 %v2184
        %v2982 = vunpack.c.h.b16 %v2184
        %v2983 = vunpack.c.l.b16 %v2185
        %v2984 = vunpack.c.h.b16 %v2185
        %v2985 = vunpack.c.l.b16 %v2186
        %v2986 = vunpack.c.h.b16 %v2186
        %v2987 = vunpack.c.l.b16 %v2187
        %v2988 = vunpack.c.h.b16 %v2187
        %v2989 = vunpack.c.l.b16 %v2188
        %v2990 = vunpack.c.h.b16 %v2188
        %v2991 = vunpack.c.l.b16 %v2189
        %v2992 = vunpack.c.h.b16 %v2189
        %v2993 = vunpack.c.l.b16 %v2190
        %v2994 = vunpack.c.h.b16 %v2190
        %v2995 = vunpack.c.l.b16 %v2191
        %v2996 = vunpack.c.h.b16 %v2191
        %v2997 = vunpack.c.l.b16 %v2192
        %v2998 = vunpack.c.h.b16 %v2192
        %v2999 = vunpack.c.l.b16 %v2193
        %v3000 = vunpack.c.h.b16 %v2193
        %v3001 = vunpack.c.l.b16 %v2194
        %v3002 = vunpack.c.h.b16 %v2194
        %v3003 = vunpack.c.l.b16 %v2195
        %v3004 = vunpack.c.h.b16 %v2195
        %v3005 = vpack.c.b16 %v2501, %v2493
        %v3006 = vpack.c.b16 %v2502, %v2494
        %v3007 = vpack.c.b16 %v2503, %v2495
        %v3008 = vpack.c.b16 %v2504, %v2496
        %v3009 = vpack.c.b16 %v2505, %v2497
        %v3010 = vpack.c.b16 %v2506, %v2498
        %v3011 = vpack.c.b16 %v2507, %v2499
        %v3012 = vpack.c.b16 %v2508, %v2500
        %v3013 = vpack.c.b16 %v2517, %v2509
        %v3014 = vpack.c.b16 %v2518, %v2510
        %v3015 = vpack.c.b16 %v2519, %v2511
        %v3016 = vpack.c.b16 %v2520, %v2512
        %v3017 = vpack.c.b16 %v2521, %v2513
        %v3018 = vpack.c.b16 %v2522, %v2514
        %v3019 = vpack.c.b16 %v2523, %v2515
        %v3020 = vpack.c.b16 %v2524, %v2516
        %v3021 = vpack.c.b16 %v2533, %v2525
        %v3022 = vpack.c.b16 %v2534, %v2526
        %v3023 = vpack.c.b16 %v2535, %v2527
        %v3024 = vpack.c.b16 %v2536, %v2528
        %v3025 = vpack.c.b16 %v2537, %v2529
        %v3026 = vpack.c.b16 %v2538, %v2530
        %v3027 = vpack.c.b16 %v2539, %v2531
        %v3028 = vpack.c.b16 %v2540, %v2532
        %v3029 = vpack.c.b16 %v2549, %v2541
        %v3030 = vpack.c.b16 %v2550, %v2542
        %v3031 = vpack.c.b16 %v2551, %v2543
        %v3032 = vpack.c.b16 %v2552, %v2544
        %v3033 = vpack.c.b16 %v2553, %v2545
        %v3034 = vpack.c.b16 %v2554, %v2546
        %v3035 = vpack.c.b16 %v2555, %v2547
        %v3036 = vpack.c.b16 %v2556, %v2548
        %v3037 = vpack.c.b16 %v2565, %v2557
        %v3038 = vpack.c.b16 %v2566, %v2558
        %v3039 = vpack.c.b16 %v2567, %v2559
        %v3040 = vpack.c.b16 %v2568, %v2560
        %v3041 = vpack.c.b16 %v2569, %v2561
        %v3042 = vpack.c.b16 %v2570, %v2562
        %v3043 = vpack.c.b16 %v2571, %v2563
        %v3044 = vpack.c.b16 %v2572, %v2564
        %v3045 = vpack.c.b16 %v2581, %v2573
        %v3046 = vpack.c.b16 %v2582, %v2574
        %v3047 = vpack.c.b16 %v2583, %v2575
        %v3048 = vpack.c.b16 %v2584, %v2576
        %v3049 = vpack.c.b16 %v2585, %v2577
        %v3050 = vpack.c.b16 %v2586, %v2578
        %v3051 = vpack.c.b16 %v2587, %v2579
        %v3052 = vpack.c.b16 %v2588, %v2580
        %v3053 = vpack.c.b16 %v2597, %v2589
        %v3054 = vpack.c.b16 %v2598, %v2590
        %v3055 = vpack.c.b16 %v2599, %v2591
        %v3056 = vpack.c.b16 %v2600, %v2592
        %v3057 = vpack.c.b16 %v2601, %v2593
        %v3058 = vpack.c.b16 %v2602, %v2594
        %v3059 = vpack.c.b16 %v2603, %v2595
        %v3060 = vpack.c.b16 %v2604, %v2596
        %v3061 = vpack.c.b16 %v2613, %v2605
        %v3062 = vpack.c.b16 %v2614, %v2606
        %v3063 = vpack.c.b16 %v2615, %v2607
        %v3064 = vpack.c.b16 %v2616, %v2608
        %v3065 = vpack.c.b16 %v2617, %v2609
        %v3066 = vpack.c.b16 %v2618, %v2610
        %v3067 = vpack.c.b16 %v2619, %v2611
        %v3068 = vpack.c.b16 %v2620, %v2612
        %v3069 = vpack.c.b16 %v2629, %v2621
        %v3070 = vpack.c.b16 %v2630, %v2622
        %v3071 = vpack.c.b16 %v2631, %v2623
        %v3072 = vpack.c.b16 %v2632, %v2624
        %v3073 = vpack.c.b16 %v2633, %v2625
        %v3074 = vpack.c.b16 %v2634, %v2626
        %v3075 = vpack.c.b16 %v2635, %v2627
        %v3076 = vpack.c.b16 %v2636, %v2628
        %v3077 = vpack.c.b16 %v2645, %v2637
        %v3078 = vpack.c.b16 %v2646, %v2638
        %v3079 = vpack.c.b16 %v2647, %v2639
        %v3080 = vpack.c.b16 %v2648, %v2640
        %v3081 = vpack.c.b16 %v2649, %v2641
        %v3082 = vpack.c.b16 %v2650, %v2642
        %v3083 = vpack.c.b16 %v2651, %v2643
        %v3084 = vpack.c.b16 %v2652, %v2644
        %v3085 = vpack.c.b16 %v2661, %v2653
        %v3086 = vpack.c.b16 %v2662, %v2654
        %v3087 = vpack.c.b16 %v2663, %v2655
        %v3088 = vpack.c.b16 %v2664, %v2656
        %v3089 = vpack.c.b16 %v2665, %v2657
        %v3090 = vpack.c.b16 %v2666, %v2658
        %v3091 = vpack.c.b16 %v2667, %v2659
        %v3092 = vpack.c.b16 %v2668, %v2660
        %v3093 = vpack.c.b16 %v2677, %v2669
        %v3094 = vpack.c.b16 %v2678, %v2670
        %v3095 = vpack.c.b16 %v2679, %v2671
        %v3096 = vpack.c.b16 %v2680, %v2672
        %v3097 = vpack.c.b16 %v2681, %v2673
        %v3098 = vpack.c.b16 %v2682, %v2674
        %v3099 = vpack.c.b16 %v2683, %v2675
        %v3100 = vpack.c.b16 %v2684, %v2676
        %v3101 = vpack.c.b16 %v2693, %v2685
        %v3102 = vpack.c.b16 %v2694, %v2686
        %v3103 = vpack.c.b16 %v2695, %v2687
        %v3104 = vpack.c.b16 %v2696, %v2688
        %v3105 = vpack.c.b16 %v2697, %v2689
        %v3106 = vpack.c.b16 %v2698, %v2690
        %v3107 = vpack.c.b16 %v2699, %v2691
        %v3108 = vpack.c.b16 %v2700, %v2692
        %v3109 = vpack.c.b16 %v2709, %v2701
        %v3110 = vpack.c.b16 %v2710, %v2702
        %v3111 = vpack.c.b16 %v2711, %v2703
        %v3112 = vpack.c.b16 %v2712, %v2704
        %v3113 = vpack.c.b16 %v2713, %v2705
        %v3114 = vpack.c.b16 %v2714, %v2706
        %v3115 = vpack.c.b16 %v2715, %v2707
        %v3116 = vpack.c.b16 %v2716, %v2708
        %v3117 = vpack.c.b16 %v2725, %v2717
        %v3118 = vpack.c.b16 %v2726, %v2718
        %v3119 = vpack.c.b16 %v2727, %v2719
        %v3120 = vpack.c.b16 %v2728, %v2720
        %v3121 = vpack.c.b16 %v2729, %v2721
        %v3122 = vpack.c.b16 %v2730, %v2722
        %v3123 = vpack.c.b16 %v2731, %v2723
        %v3124 = vpack.c.b16 %v2732, %v2724
        %v3125 = vpack.c.b16 %v2741, %v2733
        %v3126 = vpack.c.b16 %v2742, %v2734
        %v3127 = vpack.c.b16 %v2743, %v2735
        %v3128 = vpack.c.b16 %v2744, %v2736
        %v3129 = vpack.c.b16 %v2745, %v2737
        %v3130 = vpack.c.b16 %v2746, %v2738
        %v3131 = vpack.c.b16 %v2747, %v2739
        %v3132 = vpack.c.b16 %v2748, %v2740
        %v3133 = vpack.c.b16 %v2757, %v2749
        %v3134 = vpack.c.b16 %v2758, %v2750
        %v3135 = vpack.c.b16 %v2759, %v2751
        %v3136 = vpack.c.b16 %v2760, %v2752
        %v3137 = vpack.c.b16 %v2761, %v2753
        %v3138 = vpack.c.b16 %v2762, %v2754
        %v3139 = vpack.c.b16 %v2763, %v2755
        %v3140 = vpack.c.b16 %v2764, %v2756
        %v3141 = vpack.c.b16 %v2773, %v2765
        %v3142 = vpack.c.b16 %v2774, %v2766
        %v3143 = vpack.c.b16 %v2775, %v2767
        %v3144 = vpack.c.b16 %v2776, %v2768
        %v3145 = vpack.c.b16 %v2777, %v2769
        %v3146 = vpack.c.b16 %v2778, %v2770
        %v3147 = vpack.c.b16 %v2779, %v2771
        %v3148 = vpack.c.b16 %v2780, %v2772
        %v3149 = vpack.c.b16 %v2789, %v2781
        %v3150 = vpack.c.b16 %v2790, %v2782
        %v3151 = vpack.c.b16 %v2791, %v2783
        %v3152 = vpack.c.b16 %v2792, %v2784
        %v3153 = vpack.c.b16 %v2793, %v2785
        %v3154 = vpack.c.b16 %v2794, %v2786
        %v3155 = vpack.c.b16 %v2795, %v2787
        %v3156 = vpack.c.b16 %v2796, %v2788
        %v3157 = vpack.c.b16 %v2805, %v2797
        %v3158 = vpack.c.b16 %v2806, %v2798
        %v3159 = vpack.c.b16 %v2807, %v2799
        %v3160 = vpack.c.b16 %v2808, %v2800
        %v3161 = vpack.c.b16 %v2809, %v2801
        %v3162 = vpack.c.b16 %v2810, %v2802
        %v3163 = vpack.c.b16 %v2811, %v2803
        %v3164 = vpack.c.b16 %v2812, %v2804
        %v3165 = vpack.c.b16 %v2821, %v2813
        %v3166 = vpack.c.b16 %v2822, %v2814
        %v3167 = vpack.c.b16 %v2823, %v2815
        %v3168 = vpack.c.b16 %v2824, %v2816
        %v3169 = vpack.c.b16 %v2825, %v2817
        %v3170 = vpack.c.b16 %v2826, %v2818
        %v3171 = vpack.c.b16 %v2827, %v2819
        %v3172 = vpack.c.b16 %v2828, %v2820
        %v3173 = vpack.c.b16 %v2837, %v2829
        %v3174 = vpack.c.b16 %v2838, %v2830
        %v3175 = vpack.c.b16 %v2839, %v2831
        %v3176 = vpack.c.b16 %v2840, %v2832
        %v3177 = vpack.c.b16 %v2841, %v2833
        %v3178 = vpack.c.b16 %v2842, %v2834
        %v3179 = vpack.c.b16 %v2843, %v2835
        %v3180 = vpack.c.b16 %v2844, %v2836
        %v3181 = vpack.c.b16 %v2853, %v2845
        %v3182 = vpack.c.b16 %v2854, %v2846
        %v3183 = vpack.c.b16 %v2855, %v2847
        %v3184 = vpack.c.b16 %v2856, %v2848
        %v3185 = vpack.c.b16 %v2857, %v2849
        %v3186 = vpack.c.b16 %v2858, %v2850
        %v3187 = vpack.c.b16 %v2859, %v2851
        %v3188 = vpack.c.b16 %v2860, %v2852
        %v3189 = vpack.c.b16 %v2869, %v2861
        %v3190 = vpack.c.b16 %v2870, %v2862
        %v3191 = vpack.c.b16 %v2871, %v2863
        %v3192 = vpack.c.b16 %v2872, %v2864
        %v3193 = vpack.c.b16 %v2873, %v2865
        %v3194 = vpack.c.b16 %v2874, %v2866
        %v3195 = vpack.c.b16 %v2875, %v2867
        %v3196 = vpack.c.b16 %v2876, %v2868
        %v3197 = vpack.c.b16 %v2885, %v2877
        %v3198 = vpack.c.b16 %v2886, %v2878
        %v3199 = vpack.c.b16 %v2887, %v2879
        %v3200 = vpack.c.b16 %v2888, %v2880
        %v3201 = vpack.c.b16 %v2889, %v2881
        %v3202 = vpack.c.b16 %v2890, %v2882
        %v3203 = vpack.c.b16 %v2891, %v2883
        %v3204 = vpack.c.b16 %v2892, %v2884
        %v3205 = vpack.c.b16 %v2901, %v2893
        %v3206 = vpack.c.b16 %v2902, %v2894
        %v3207 = vpack.c.b16 %v2903, %v2895
        %v3208 = vpack.c.b16 %v2904, %v2896
        %v3209 = vpack.c.b16 %v2905, %v2897
        %v3210 = vpack.c.b16 %v2906, %v2898
        %v3211 = vpack.c.b16 %v2907, %v2899
        %v3212 = vpack.c.b16 %v2908, %v2900
        %v3213 = vpack.c.b16 %v2917, %v2909
        %v3214 = vpack.c.b16 %v2918, %v2910
        %v3215 = vpack.c.b16 %v2919, %v2911
        %v3216 = vpack.c.b16 %v2920, %v2912
        %v3217 = vpack.c.b16 %v2921, %v2913
        %v3218 = vpack.c.b16 %v2922, %v2914
        %v3219 = vpack.c.b16 %v2923, %v2915
        %v3220 = vpack.c.b16 %v2924, %v2916
        %v3221 = vpack.c.b16 %v2933, %v2925
        %v3222 = vpack.c.b16 %v2934, %v2926
        %v3223 = vpack.c.b16 %v2935, %v2927
        %v3224 = vpack.c.b16 %v2936, %v2928
        %v3225 = vpack.c.b16 %v2937, %v2929
        %v3226 = vpack.c.b16 %v2938, %v2930
        %v3227 = vpack.c.b16 %v2939, %v2931
        %v3228 = vpack.c.b16 %v2940, %v2932
        %v3229 = vpack.c.b16 %v2949, %v2941
        %v3230 = vpack.c.b16 %v2950, %v2942
        %v3231 = vpack.c.b16 %v2951, %v2943
        %v3232 = vpack.c.b16 %v2952, %v2944
        %v3233 = vpack.c.b16 %v2953, %v2945
        %v3234 = vpack.c.b16 %v2954, %v2946
        %v3235 = vpack.c.b16 %v2955, %v2947
        %v3236 = vpack.c.b16 %v2956, %v2948
        %v3237 = vpack.c.b16 %v2965, %v2957
        %v3238 = vpack.c.b16 %v2966, %v2958
        %v3239 = vpack.c.b16 %v2967, %v2959
        %v3240 = vpack.c.b16 %v2968, %v2960
        %v3241 = vpack.c.b16 %v2969, %v2961
        %v3242 = vpack.c.b16 %v2970, %v2962
        %v3243 = vpack.c.b16 %v2971, %v2963
        %v3244 = vpack.c.b16 %v2972, %v2964
        %v3245 = vpack.c.b16 %v2981, %v2973
        %v3246 = vpack.c.b16 %v2982, %v2974
        %v3247 = vpack.c.b16 %v2983, %v2975
        %v3248 = vpack.c.b16 %v2984, %v2976
        %v3249 = vpack.c.b16 %v2985, %v2977
        %v3250 = vpack.c.b16 %v2986, %v2978
        %v3251 = vpack.c.b16 %v2987, %v2979
        %v3252 = vpack.c.b16 %v2988, %v2980
        %v3253 = vpack.c.b16 %v2997, %v2989
        %v3254 = vpack.c.b16 %v2998, %v2990
        %v3255 = vpack.c.b16 %v2999, %v2991
        %v3256 = vpack.c.b16 %v3000, %v2992
        %v3257 = vpack.c.b16 %v3001, %v2993
        %v3258 = vpack.c.b16 %v3002, %v2994
        %v3259 = vpack.c.b16 %v3003, %v2995
        %v3260 = vpack.c.b16 %v3004, %v2996
        %3517 = vmatprep.subr.bf16.mxu0 %v3006
        %3518 = vmatpush1.bf16.msra.mxu0 %v3005
        %3519 = vmatprep.subr.bf16.mxu0 %v3014
        %3520 = vmatpush1.bf16.msra.mxu0 %v3013
        %3521 = vmatprep.subr.bf16.mxu0 %v3022
        %3522 = vmatpush1.bf16.msra.mxu0 %v3021
        %3523 = vmatprep.subr.bf16.mxu0 %v3030
        %3524 = vmatpush1.bf16.msra.mxu0 %v3029
        %3525 = vmatprep.subr.bf16.mxu0 %v3038
        %3526 = vmatpush1.bf16.msra.mxu0 %v3037
        %3527 = vmatprep.subr.bf16.mxu0 %v3046
        %3528 = vmatpush1.bf16.msra.mxu0 %v3045
        %3529 = vmatprep.subr.bf16.mxu0 %v3054
        %3530 = vmatpush1.bf16.msra.mxu0 %v3053
        %3531 = vmatprep.subr.bf16.mxu0 %v3062
        %3532 = vmatpush1.bf16.msra.mxu0 %v3061
        %3533 = vmatprep.subr.bf16.mxu0 %v3070
        %3534 = vmatpush1.bf16.msra.mxu0 %v3069
        %3535 = vmatprep.subr.bf16.mxu0 %v3078
        %3536 = vmatpush1.bf16.msra.mxu0 %v3077
        %3537 = vmatprep.subr.bf16.mxu0 %v3086
        %3538 = vmatpush1.bf16.msra.mxu0 %v3085
        %3539 = vmatprep.subr.bf16.mxu0 %v3094
        %3540 = vmatpush1.bf16.msra.mxu0 %v3093
        %3541 = vmatprep.subr.bf16.mxu0 %v3102
        %3542 = vmatpush1.bf16.msra.mxu0 %v3101
        %3543 = vmatprep.subr.bf16.mxu0 %v3110
        %3544 = vmatpush1.bf16.msra.mxu0 %v3109
        %3545 = vmatprep.subr.bf16.mxu0 %v3118
        %3546 = vmatpush1.bf16.msra.mxu0 %v3117
        %3547 = vmatprep.subr.bf16.mxu0 %v3126
        %3548 = vmatpush1.bf16.msra.mxu0 %v3125
        %3549 = vmatprep.mubr.bf16.mxu0 %v1937
        %3550 = vmatmul.mubr.bf16.gmra.mrb[0].mxu0 %v1936
        %v3551 = vpop.f32.mrb[0].mxu0
        %v3552 = vadd.f32 %v2200, %v3551
        %v3553 = vpop.f32.mrb[0].mxu0
        %v3554 = vadd.f32 %v2204, %v3553
        %v3555 = vpop.f32.mrb[0].mxu0
        %v3556 = vpop.f32.mrb[0].mxu0
        %3557 = vdwg.mxu0
        %3558 = vmatprep.subr.bf16.mxu0 %v3134
        %3559 = vmatpush1.bf16.msra.mxu0 %v3133
        %3560 = vmatprep.subr.bf16.mxu0 %v3142
        %3561 = vmatpush1.bf16.msra.mxu0 %v3141
        %3562 = vmatprep.subr.bf16.mxu0 %v3150
        %3563 = vmatpush1.bf16.msra.mxu0 %v3149
        %3564 = vmatprep.subr.bf16.mxu0 %v3158
        %3565 = vmatpush1.bf16.msra.mxu0 %v3157
        %3566 = vmatprep.subr.bf16.mxu0 %v3166
        %3567 = vmatpush1.bf16.msra.mxu0 %v3165
        %3568 = vmatprep.subr.bf16.mxu0 %v3174
        %3569 = vmatpush1.bf16.msra.mxu0 %v3173
        %3570 = vmatprep.subr.bf16.mxu0 %v3182
        %3571 = vmatpush1.bf16.msra.mxu0 %v3181
        %3572 = vmatprep.subr.bf16.mxu0 %v3190
        %3573 = vmatpush1.bf16.msra.mxu0 %v3189
        %3574 = vmatprep.subr.bf16.mxu0 %v3198
        %3575 = vmatpush1.bf16.msra.mxu0 %v3197
        %3576 = vmatprep.subr.bf16.mxu0 %v3206
        %3577 = vmatpush1.bf16.msra.mxu0 %v3205
        %3578 = vmatprep.subr.bf16.mxu0 %v3214
        %3579 = vmatpush1.bf16.msra.mxu0 %v3213
        %3580 = vmatprep.subr.bf16.mxu0 %v3222
        %3581 = vmatpush1.bf16.msra.mxu0 %v3221
        %3582 = vmatprep.subr.bf16.mxu0 %v3230
        %3583 = vmatpush1.bf16.msra.mxu0 %v3229
        %3584 = vmatprep.subr.bf16.mxu0 %v3238
        %3585 = vmatpush1.bf16.msra.mxu0 %v3237
        %3586 = vmatprep.subr.bf16.mxu0 %v3246
        %3587 = vmatpush1.bf16.msra.mxu0 %v3245
        %3588 = vmatprep.subr.bf16.mxu0 %v3254
        %3589 = vmatpush1.bf16.msra.mxu0 %v3253
        %3590 = vmatprep.mubr.bf16.mxu0 %v1939
        %3591 = vmatmul.mubr.bf16.gmra.mrb[0].mxu0 %v1938
        %v3592 = vpop.f32.mrb[0].mxu0
        %v3593 = vadd.f32 %v3552, %v3592
        %v3594 = vpop.f32.mrb[0].mxu0
        %v3595 = vadd.f32 %v3554, %v3594
        %v3596 = vpop.f32.mrb[0].mxu0
        %v3597 = vpop.f32.mrb[0].mxu0
        %3598 = vdwg.mxu0
        %3599 = vmatprep.subr.bf16.mxu0 %v3008
        %3600 = vmatpush1.bf16.msra.mxu0 %v3007
        %3601 = vmatprep.subr.bf16.mxu0 %v3016
        %3602 = vmatpush1.bf16.msra.mxu0 %v3015
        %3603 = vmatprep.subr.bf16.mxu0 %v3024
        %3604 = vmatpush1.bf16.msra.mxu0 %v3023
        %3605 = vmatprep.subr.bf16.mxu0 %v3032
        %3606 = vmatpush1.bf16.msra.mxu0 %v3031
        %3607 = vmatprep.subr.bf16.mxu0 %v3040
        %3608 = vmatpush1.bf16.msra.mxu0 %v3039
        %3609 = vmatprep.subr.bf16.mxu0 %v3048
        %3610 = vmatpush1.bf16.msra.mxu0 %v3047
        %3611 = vmatprep.subr.bf16.mxu0 %v3056
        %3612 = vmatpush1.bf16.msra.mxu0 %v3055
        %3613 = vmatprep.subr.bf16.mxu0 %v3064
        %3614 = vmatpush1.bf16.msra.mxu0 %v3063
        %3615 = vmatprep.subr.bf16.mxu0 %v3072
        %3616 = vmatpush1.bf16.msra.mxu0 %v3071
        %3617 = vmatprep.subr.bf16.mxu0 %v3080
        %3618 = vmatpush1.bf16.msra.mxu0 %v3079
        %3619 = vmatprep.subr.bf16.mxu0 %v3088
        %3620 = vmatpush1.bf16.msra.mxu0 %v3087
        %3621 = vmatprep.subr.bf16.mxu0 %v3096
        %3622 = vmatpush1.bf16.msra.mxu0 %v3095
        %3623 = vmatprep.subr.bf16.mxu0 %v3104
        %3624 = vmatpush1.bf16.msra.mxu0 %v3103
        %3625 = vmatprep.subr.bf16.mxu0 %v3112
        %3626 = vmatpush1.bf16.msra.mxu0 %v3111
        %3627 = vmatprep.subr.bf16.mxu0 %v3120
        %3628 = vmatpush1.bf16.msra.mxu0 %v3119
        %3629 = vmatprep.subr.bf16.mxu0 %v3128
        %3630 = vmatpush1.bf16.msra.mxu0 %v3127
        %3631 = vmatprep.mubr.bf16.mxu0 %v1937
        %3632 = vmatmul.mubr.bf16.gmra.mrb[0].mxu0 %v1936
        %v3633 = vpop.f32.mrb[0].mxu0
        %v3634 = vadd.f32 %v2208, %v3633
        %v3635 = vpop.f32.mrb[0].mxu0
        %v3636 = vadd.f32 %v2212, %v3635
        %v3637 = vpop.f32.mrb[0].mxu0
        %v3638 = vpop.f32.mrb[0].mxu0
        %3639 = vdwg.mxu0
        %3640 = vmatprep.subr.bf16.mxu0 %v3136
        %3641 = vmatpush1.bf16.msra.mxu0 %v3135
        %3642 = vmatprep.subr.bf16.mxu0 %v3144
        %3643 = vmatpush1.bf16.msra.mxu0 %v3143
        %3644 = vmatprep.subr.bf16.mxu0 %v3152
        %3645 = vmatpush1.bf16.msra.mxu0 %v3151
        %3646 = vmatprep.subr.bf16.mxu0 %v3160
        %3647 = vmatpush1.bf16.msra.mxu0 %v3159
        %3648 = vmatprep.subr.bf16.mxu0 %v3168
        %3649 = vmatpush1.bf16.msra.mxu0 %v3167
        %3650 = vmatprep.subr.bf16.mxu0 %v3176
        %3651 = vmatpush1.bf16.msra.mxu0 %v3175
        %3652 = vmatprep.subr.bf16.mxu0 %v3184
        %3653 = vmatpush1.bf16.msra.mxu0 %v3183
        %3654 = vmatprep.subr.bf16.mxu0 %v3192
        %3655 = vmatpush1.bf16.msra.mxu0 %v3191
        %3656 = vmatprep.subr.bf16.mxu0 %v3200
        %3657 = vmatpush1.bf16.msra.mxu0 %v3199
        %3658 = vmatprep.subr.bf16.mxu0 %v3208
        %3659 = vmatpush1.bf16.msra.mxu0 %v3207
        %3660 = vmatprep.subr.bf16.mxu0 %v3216
        %3661 = vmatpush1.bf16.msra.mxu0 %v3215
        %3662 = vmatprep.subr.bf16.mxu0 %v3224
        %3663 = vmatpush1.bf16.msra.mxu0 %v3223
        %3664 = vmatprep.subr.bf16.mxu0 %v3232
        %3665 = vmatpush1.bf16.msra.mxu0 %v3231
        %3666 = vmatprep.subr.bf16.mxu0 %v3240
        %3667 = vmatpush1.bf16.msra.mxu0 %v3239
        %3668 = vmatprep.subr.bf16.mxu0 %v3248
        %3669 = vmatpush1.bf16.msra.mxu0 %v3247
        %3670 = vmatprep.subr.bf16.mxu0 %v3256
        %3671 = vmatpush1.bf16.msra.mxu0 %v3255
        %3672 = vmatprep.mubr.bf16.mxu0 %v1939
        %3673 = vmatmul.mubr.bf16.gmra.mrb[0].mxu0 %v1938
        %v3674 = vpop.f32.mrb[0].mxu0
        %v3675 = vadd.f32 %v3634, %v3674
        %v3676 = vpop.f32.mrb[0].mxu0
        %v3677 = vadd.f32 %v3636, %v3676
        %v3678 = vpop.f32.mrb[0].mxu0
        %v3679 = vpop.f32.mrb[0].mxu0
        %3680 = vdwg.mxu0
        %3681 = vmatprep.subr.bf16.mxu0 %v3010
        %3682 = vmatpush1.bf16.msra.mxu0 %v3009
        %3683 = vmatprep.subr.bf16.mxu0 %v3018
        %3684 = vmatpush1.bf16.msra.mxu0 %v3017
        %3685 = vmatprep.subr.bf16.mxu0 %v3026
        %3686 = vmatpush1.bf16.msra.mxu0 %v3025
        %3687 = vmatprep.subr.bf16.mxu0 %v3034
        %3688 = vmatpush1.bf16.msra.mxu0 %v3033
        %3689 = vmatprep.subr.bf16.mxu0 %v3042
        %3690 = vmatpush1.bf16.msra.mxu0 %v3041
        %3691 = vmatprep.subr.bf16.mxu0 %v3050
        %3692 = vmatpush1.bf16.msra.mxu0 %v3049
        %3693 = vmatprep.subr.bf16.mxu0 %v3058
        %3694 = vmatpush1.bf16.msra.mxu0 %v3057
        %3695 = vmatprep.subr.bf16.mxu0 %v3066
        %3696 = vmatpush1.bf16.msra.mxu0 %v3065
        %3697 = vmatprep.subr.bf16.mxu0 %v3074
        %3698 = vmatpush1.bf16.msra.mxu0 %v3073
        %3699 = vmatprep.subr.bf16.mxu0 %v3082
        %3700 = vmatpush1.bf16.msra.mxu0 %v3081
        %3701 = vmatprep.subr.bf16.mxu0 %v3090
        %3702 = vmatpush1.bf16.msra.mxu0 %v3089
        %3703 = vmatprep.subr.bf16.mxu0 %v3098
        %3704 = vmatpush1.bf16.msra.mxu0 %v3097
        %3705 = vmatprep.subr.bf16.mxu0 %v3106
        %3706 = vmatpush1.bf16.msra.mxu0 %v3105
        %3707 = vmatprep.subr.bf16.mxu0 %v3114
        %3708 = vmatpush1.bf16.msra.mxu0 %v3113
        %3709 = vmatprep.subr.bf16.mxu0 %v3122
        %3710 = vmatpush1.bf16.msra.mxu0 %v3121
        %3711 = vmatprep.subr.bf16.mxu0 %v3130
        %3712 = vmatpush1.bf16.msra.mxu0 %v3129
        %3713 = vmatprep.mubr.bf16.mxu0 %v1937
        %3714 = vmatmul.mubr.bf16.gmra.mrb[0].mxu0 %v1936
        %v3715 = vpop.f32.mrb[0].mxu0
        %v3716 = vadd.f32 %v2216, %v3715
        %v3717 = vpop.f32.mrb[0].mxu0
        %v3718 = vadd.f32 %v2220, %v3717
        %v3719 = vpop.f32.mrb[0].mxu0
        %v3720 = vpop.f32.mrb[0].mxu0
        %3721 = vdwg.mxu0
        %3722 = vmatprep.subr.bf16.mxu0 %v3138
        %3723 = vmatpush1.bf16.msra.mxu0 %v3137
        %3724 = vmatprep.subr.bf16.mxu0 %v3146
        %3725 = vmatpush1.bf16.msra.mxu0 %v3145
        %3726 = vmatprep.subr.bf16.mxu0 %v3154
        %3727 = vmatpush1.bf16.msra.mxu0 %v3153
        %3728 = vmatprep.subr.bf16.mxu0 %v3162
        %3729 = vmatpush1.bf16.msra.mxu0 %v3161
        %3730 = vmatprep.subr.bf16.mxu0 %v3170
        %3731 = vmatpush1.bf16.msra.mxu0 %v3169
        %3732 = vmatprep.subr.bf16.mxu0 %v3178
        %3733 = vmatpush1.bf16.msra.mxu0 %v3177
        %3734 = vmatprep.subr.bf16.mxu0 %v3186
        %3735 = vmatpush1.bf16.msra.mxu0 %v3185
        %3736 = vmatprep.subr.bf16.mxu0 %v3194
        %3737 = vmatpush1.bf16.msra.mxu0 %v3193
        %3738 = vmatprep.subr.bf16.mxu0 %v3202
        %3739 = vmatpush1.bf16.msra.mxu0 %v3201
        %3740 = vmatprep.subr.bf16.mxu0 %v3210
        %3741 = vmatpush1.bf16.msra.mxu0 %v3209
        %3742 = vmatprep.subr.bf16.mxu0 %v3218
        %3743 = vmatpush1.bf16.msra.mxu0 %v3217
        %3744 = vmatprep.subr.bf16.mxu0 %v3226
        %3745 = vmatpush1.bf16.msra.mxu0 %v3225
        %3746 = vmatprep.subr.bf16.mxu0 %v3234
        %3747 = vmatpush1.bf16.msra.mxu0 %v3233
        %3748 = vmatprep.subr.bf16.mxu0 %v3242
        %3749 = vmatpush1.bf16.msra.mxu0 %v3241
        %3750 = vmatprep.subr.bf16.mxu0 %v3250
        %3751 = vmatpush1.bf16.msra.mxu0 %v3249
        %3752 = vmatprep.subr.bf16.mxu0 %v3258
        %3753 = vmatpush1.bf16.msra.mxu0 %v3257
        %3754 = vmatprep.mubr.bf16.mxu0 %v1939
        %3755 = vmatmul.mubr.bf16.gmra.mrb[0].mxu0 %v1938
        %v3756 = vpop.f32.mrb[0].mxu0
        %v3757 = vadd.f32 %v3716, %v3756
        %v3758 = vpop.f32.mrb[0].mxu0
        %v3759 = vadd.f32 %v3718, %v3758
        %v3760 = vpop.f32.mrb[0].mxu0
        %v3761 = vpop.f32.mrb[0].mxu0
        %3762 = vdwg.mxu0
        %3763 = vmatprep.subr.bf16.mxu0 %v3012
        %3764 = vmatpush1.bf16.msra.mxu0 %v3011
        %3765 = vmatprep.subr.bf16.mxu0 %v3020
        %3766 = vmatpush1.bf16.msra.mxu0 %v3019
        %3767 = vmatprep.subr.bf16.mxu0 %v3028
        %3768 = vmatpush1.bf16.msra.mxu0 %v3027
        %3769 = vmatprep.subr.bf16.mxu0 %v3036
        %3770 = vmatpush1.bf16.msra.mxu0 %v3035
        %3771 = vmatprep.subr.bf16.mxu0 %v3044
        %3772 = vmatpush1.bf16.msra.mxu0 %v3043
        %3773 = vmatprep.subr.bf16.mxu0 %v3052
        %3774 = vmatpush1.bf16.msra.mxu0 %v3051
        %3775 = vmatprep.subr.bf16.mxu0 %v3060
        %3776 = vmatpush1.bf16.msra.mxu0 %v3059
        %3777 = vmatprep.subr.bf16.mxu0 %v3068
        %3778 = vmatpush1.bf16.msra.mxu0 %v3067
        %3779 = vmatprep.subr.bf16.mxu0 %v3076
        %3780 = vmatpush1.bf16.msra.mxu0 %v3075
        %3781 = vmatprep.subr.bf16.mxu0 %v3084
        %3782 = vmatpush1.bf16.msra.mxu0 %v3083
        %3783 = vmatprep.subr.bf16.mxu0 %v3092
        %3784 = vmatpush1.bf16.msra.mxu0 %v3091
        %3785 = vmatprep.subr.bf16.mxu0 %v3100
        %3786 = vmatpush1.bf16.msra.mxu0 %v3099
        %3787 = vmatprep.subr.bf16.mxu0 %v3108
        %3788 = vmatpush1.bf16.msra.mxu0 %v3107
        %3789 = vmatprep.subr.bf16.mxu0 %v3116
        %3790 = vmatpush1.bf16.msra.mxu0 %v3115
        %3791 = vmatprep.subr.bf16.mxu0 %v3124
        %3792 = vmatpush1.bf16.msra.mxu0 %v3123
        %3793 = vmatprep.subr.bf16.mxu0 %v3132
        %3794 = vmatpush1.bf16.msra.mxu0 %v3131
        %3795 = vmatprep.mubr.bf16.mxu0 %v1937
        %3796 = vmatmul.mubr.bf16.gmra.mrb[0].mxu0 %v1936
        %v3797 = vpop.f32.mrb[0].mxu0
        %v3798 = vadd.f32 %v2224, %v3797
        %v3799 = vpop.f32.mrb[0].mxu0
        %v3800 = vadd.f32 %v2228, %v3799
        %v3801 = vpop.f32.mrb[0].mxu0
        %v3802 = vpop.f32.mrb[0].mxu0
        %3803 = vdwg.mxu0
        %3804 = vmatprep.subr.bf16.mxu0 %v3140
        %3805 = vmatpush1.bf16.msra.mxu0 %v3139
        %3806 = vmatprep.subr.bf16.mxu0 %v3148
        %3807 = vmatpush1.bf16.msra.mxu0 %v3147
        %3808 = vmatprep.subr.bf16.mxu0 %v3156
        %3809 = vmatpush1.bf16.msra.mxu0 %v3155
        %3810 = vmatprep.subr.bf16.mxu0 %v3164
        %3811 = vmatpush1.bf16.msra.mxu0 %v3163
        %3812 = vmatprep.subr.bf16.mxu0 %v3172
        %3813 = vmatpush1.bf16.msra.mxu0 %v3171
        %3814 = vmatprep.subr.bf16.mxu0 %v3180
        %3815 = vmatpush1.bf16.msra.mxu0 %v3179
        %3816 = vmatprep.subr.bf16.mxu0 %v3188
        %3817 = vmatpush1.bf16.msra.mxu0 %v3187
        %3818 = vmatprep.subr.bf16.mxu0 %v3196
        %3819 = vmatpush1.bf16.msra.mxu0 %v3195
        %3820 = vmatprep.subr.bf16.mxu0 %v3204
        %3821 = vmatpush1.bf16.msra.mxu0 %v3203
        %3822 = vmatprep.subr.bf16.mxu0 %v3212
        %3823 = vmatpush1.bf16.msra.mxu0 %v3211
        %3824 = vmatprep.subr.bf16.mxu0 %v3220
        %3825 = vmatpush1.bf16.msra.mxu0 %v3219
        %3826 = vmatprep.subr.bf16.mxu0 %v3228
        %3827 = vmatpush1.bf16.msra.mxu0 %v3227
        %3828 = vmatprep.subr.bf16.mxu0 %v3236
        %3829 = vmatpush1.bf16.msra.mxu0 %v3235
        %3830 = vmatprep.subr.bf16.mxu0 %v3244
        %3831 = vmatpush1.bf16.msra.mxu0 %v3243
        %3832 = vmatprep.subr.bf16.mxu0 %v3252
        %3833 = vmatpush1.bf16.msra.mxu0 %v3251
        %3834 = vmatprep.subr.bf16.mxu0 %v3260
        %3835 = vmatpush1.bf16.msra.mxu0 %v3259
        %3836 = vmatprep.mubr.bf16.mxu0 %v1939
        %3837 = vmatmul.mubr.bf16.gmra.mrb[0].mxu0 %v1938
        %v3838 = vpop.f32.mrb[0].mxu0
        %v3839 = vadd.f32 %v3798, %v3838
        %v3840 = vpop.f32.mrb[0].mxu0
        %v3841 = vadd.f32 %v3800, %v3840
        %v3842 = vpop.f32.mrb[0].mxu0
        %v3843 = vpop.f32.mrb[0].mxu0
        %3844 = vdwg.mxu0
        %v3845 = vxor.u32 %v3593, 2147483648
        %v3846 = vxor.u32 %v3595, 2147483648
        %v3847 = vmul.f32 %v3845, 1.442695
        %v3848 = vpow.pop %v3847
        %v3849 = vmul.f32 %v3846, 1.442695
        %v3850 = vpow.pop %v3849
        %v3851 = vadd.f32 %v3848, 1.0
        %v3852 = vadd.f32 %v3850, 1.0
        %v3853 = vrcp.pop %v3851
        %v3854 = vmul.f32 1.0, %v3853
        %v3855 = vrcp.pop %v3852
        %v3856 = vmul.f32 1.0, %v3855
        %v3857 = vxor.u32 %v3675, 2147483648
        %v3858 = vxor.u32 %v3677, 2147483648
        %v3859 = vmul.f32 %v3857, 1.442695
        %v3860 = vpow.pop %v3859
        %v3861 = vmul.f32 %v3858, 1.442695
        %v3862 = vpow.pop %v3861
        %v3863 = vadd.f32 %v3860, 1.0
        %v3864 = vadd.f32 %v3862, 1.0
        %v3865 = vrcp.pop %v3863
        %v3866 = vmul.f32 1.0, %v3865
        %v3867 = vrcp.pop %v3864
        %v3868 = vmul.f32 1.0, %v3867
        %v3869 = vxor.u32 %v3757, 2147483648
        %v3870 = vxor.u32 %v3759, 2147483648
        %v3871 = vmul.f32 %v3869, 1.442695
        %v3872 = vpow.pop %v3871
        %v3873 = vmul.f32 %v3870, 1.442695
        %v3874 = vpow.pop %v3873
        %v3875 = vadd.f32 %v3872, 1.0
        %v3876 = vadd.f32 %v3874, 1.0
        %v3877 = vrcp.pop %v3875
        %v3878 = vmul.f32 1.0, %v3877
        %v3879 = vrcp.pop %v3876
        %v3880 = vmul.f32 1.0, %v3879
        %v3881 = vtanh.pop %v3839
        %v3882 = vtanh.pop %v3841
        %v3885 = vunpack.c.l.s4 1983009808
        %v3886 = vunpack.c.0.s8 %v3885
        %v3887 = vlaneseq
        %v3888 = vshrl.u32 %v3887, 7
        %v3889 = vsub.s32 %v3886, %v3888
        %v3890 = vrot.slane %v326, %v3889
        %v3891 = vcombine.high %v3890, %v3890
        %v3894 = vmul.f32 %v3866, %v3890
        %v3895 = vmul.f32 %v3868, %v3891
        %v3896 = vmul.f32 %v3854, %v3881
        %v3897 = vmul.f32 %v3856, %v3882
        %v3898 = vadd.f32 %v3894, %v3896
        %v3899 = vadd.f32 %v3895, %v3897
        %v3900 = vtanh.pop %v3898
        %v3901 = vtanh.pop %v3899
        %v3902 = vmul.f32 %v3878, %v3900
        %v3903 = vmul.f32 %v3880, %v3901
        %v3906 = vcombine.low %v1921, %v1922
        %v3908 = vunpack.c.l.s4 1983009808
        %v3909 = vunpack.c.0.s8 %v3908
        %v3910 = vlaneseq
        %v3911 = vshrl.u32 %v3910, 7
        %v3912 = vsub.s32 %v3909, %v3911
        %v3913 = vrot.slane %v3906, %v3912
        %3915 = vst [vmem:[%s6] sm:$0xf] %v3913
        %v3918 = vcombine.low %v1917, %v1918
        %v3920 = vunpack.c.l.s4 1983009808
        %v3921 = vunpack.c.0.s8 %v3920
        %v3922 = vlaneseq
        %v3923 = vshrl.u32 %v3922, 7
        %v3924 = vsub.s32 %v3921, %v3923
        %v3925 = vrot.slane %v3918, %v3924
        %3927 = vst [vmem:[%s6 + $0x4] sm:$0xf] %v3925
        %v3930 = vcombine.low %v3902, %v3903
        %v3932 = vunpack.c.l.s4 1983009808
        %v3933 = vunpack.c.0.s8 %v3932
        %v3934 = vlaneseq
        %v3935 = vshrl.u32 %v3934, 7
        %v3936 = vsub.s32 %v3933, %v3935
        %v3937 = vrot.slane %v3930, %v3936
        %3939 = vst [vmem:[%s6 + $0x8] sm:$0xf] %v3937
        %v3942 = vcombine.low %v3898, %v3899
        %v3944 = vunpack.c.l.s4 1983009808
        %v3945 = vunpack.c.0.s8 %v3944
        %v3946 = vlaneseq
        %v3947 = vshrl.u32 %v3946, 7
        %v3948 = vsub.s32 %v3945, %v3947
        %v3949 = vrot.slane %v3942, %v3948
        %3951 = vst [vmem:[%s6 + $0xc] sm:$0xf] %v3949
        %v3952 = vld [vmem:[%s5] sm:$0xff]
        %v3953 = vld [vmem:[%s5 + $0x8] sm:$0xff]
        %v3954 = vld [vmem:[%s5 + $0x10] sm:$0xff]
        %v3955 = vld [vmem:[%s5 + $0x18] sm:$0xff]
        %v3956 = vld [vmem:[%s5 + $0x20] sm:$0xff]
        %v3957 = vld [vmem:[%s5 + $0x28] sm:$0xff]
        %v3958 = vld [vmem:[%s5 + $0x30] sm:$0xff]
        %v3959 = vld [vmem:[%s5 + $0x38] sm:$0xff]
        %v3960 = vld [vmem:[%s5 + $0x40] sm:$0xff]
        %v3961 = vld [vmem:[%s5 + $0x48] sm:$0xff]
        %v3962 = vld [vmem:[%s5 + $0x50] sm:$0xff]
        %v3963 = vld [vmem:[%s5 + $0x58] sm:$0xff]
        %v3964 = vld [vmem:[%s5 + $0x60] sm:$0xff]
        %v3965 = vld [vmem:[%s5 + $0x68] sm:$0xff]
        %v3966 = vld [vmem:[%s5 + $0x70] sm:$0xff]
        %v3967 = vld [vmem:[%s5 + $0x78] sm:$0xff]
        %v3968 = vld [vmem:[%s5 + $0x80] sm:$0xff]
        %v3969 = vld [vmem:[%s5 + $0x88] sm:$0xff]
        %v3970 = vld [vmem:[%s5 + $0x90] sm:$0xff]
        %v3971 = vld [vmem:[%s5 + $0x98] sm:$0xff]
        %v3972 = vld [vmem:[%s5 + $0xa0] sm:$0xff]
        %v3973 = vld [vmem:[%s5 + $0xa8] sm:$0xff]
        %v3974 = vld [vmem:[%s5 + $0xb0] sm:$0xff]
        %v3975 = vld [vmem:[%s5 + $0xb8] sm:$0xff]
        %v3976 = vld [vmem:[%s5 + $0xc0] sm:$0xff]
        %v3977 = vld [vmem:[%s5 + $0xc8] sm:$0xff]
        %v3978 = vld [vmem:[%s5 + $0xd0] sm:$0xff]
        %v3979 = vld [vmem:[%s5 + $0xd8] sm:$0xff]
        %v3980 = vld [vmem:[%s5 + $0xe0] sm:$0xff]
        %v3981 = vld [vmem:[%s5 + $0xe8] sm:$0xff]
        %v3982 = vld [vmem:[%s5 + $0xf0] sm:$0xff]
        %v3983 = vld [vmem:[%s5 + $0xf8] sm:$0xff]
        %v3984 = vld [vmem:[%s5 + $0x100] sm:$0x1]
        %v3985 = vld [vmem:[%s5 + $0x101] sm:$0x1]
        %v3986 = vld [vmem:[%s5 + $0x102] sm:$0x1]
        %v3987 = vlaneseq
        %v3988 = vshrl.u32 %v3987, 7
        %v3989 = vsub.s32 0, %v3988
        %v3990 = vrot.slane %v3984, %v3989
        %3991 = vmatprep.subr.mxu0 0.0
        %3992 = vmatpush1.msra.mxu0 %v3952
        %3993 = vmatprep.subr.mxu0 0.0
        %3994 = vmatpush1.msra.mxu0 %v3953
        %3995 = vmatprep.subr.mxu0 0.0
        %3996 = vmatpush1.msra.mxu0 %v3954
        %3997 = vmatprep.subr.mxu0 0.0
        %3998 = vmatpush1.msra.mxu0 %v3955
        %3999 = vmatprep.subr.mxu0 0.0
        %4000 = vmatpush1.msra.mxu0 %v3956
        %4001 = vmatprep.subr.mxu0 0.0
        %4002 = vmatpush1.msra.mxu0 %v3957
        %4003 = vmatprep.subr.mxu0 0.0
        %4004 = vmatpush1.msra.mxu0 %v3958
        %4005 = vmatprep.subr.mxu0 0.0
        %4006 = vmatpush1.msra.mxu0 %v3959
        %4007 = vmatprep.subr.mxu0 0.0
        %4008 = vmatpush1.msra.mxu0 %v3960
        %4009 = vmatprep.subr.mxu0 0.0
        %4010 = vmatpush1.msra.mxu0 %v3961
        %4011 = vmatprep.subr.mxu0 0.0
        %4012 = vmatpush1.msra.mxu0 %v3962
        %4013 = vmatprep.subr.mxu0 0.0
        %4014 = vmatpush1.msra.mxu0 %v3963
        %4015 = vmatprep.subr.mxu0 0.0
        %4016 = vmatpush1.msra.mxu0 %v3964
        %4017 = vmatprep.subr.mxu0 0.0
        %4018 = vmatpush1.msra.mxu0 %v3965
        %4019 = vmatprep.subr.mxu0 0.0
        %4020 = vmatpush1.msra.mxu0 %v3966
        %4021 = vmatprep.subr.mxu0 0.0
        %4022 = vmatpush1.msra.mxu0 %v3967
        %4023 = vmatprep.subr.mxu0 0.0
        %4024 = vmatpush1.msra.mxu0 %v3968
        %4025 = vmatprep.subr.mxu0 0.0
        %4026 = vmatpush1.msra.mxu0 %v3969
        %4027 = vmatprep.subr.mxu0 0.0
        %4028 = vmatpush1.msra.mxu0 %v3970
        %4029 = vmatprep.subr.mxu0 0.0
        %4030 = vmatpush1.msra.mxu0 %v3971
        %4031 = vmatprep.subr.mxu0 0.0
        %4032 = vmatpush1.msra.mxu0 %v3972
        %4033 = vmatprep.subr.mxu0 0.0
        %4034 = vmatpush1.msra.mxu0 %v3973
        %4035 = vmatprep.subr.mxu0 0.0
        %4036 = vmatpush1.msra.mxu0 %v3974
        %4037 = vmatprep.subr.mxu0 0.0
        %4038 = vmatpush1.msra.mxu0 %v3975
        %4039 = vmatprep.subr.mxu0 0.0
        %4040 = vmatpush1.msra.mxu0 %v3976
        %4041 = vmatprep.subr.mxu0 0.0
        %4042 = vmatpush1.msra.mxu0 %v3977
        %4043 = vmatprep.subr.mxu0 0.0
        %4044 = vmatpush1.msra.mxu0 %v3978
        %4045 = vmatprep.subr.mxu0 0.0
        %4046 = vmatpush1.msra.mxu0 %v3979
        %4047 = vmatprep.subr.mxu0 0.0
        %4048 = vmatpush1.msra.mxu0 %v3980
        %4049 = vmatprep.subr.mxu0 0.0
        %4050 = vmatpush1.msra.mxu0 %v3981
        %4051 = vmatprep.subr.mxu0 0.0
        %4052 = vmatpush1.msra.mxu0 %v3982
        %4053 = vmatprep.subr.mxu0 0.0
        %4054 = vmatpush1.msra.mxu0 %v3983
        %4055 = vmatprep.mubr.f32.mxu0 %v3903
        %4056 = vmatmul.mubr.f32.gmra.mrb[0].mxu0 %v3902
        %v4057 = vpop.f32.mrb[0].mxu0
        %v4058 = vadd.f32 %v3990, %v4057
        %v4059 = vpop.f32.mrb[0].mxu0
        %4060 = vdwg.mxu0
        %v4061 = vmax.f32 %v4058, 0.0
        %v4062 = vlaneseq
        %v4063 = vshrl.u32 %v4062, 7
        %v4064 = vsub.s32 0, %v4063
        %v4065 = vrot.slane %v3985, %v4064
        %v4066 = vmul.f32 %v4061, %v4065
        %vm4067 = vcmask 1041408
        %v4068 = vsel %vm4067, %v4066, 0.0
        %4069 = vadd.xlane.f32.xlu0 %v4068
        %v4070 = vpop.xlane.xlu0 %4069
        %v4071 = vlaneseq
        %v4072 = vshrl.u32 %v4071, 7
        %v4073 = vsub.s32 0, %v4072
        %v4074 = vrot.slane %v3986, %v4073
        %v4075 = vadd.f32 %v4070, %v4074
        %4076 = vst [vmem:[%s313] sm:$0x3] %v4075
        %p4077 = scmp.lt.s32.totalorder %s21, 5
        %s4078 = scalar_select %p4077, %s21, 5
        %s4079 = smul.addr %s4078, 2
        %s4080 = scalar_lea.vmem %s7, %s4079
        // Predicated region
        $region61: #{matrix_lstm_lr_rollout.1} parent=43 // pred_check
          %p4081 = pneg %p165
        $region62: #{matrix_lstm_lr_rollout.1} parent=43 // pred_check_branch
          %4083 = sbr.rel (%p4081) target = $region64
        $region63: #{matrix_lstm_lr_rollout.1} parent=43 // pred_region
          _
        $region64: #{matrix_lstm_lr_rollout.1} parent=43 // pred_fallthru
          _
        // Predicated region
        $region65: #{matrix_lstm_lr_rollout.1} parent=43 // pred_check
          %p4084 = pneg %p191
        $region66: #{matrix_lstm_lr_rollout.1} parent=43 // pred_check_branch
          %4086 = sbr.rel (%p4084) target = $region68
        $region67: #{matrix_lstm_lr_rollout.1} parent=43 // pred_region
          _
        $region68: #{matrix_lstm_lr_rollout.1} parent=43 // pred_fallthru
          _
        // Predicated region
        $region69: #{matrix_lstm_lr_rollout.1} parent=43 // pred_check
          %p4087 = pneg %p165
        $region70: #{matrix_lstm_lr_rollout.1} parent=43 // pred_check_branch
          %4089 = sbr.rel (%p4087) target = $region72
        $region71: #{matrix_lstm_lr_rollout.1} parent=43 // pred_region
          _
        $region72: #{matrix_lstm_lr_rollout.1} parent=43 // pred_fallthru
          _
      $region44: #{matrix_lstm_lr_rollout.1} parent=5 // pred_fallthru
        _
      %p4090 = scmp.le.s32.totalorder 2, %s16
      // Predicated region
      $region73: #{matrix_lstm_lr_rollout.1} parent=5 // pred_check
        %p4091 = pneg %p4090
      $region74: #{matrix_lstm_lr_rollout.1} parent=5 // pred_check_branch
        %4093 = sbr.rel (%p4091) target = $region76
      $region75: #{matrix_lstm_lr_rollout.1} parent=5 // pred_region
        %s4094 = ssub.s32 %s16, 2
        // Predicated region
        $region77: #{matrix_lstm_lr_rollout.1} parent=75 // pred_check
          %p4095 = pneg %p197
        $region78: #{matrix_lstm_lr_rollout.1} parent=75 // pred_check_branch
          %4097 = sbr.rel (%p4095) target = $region80
        $region79: #{matrix_lstm_lr_rollout.1} parent=75 // pred_region
          %p4098 = scmp.lt.s32.totalorder %s22, 5
          %s4099 = scalar_select %p4098, %s22, 5
          %s4100 = smul.addr %s4099, 2
          %s4101 = scalar_lea.vmem %s7, %s4100
        $region80: #{matrix_lstm_lr_rollout.1} parent=75 // pred_fallthru
          _
      $region76: #{matrix_lstm_lr_rollout.1} parent=5 // pred_fallthru
        _
    $region6: #{matrix_lstm_lr_rollout.1} parent=1 // loop_footer
      %s20 = sadd.s32 1, %s16
    $region7: #{matrix_lstm_lr_rollout.1} parent=1 // loop_footer_branch
      %15 = sbr.rel target = $region3
    $region8: #{matrix_lstm_lr_rollout.1} parent=1 // loop_exit
      _
    %4102 = vsyncpa [#allocation3], 1
    %s4103 = scalar_lea.sflag [#allocation3], 1
    %4104 = vsyncpa %s4103, 1
    %4105 = vsyncpa [#allocation5], 1

</llo_original>
